<compile_context>
chip_gen: v5e
topology: v5e:2x2
jax: 0.10.0
libtpu: 0.0.40
codegen_flags: <defaults>
</compile_context>

<pallas_src>
import functools

import jax
import jax.numpy as jnp
from jax.experimental import pallas as pl
from jax.experimental.pallas import tpu as pltpu

BN_EPS = 1e-5       # nn.BatchNorm1d default eps
SUM_EPS = 1e-8      # guard for the sum-to-one division


def _round_up(x, m):
    return (x + m - 1) // m * m


def _fused_row_bytes(n_bands, e):
    # Conservative per-row VMEM estimate for the fused kernel: f32 + bf16 copies
    # of x / hidden activations / outputs, double-buffered block I/O.
    return 18 * n_bands + 130 * e


def _tiled_row_bytes(n_bands, e):
    # Two-pass path: pass-1 working set dominates (x in + activations + h4 out).
    return 12 * n_bands + 140 * e


# ---------------------------------------------------------------------------
# Shared in-kernel pieces
# ---------------------------------------------------------------------------
def _layer(h, w_ref, b_ref):
    """sigmoid(h @ W + b); bf16 MXU inputs, f32 accumulation + activation."""
    z = jnp.dot(h.astype(jnp.bfloat16), w_ref[...],
                preferred_element_type=jnp.float32) + b_ref[...]
    return jax.nn.sigmoid(z)


def _bn_threshold_head(h4, scale, shift, w5t_ref, ab_ref, rec_ref):
    """Fused BN-affine + soft-threshold (relu(h*scale+shift)), sum-to-one,
    and the decoder matmul (linear5, bias=False)."""
    st = jnp.maximum(h4 * scale + shift, 0.0)                     # (rows, E)
    denom = jnp.sum(st, axis=-1, keepdims=True) + SUM_EPS         # (rows, 1)
    ab = st / denom                                               # sum-to-one
    ab_ref[...] = ab.astype(ab_ref.dtype)
    rec = jnp.dot(ab, w5t_ref[...], preferred_element_type=jnp.float32)
    rec_ref[...] = rec.astype(rec_ref.dtype)


# ---------------------------------------------------------------------------
# Fully fused kernel (whole batch in one VMEM tile): encoder + in-kernel BN
# stats + threshold + sum-to-one + decoder.
# ---------------------------------------------------------------------------
def _fused_kernel(x_ref, w1, b1, w2, b2, w3, b3, w4, b4,
                  gamma_ref, beta_ref, alpha_ref, w5t_ref,
                  ab_ref, rec_ref):
    h = _layer(x_ref[...], w1, b1)            # (B, 9E)
    h = _layer(h, w2, b2)                     # (B, 6E)
    h = _layer(h, w3, b3)                     # (B, 3E)
    h4 = _layer(h, w4, b4)                    # (B, E) f32
    # BatchNorm1d training-mode batch statistics (biased variance, as in the
    # PyTorch forward normalization).
    mu = jnp.mean(h4, axis=0, keepdims=True)                        # (1, E)
    var = jnp.mean(jnp.square(h4 - mu), axis=0, keepdims=True)      # (1, E)
    scale = gamma_ref[...] * jax.lax.rsqrt(var + BN_EPS)
    shift = beta_ref[...] - mu * scale - alpha_ref[...]
    _bn_threshold_head(h4, scale, shift, w5t_ref, ab_ref, rec_ref)


# ---------------------------------------------------------------------------
# Two-pass path, pass 1: encoder + per-tile BN partial sums.
# ---------------------------------------------------------------------------
def _encoder_stats_kernel(x_ref, w1, b1, w2, b2, w3, b3, w4, b4,
                          h4_ref, bsum_ref, bsq_ref, *, batch, b_tile):
    h = _layer(x_ref[...], w1, b1)
    h = _layer(h, w2, b2)
    h = _layer(h, w3, b3)
    h4 = _layer(h, w4, b4)                    # (b_tile, E) f32
    h4_ref[...] = h4
    # Per-tile BN partial stats.  Rows past the true batch size (boundary block
    # of a non-divisible grid reads undefined padding) MUST be masked here.
    row = (jax.lax.broadcasted_iota(jnp.int32, (b_tile, 1), 0)
           + pl.program_id(0) * b_tile)
    valid = row < batch
    h4m = jnp.where(valid, h4, 0.0)
    e = h4.shape[-1]
    bsum_ref[...] = jnp.sum(h4m, axis=0, keepdims=True).reshape(1, 1, e)
    bsq_ref[...] = jnp.sum(h4m * h4m, axis=0, keepdims=True).reshape(1, 1, e)


# ---------------------------------------------------------------------------
# Two-pass path, pass 2: BN apply + threshold + sum-to-one + decoder.
# ---------------------------------------------------------------------------
def _head_kernel(h4_ref, scale_ref, shift_ref, w5t_ref, ab_ref, rec_ref):
    _bn_threshold_head(h4_ref[...], scale_ref[...], shift_ref[...],
                       w5t_ref, ab_ref, rec_ref)


# ---------------------------------------------------------------------------
# Wrapper
# ---------------------------------------------------------------------------
@functools.partial(jax.jit,
                   static_argnames=("block_batch", "fuse_rows", "force_two_pass"))
def autoencoder_forward(x, params, *, block_batch=32768, fuse_rows=16384,
                        force_two_pass=False):
    """x: (batch, n_bands). Returns (abundances (B, E) f32, recon (B, n_bands) x.dtype)."""
    B, n_bands = x.shape
    E = params["gamma"].shape[-1]
    f32, bf16 = jnp.float32, jnp.bfloat16

    # Weights pre-transposed to (in, out); encoder weights in bf16 for the MXU
    # (native on all generations), decoder kept f32 for output fidelity.
    w1 = params["w1"].T.astype(bf16); b1 = params["b1"].astype(f32).reshape(1, -1)
    w2 = params["w2"].T.astype(bf16); b2 = params["b2"].astype(f32).reshape(1, -1)
    w3 = params["w3"].T.astype(bf16); b3 = params["b3"].astype(f32).reshape(1, -1)
    w4 = params["w4"].T.astype(bf16); b4 = params["b4"].astype(f32).reshape(1, -1)
    w5t = params["w5"].T.astype(f32)                               # (E, n_bands)
    gamma = params["gamma"].astype(f32).reshape(1, E)
    beta = params["beta"].astype(f32).reshape(1, E)
    alpha = params["alpha"].astype(f32).reshape(1, E)

    def const_spec(a):                      # VMEM-resident, same block every step
        return pl.BlockSpec(a.shape, lambda i: (0,) * a.ndim)

    # 48 MiB scoped VMEM: headroom under v7x's 64 MiB/TC; v5e/v6e (128 MiB)
    # could raise this and block_batch further if desired.
    vmem_bytes = 48 * 1024 * 1024
    vmem_budget = int(vmem_bytes * 0.6)     # slack for pipeline buffers / spills

    fused_cap = max(1024, vmem_budget // _fused_row_bytes(n_bands, E))
    if (not force_two_pass) and B <= min(fuse_rows, fused_cap):
        # ---- fully fused single pallas_call: whole batch in one VMEM tile ----
        args = (x, w1, b1, w2, b2, w3, b3, w4, b4, gamma, beta, alpha, w5t)
        ab, rec = pl.pallas_call(
            _fused_kernel,
            grid=(1,),
            in_specs=[const_spec(a) for a in args],
            out_specs=(pl.BlockSpec((B, E), lambda i: (0, 0)),
                       pl.BlockSpec((B, n_bands), lambda i: (0, 0))),
            out_shape=(jax.ShapeDtypeStruct((B, E), f32),
                       jax.ShapeDtypeStruct((B, n_bands), x.dtype)),
            compiler_params=pltpu.CompilerParams(
                dimension_semantics=("arbitrary",),
                vmem_limit_bytes=vmem_bytes),
        )(*args)
        return ab, rec

    # ---- two-pass path for large batches: batch-tiled, no pad / no transpose ----
    tile_cap = max(1024, vmem_budget // _tiled_row_bytes(n_bands, E))
    b_tile = min(block_batch, tile_cap, max((B + 1) // 2, 8))   # >=2 tiles -> both v7x TCs
    b_tile = _round_up(b_tile, 8)
    num_tiles = pl.cdiv(B, b_tile)
    cparams = pltpu.CompilerParams(dimension_semantics=("parallel",),
                                   vmem_limit_bytes=vmem_bytes)

    # Pass 1: encoder + per-tile BN partial sums (tiny (num_tiles, E) reduce in JAX).
    enc_args = (x, w1, b1, w2, b2, w3, b3, w4, b4)
    h4, bsum, bsq = pl.pallas_call(
        functools.partial(_encoder_stats_kernel, batch=B, b_tile=b_tile),
        grid=(num_tiles,),
        in_specs=[pl.BlockSpec((b_tile, n_bands), lambda i: (i, 0))]
                 + [const_spec(a) for a in enc_args[1:]],
        out_specs=(pl.BlockSpec((b_tile, E), lambda i: (i, 0)),
                   pl.BlockSpec((1, 1, E), lambda i: (i, 0, 0)),
                   pl.BlockSpec((1, 1, E), lambda i: (i, 0, 0))),
        out_shape=(jax.ShapeDtypeStruct((B, E), f32),
                   jax.ShapeDtypeStruct((num_tiles, 1, E), f32),
                   jax.ShapeDtypeStruct((num_tiles, 1, E), f32)),
        compiler_params=cparams,
    )(*enc_args)

    tot = jnp.sum(bsum[:, 0, :], axis=0)                     # (E,)
    totsq = jnp.sum(bsq[:, 0, :], axis=0)
    mu = tot / B
    var = jnp.maximum(totsq / B - mu * mu, 0.0)              # biased var (PyTorch fwd)
    scale = (gamma[0] * jax.lax.rsqrt(var + BN_EPS)).reshape(1, E)
    shift = (beta[0] - mu * scale[0] - alpha[0]).reshape(1, E)
    # TODO(synk): BatchNorm running-stats (running_mean/var momentum update) is
    # training bookkeeping, not forward math, and is not implemented.

    # Pass 2: BN apply + soft-threshold + sum-to-one + decoder.
    ab, rec = pl.pallas_call(
        _head_kernel,
        grid=(num_tiles,),
        in_specs=[pl.BlockSpec((b_tile, E), lambda i: (i, 0)),
                  const_spec(scale), const_spec(shift), const_spec(w5t)],
        out_specs=(pl.BlockSpec((b_tile, E), lambda i: (i, 0)),
                   pl.BlockSpec((b_tile, n_bands), lambda i: (i, 0))),
        out_shape=(jax.ShapeDtypeStruct((B, E), f32),        # abundances could be bf16
                   jax.ShapeDtypeStruct((B, n_bands), x.dtype)),
        compiler_params=cparams,
    )(h4, scale, shift, w5t)
    return ab, rec


def init_params(key, n_bands, n_endmembers):
    """Deterministic init mirroring the PyTorch module's parameter shapes.
    Linear weights stored in PyTorch layout (out_features, in_features) with
    U(-1/sqrt(fan_in), 1/sqrt(fan_in)) init."""
    E = n_endmembers
    dims = [(n_bands, 9 * E), (9 * E, 6 * E), (6 * E, 3 * E), (3 * E, E)]
    params = {}
    keys = jax.random.split(key, 2 * len(dims) + 1)
    k = 0
    for i, (din, dout) in enumerate(dims, start=1):
        bound = 1.0 / float(din) ** 0.5
        params[f"w{i}"] = jax.random.uniform(
            keys[k], (dout, din), jnp.float32, -bound, bound); k += 1
        params[f"b{i}"] = jax.random.uniform(
            keys[k], (dout,), jnp.float32, -bound, bound); k += 1
    # BatchNorm1d affine params.
    params["gamma"] = jnp.ones((E,), jnp.float32)
    params["beta"] = jnp.zeros((E,), jnp.float32)
    # TODO(synk): DynamicalSoftThresholding / sum_to_one_constraint are not
    # defined in the reference file; relu(x - alpha) with learnable alpha and
    # row-normalization are the assumed forms.
    params["alpha"] = jnp.full((E,), 0.05, jnp.float32)
    # linear5: Linear(E, n_bands, bias=False) -> weight (n_bands, E).
    bound5 = 1.0 / float(E) ** 0.5
    params["w5"] = jax.random.uniform(
        keys[k], (n_bands, E), jnp.float32, -bound5, bound5)
    return params


if __name__ == "__main__":
    n_bands = 32
    n_endmembers = 4
    batch = 300          # not a tile multiple -> exercises boundary-tile masking

    key = jax.random.PRNGKey(0)
    k_params, k_x = jax.random.split(key)
    params = init_params(k_params, n_bands, n_endmembers)
    # Hyperspectral reflectances live in [0, 1].
    x = jax.random.uniform(k_x, (batch, n_bands), jnp.float32)

    # Path A: fully fused single pallas_call (small batch fits one VMEM tile).
    ab_f, rec_f = autoencoder_forward(x, params)
    # Path B: two-pass batch-tiled path, forced with tiny tiles -> 3-step grid
    # with a partial last tile (exercises masked BN statistics).
    ab_t, rec_t = autoencoder_forward(x, params, block_batch=128,
                                      force_two_pass=True)
    jax.block_until_ready((ab_f, rec_f, ab_t, rec_t))

    for ab, rec in ((ab_f, rec_f), (ab_t, rec_t)):
        assert ab.shape == (batch, n_endmembers)
        assert rec.shape == (batch, n_bands)
        assert bool(jnp.all(jnp.isfinite(ab)))
        assert bool(jnp.all(jnp.isfinite(rec)))
        row_sums = jnp.sum(ab, axis=-1)
        # sum-to-one rows sum to ~1 (or ~0 when every thresholded value is 0).
        assert bool(jnp.all(row_sums <= 1.0 + 1e-3))
        assert bool(jnp.all(row_sums >= -1e-5))
    print("KERNEL_OK")
</pallas_src>

<mosaic_0001>
module attributes {stable_mosaic.version = 11 : i64} {
  func.func @_fused_kernel(%arg0: i32, %arg1: memref<300x32xf32, #tpu.memory_space<vmem>>, %arg2: memref<32x36xbf16, #tpu.memory_space<vmem>>, %arg3: memref<1x36xf32, #tpu.memory_space<vmem>>, %arg4: memref<36x24xbf16, #tpu.memory_space<vmem>>, %arg5: memref<1x24xf32, #tpu.memory_space<vmem>>, %arg6: memref<24x12xbf16, #tpu.memory_space<vmem>>, %arg7: memref<1x12xf32, #tpu.memory_space<vmem>>, %arg8: memref<12x4xbf16, #tpu.memory_space<vmem>>, %arg9: memref<1x4xf32, #tpu.memory_space<vmem>>, %arg10: memref<1x4xf32, #tpu.memory_space<vmem>>, %arg11: memref<1x4xf32, #tpu.memory_space<vmem>>, %arg12: memref<1x4xf32, #tpu.memory_space<vmem>>, %arg13: memref<4x32xf32, #tpu.memory_space<vmem>>, %arg14: memref<300x4xf32, #tpu.memory_space<vmem>>, %arg15: memref<300x32xf32, #tpu.memory_space<vmem>>) attributes {dimension_semantics = [#tpu.dimension_semantics<arbitrary>], iteration_bounds = array<i64: 1>, scalar_prefetch = 0 : i64, scratch_operands = 0 : i64, tpu.core_type = #tpu.core_type<tc>, window_params = [{pipeline_mode = #tpu.pipeline_mode<synchronous>, transform_indices = @transform_0, window_bounds = array<i64: 300, 32>}, {pipeline_mode = #tpu.pipeline_mode<synchronous>, transform_indices = @transform_1, window_bounds = array<i64: 32, 36>}, {pipeline_mode = #tpu.pipeline_mode<synchronous>, transform_indices = @transform_2, window_bounds = array<i64: 1, 36>}, {pipeline_mode = #tpu.pipeline_mode<synchronous>, transform_indices = @transform_3, window_bounds = array<i64: 36, 24>}, {pipeline_mode = #tpu.pipeline_mode<synchronous>, transform_indices = @transform_4, window_bounds = array<i64: 1, 24>}, {pipeline_mode = #tpu.pipeline_mode<synchronous>, transform_indices = @transform_5, window_bounds = array<i64: 24, 12>}, {pipeline_mode = #tpu.pipeline_mode<synchronous>, transform_indices = @transform_6, window_bounds = array<i64: 1, 12>}, {pipeline_mode = #tpu.pipeline_mode<synchronous>, transform_indices = @transform_7, window_bounds = array<i64: 12, 4>}, {pipeline_mode = #tpu.pipeline_mode<synchronous>, transform_indices = @transform_8, window_bounds = array<i64: 1, 4>}, {pipeline_mode = #tpu.pipeline_mode<synchronous>, transform_indices = @transform_9, window_bounds = array<i64: 1, 4>}, {pipeline_mode = #tpu.pipeline_mode<synchronous>, transform_indices = @transform_10, window_bounds = array<i64: 1, 4>}, {pipeline_mode = #tpu.pipeline_mode<synchronous>, transform_indices = @transform_11, window_bounds = array<i64: 1, 4>}, {pipeline_mode = #tpu.pipeline_mode<synchronous>, transform_indices = @transform_12, window_bounds = array<i64: 4, 32>}, {pipeline_mode = #tpu.pipeline_mode<synchronous>, transform_indices = @transform_13, window_bounds = array<i64: 300, 4>}, {pipeline_mode = #tpu.pipeline_mode<synchronous>, transform_indices = @transform_14, window_bounds = array<i64: 300, 32>}]} {
    %c0 = arith.constant 0 : index
    %c0_0 = arith.constant 0 : index
    %0 = vector.load %arg1[%c0, %c0_0] : memref<300x32xf32, #tpu.memory_space<vmem>>, vector<300x32xf32>
    %1 = arith.truncf %0 : vector<300x32xf32> to vector<300x32xbf16>
    %c0_1 = arith.constant 0 : index
    %c0_2 = arith.constant 0 : index
    %2 = vector.load %arg2[%c0_1, %c0_2] : memref<32x36xbf16, #tpu.memory_space<vmem>>, vector<32x36xbf16>
    %cst = arith.constant dense<0.000000e+00> : vector<300x36xf32>
    %3 = tpu.matmul %1, %2, %cst {dimension_numbers = #tpu.dot_dimension_numbers<[1], [0], [0], [1], [0, 0, 1, 1], [], []>} : vector<300x32xbf16>, vector<32x36xbf16>, vector<300x36xf32> -> vector<300x36xf32>
    %c0_3 = arith.constant 0 : index
    %c0_4 = arith.constant 0 : index
    %4 = vector.load %arg3[%c0_3, %c0_4] : memref<1x36xf32, #tpu.memory_space<vmem>>, vector<1x36xf32>
    %5 = vector.broadcast %4 : vector<1x36xf32> to vector<300x36xf32>
    %6 = arith.addf %3, %5 : vector<300x36xf32>
    %7 = arith.negf %6 : vector<300x36xf32>
    %8 = math.exp %7 : vector<300x36xf32>
    %cst_5 = arith.constant 1.000000e+00 : f32
    %9 = vector.broadcast %cst_5 : f32 to vector<300x36xf32>
    %10 = arith.addf %9, %8 : vector<300x36xf32>
    %11 = arith.divf %9, %10 : vector<300x36xf32>
    %12 = arith.truncf %11 : vector<300x36xf32> to vector<300x36xbf16>
    %c0_6 = arith.constant 0 : index
    %c0_7 = arith.constant 0 : index
    %13 = vector.load %arg4[%c0_6, %c0_7] : memref<36x24xbf16, #tpu.memory_space<vmem>>, vector<36x24xbf16>
    %cst_8 = arith.constant dense<0.000000e+00> : vector<300x24xf32>
    %14 = tpu.matmul %12, %13, %cst_8 {dimension_numbers = #tpu.dot_dimension_numbers<[1], [0], [0], [1], [0, 0, 1, 1], [], []>} : vector<300x36xbf16>, vector<36x24xbf16>, vector<300x24xf32> -> vector<300x24xf32>
    %c0_9 = arith.constant 0 : index
    %c0_10 = arith.constant 0 : index
    %15 = vector.load %arg5[%c0_9, %c0_10] : memref<1x24xf32, #tpu.memory_space<vmem>>, vector<1x24xf32>
    %16 = vector.broadcast %15 : vector<1x24xf32> to vector<300x24xf32>
    %17 = arith.addf %14, %16 : vector<300x24xf32>
    %18 = arith.negf %17 : vector<300x24xf32>
    %19 = math.exp %18 : vector<300x24xf32>
    %cst_11 = arith.constant 1.000000e+00 : f32
    %20 = vector.broadcast %cst_11 : f32 to vector<300x24xf32>
    %21 = arith.addf %20, %19 : vector<300x24xf32>
    %22 = arith.divf %20, %21 : vector<300x24xf32>
    %23 = arith.truncf %22 : vector<300x24xf32> to vector<300x24xbf16>
    %c0_12 = arith.constant 0 : index
    %c0_13 = arith.constant 0 : index
    %24 = vector.load %arg6[%c0_12, %c0_13] : memref<24x12xbf16, #tpu.memory_space<vmem>>, vector<24x12xbf16>
    %cst_14 = arith.constant dense<0.000000e+00> : vector<300x12xf32>
    %25 = tpu.matmul %23, %24, %cst_14 {dimension_numbers = #tpu.dot_dimension_numbers<[1], [0], [0], [1], [0, 0, 1, 1], [], []>} : vector<300x24xbf16>, vector<24x12xbf16>, vector<300x12xf32> -> vector<300x12xf32>
    %c0_15 = arith.constant 0 : index
    %c0_16 = arith.constant 0 : index
    %26 = vector.load %arg7[%c0_15, %c0_16] : memref<1x12xf32, #tpu.memory_space<vmem>>, vector<1x12xf32>
    %27 = vector.broadcast %26 : vector<1x12xf32> to vector<300x12xf32>
    %28 = arith.addf %25, %27 : vector<300x12xf32>
    %29 = arith.negf %28 : vector<300x12xf32>
    %30 = math.exp %29 : vector<300x12xf32>
    %cst_17 = arith.constant 1.000000e+00 : f32
    %31 = vector.broadcast %cst_17 : f32 to vector<300x12xf32>
    %32 = arith.addf %31, %30 : vector<300x12xf32>
    %33 = arith.divf %31, %32 : vector<300x12xf32>
    %34 = arith.truncf %33 : vector<300x12xf32> to vector<300x12xbf16>
    %c0_18 = arith.constant 0 : index
    %c0_19 = arith.constant 0 : index
    %35 = vector.load %arg8[%c0_18, %c0_19] : memref<12x4xbf16, #tpu.memory_space<vmem>>, vector<12x4xbf16>
    %cst_20 = arith.constant dense<0.000000e+00> : vector<300x4xf32>
    %36 = tpu.matmul %34, %35, %cst_20 {dimension_numbers = #tpu.dot_dimension_numbers<[1], [0], [0], [1], [0, 0, 1, 1], [], []>} : vector<300x12xbf16>, vector<12x4xbf16>, vector<300x4xf32> -> vector<300x4xf32>
    %c0_21 = arith.constant 0 : index
    %c0_22 = arith.constant 0 : index
    %37 = vector.load %arg9[%c0_21, %c0_22] : memref<1x4xf32, #tpu.memory_space<vmem>>, vector<1x4xf32>
    %38 = vector.broadcast %37 : vector<1x4xf32> to vector<300x4xf32>
    %39 = arith.addf %36, %38 : vector<300x4xf32>
    %40 = arith.negf %39 : vector<300x4xf32>
    %41 = math.exp %40 : vector<300x4xf32>
    %cst_23 = arith.constant 1.000000e+00 : f32
    %42 = vector.broadcast %cst_23 : f32 to vector<300x4xf32>
    %43 = arith.addf %42, %41 : vector<300x4xf32>
    %44 = arith.divf %42, %43 : vector<300x4xf32>
    %cst_24 = arith.constant dense<0.000000e+00> : vector<4xf32>
    %45 = vector.multi_reduction <add>, %44, %cst_24 [0] : vector<300x4xf32> to vector<4xf32>
    %46 = vector.shape_cast %45 : vector<4xf32> to vector<1x4xf32>
    %cst_25 = arith.constant 3.000000e+02 : f32
    %47 = vector.broadcast %cst_25 : f32 to vector<1x4xf32>
    %48 = arith.divf %46, %47 : vector<1x4xf32>
    %49 = vector.broadcast %48 : vector<1x4xf32> to vector<300x4xf32>
    %50 = arith.subf %44, %49 : vector<300x4xf32>
    %51 = arith.mulf %50, %50 : vector<300x4xf32>
    %cst_26 = arith.constant dense<0.000000e+00> : vector<4xf32>
    %52 = vector.multi_reduction <add>, %51, %cst_26 [0] : vector<300x4xf32> to vector<4xf32>
    %53 = vector.shape_cast %52 : vector<4xf32> to vector<1x4xf32>
    %cst_27 = arith.constant 3.000000e+02 : f32
    %54 = vector.broadcast %cst_27 : f32 to vector<1x4xf32>
    %55 = arith.divf %53, %54 : vector<1x4xf32>
    %c0_28 = arith.constant 0 : index
    %c0_29 = arith.constant 0 : index
    %56 = vector.load %arg10[%c0_28, %c0_29] : memref<1x4xf32, #tpu.memory_space<vmem>>, vector<1x4xf32>
    %cst_30 = arith.constant 9.99999974E-6 : f32
    %57 = vector.broadcast %cst_30 : f32 to vector<1x4xf32>
    %58 = arith.addf %55, %57 : vector<1x4xf32>
    %59 = math.rsqrt %58 : vector<1x4xf32>
    %60 = arith.mulf %56, %59 : vector<1x4xf32>
    %c0_31 = arith.constant 0 : index
    %c0_32 = arith.constant 0 : index
    %61 = vector.load %arg11[%c0_31, %c0_32] : memref<1x4xf32, #tpu.memory_space<vmem>>, vector<1x4xf32>
    %62 = arith.mulf %48, %60 : vector<1x4xf32>
    %63 = arith.subf %61, %62 : vector<1x4xf32>
    %c0_33 = arith.constant 0 : index
    %c0_34 = arith.constant 0 : index
    %64 = vector.load %arg12[%c0_33, %c0_34] : memref<1x4xf32, #tpu.memory_space<vmem>>, vector<1x4xf32>
    %65 = arith.subf %63, %64 : vector<1x4xf32>
    %66 = vector.broadcast %60 : vector<1x4xf32> to vector<300x4xf32>
    %67 = arith.mulf %44, %66 : vector<300x4xf32>
    %68 = vector.broadcast %65 : vector<1x4xf32> to vector<300x4xf32>
    %69 = arith.addf %67, %68 : vector<300x4xf32>
    %cst_35 = arith.constant 0.000000e+00 : f32
    %70 = vector.broadcast %cst_35 : f32 to vector<300x4xf32>
    %71 = arith.maximumf %69, %70 : vector<300x4xf32>
    %cst_36 = arith.constant dense<0.000000e+00> : vector<300xf32>
    %72 = vector.multi_reduction <add>, %71, %cst_36 [1] : vector<300x4xf32> to vector<300xf32>
    %73 = vector.shape_cast %72 : vector<300xf32> to vector<300x1xf32>
    %cst_37 = arith.constant 9.99999993E-9 : f32
    %74 = vector.broadcast %cst_37 : f32 to vector<300x1xf32>
    %75 = arith.addf %73, %74 : vector<300x1xf32>
    %76 = vector.broadcast %75 : vector<300x1xf32> to vector<300x4xf32>
    %77 = arith.divf %71, %76 : vector<300x4xf32>
    %c0_38 = arith.constant 0 : index
    %c0_39 = arith.constant 0 : index
    %78 = vector.load %arg14[%c0_38, %c0_39] : memref<300x4xf32, #tpu.memory_space<vmem>>, vector<300x4xf32>
    tpu.vector_store %arg14[%c0_38, %c0_39], %77 {strides = array<i32>} : memref<300x4xf32, #tpu.memory_space<vmem>>, vector<300x4xf32>,
    %c0_40 = arith.constant 0 : index
    %c0_41 = arith.constant 0 : index
    %79 = vector.load %arg13[%c0_40, %c0_41] : memref<4x32xf32, #tpu.memory_space<vmem>>, vector<4x32xf32>
    %cst_42 = arith.constant dense<0.000000e+00> : vector<300x32xf32>
    %80 = tpu.matmul %77, %79, %cst_42 {dimension_numbers = #tpu.dot_dimension_numbers<[1], [0], [0], [1], [0, 0, 1, 1], [], []>} : vector<300x4xf32>, vector<4x32xf32>, vector<300x32xf32> -> vector<300x32xf32>
    %c0_43 = arith.constant 0 : index
    %c0_44 = arith.constant 0 : index
    %81 = vector.load %arg15[%c0_43, %c0_44] : memref<300x32xf32, #tpu.memory_space<vmem>>, vector<300x32xf32>
    tpu.vector_store %arg15[%c0_43, %c0_44], %80 {strides = array<i32>} : memref<300x32xf32, #tpu.memory_space<vmem>>, vector<300x32xf32>,
    return
  }
  func.func @transform_0(%arg0: i32) -> (i32, i32) {
    %c0_i32 = arith.constant 0 : i32
    %c0_i32_0 = arith.constant 0 : i32
    %c0_i32_1 = arith.constant 0 : i32
    return %c0_i32, %c0_i32_0 : i32, i32
  }
  func.func @transform_1(%arg0: i32) -> (i32, i32) {
    %c0_i32 = arith.constant 0 : i32
    %c0_i32_0 = arith.constant 0 : i32
    %c0_i32_1 = arith.constant 0 : i32
    return %c0_i32, %c0_i32_0 : i32, i32
  }
  func.func @transform_2(%arg0: i32) -> (i32, i32) {
    %c0_i32 = arith.constant 0 : i32
    %c0_i32_0 = arith.constant 0 : i32
    %c0_i32_1 = arith.constant 0 : i32
    return %c0_i32, %c0_i32_0 : i32, i32
  }
  func.func @transform_3(%arg0: i32) -> (i32, i32) {
    %c0_i32 = arith.constant 0 : i32
    %c0_i32_0 = arith.constant 0 : i32
    %c0_i32_1 = arith.constant 0 : i32
    return %c0_i32, %c0_i32_0 : i32, i32
  }
  func.func @transform_4(%arg0: i32) -> (i32, i32) {
    %c0_i32 = arith.constant 0 : i32
    %c0_i32_0 = arith.constant 0 : i32
    %c0_i32_1 = arith.constant 0 : i32
    return %c0_i32, %c0_i32_0 : i32, i32
  }
  func.func @transform_5(%arg0: i32) -> (i32, i32) {
    %c0_i32 = arith.constant 0 : i32
    %c0_i32_0 = arith.constant 0 : i32
    %c0_i32_1 = arith.constant 0 : i32
    return %c0_i32, %c0_i32_0 : i32, i32
  }
  func.func @transform_6(%arg0: i32) -> (i32, i32) {
    %c0_i32 = arith.constant 0 : i32
    %c0_i32_0 = arith.constant 0 : i32
    %c0_i32_1 = arith.constant 0 : i32
    return %c0_i32, %c0_i32_0 : i32, i32
  }
  func.func @transform_7(%arg0: i32) -> (i32, i32) {
    %c0_i32 = arith.constant 0 : i32
    %c0_i32_0 = arith.constant 0 : i32
    %c0_i32_1 = arith.constant 0 : i32
    return %c0_i32, %c0_i32_0 : i32, i32
  }
  func.func @transform_8(%arg0: i32) -> (i32, i32) {
    %c0_i32 = arith.constant 0 : i32
    %c0_i32_0 = arith.constant 0 : i32
    %c0_i32_1 = arith.constant 0 : i32
    return %c0_i32, %c0_i32_0 : i32, i32
  }
  func.func @transform_9(%arg0: i32) -> (i32, i32) {
    %c0_i32 = arith.constant 0 : i32
    %c0_i32_0 = arith.constant 0 : i32
    %c0_i32_1 = arith.constant 0 : i32
    return %c0_i32, %c0_i32_0 : i32, i32
  }
  func.func @transform_10(%arg0: i32) -> (i32, i32) {
    %c0_i32 = arith.constant 0 : i32
    %c0_i32_0 = arith.constant 0 : i32
    %c0_i32_1 = arith.constant 0 : i32
    return %c0_i32, %c0_i32_0 : i32, i32
  }
  func.func @transform_11(%arg0: i32) -> (i32, i32) {
    %c0_i32 = arith.constant 0 : i32
    %c0_i32_0 = arith.constant 0 : i32
    %c0_i32_1 = arith.constant 0 : i32
    return %c0_i32, %c0_i32_0 : i32, i32
  }
  func.func @transform_12(%arg0: i32) -> (i32, i32) {
    %c0_i32 = arith.constant 0 : i32
    %c0_i32_0 = arith.constant 0 : i32
    %c0_i32_1 = arith.constant 0 : i32
    return %c0_i32, %c0_i32_0 : i32, i32
  }
  func.func @transform_13(%arg0: i32) -> (i32, i32) {
    %c0_i32 = arith.constant 0 : i32
    %c0_i32_0 = arith.constant 0 : i32
    %c0_i32_1 = arith.constant 0 : i32
    return %c0_i32, %c0_i32_0 : i32, i32
  }
  func.func @transform_14(%arg0: i32) -> (i32, i32) {
    %c0_i32 = arith.constant 0 : i32
    %c0_i32_0 = arith.constant 0 : i32
    %c0_i32_1 = arith.constant 0 : i32
    return %c0_i32, %c0_i32_0 : i32, i32
  }
}

</mosaic_0001>

<llo_original>
// kernel: autoencoder_forward.1
$region0: #{autoencoder_forward.1}
  #allocation0 [shape = 'u32[]', space=smem, size = 0x4, offset = 0x4, fixed_abs, tag = 'smem constant byte address 0x4 - core index']
  #allocation1 [shape = 'u32[72,128]{1,0:T(1,128)}', space=vmem, size = 0x9000, scoped, tag = 'internal scratch']
  %s0 = inlined_call_operand.vmem [shape: f32[300,32], index: 0, kind: input, shape index: {}]
  %s1 = inlined_call_operand.vmem [shape: bf16[32,36], index: 1, kind: input, shape index: {}]
  %s2 = inlined_call_operand.vmem [shape: f32[1,36], index: 2, kind: input, shape index: {}]
  %s3 = inlined_call_operand.vmem [shape: bf16[36,24], index: 3, kind: input, shape index: {}]
  %s4 = inlined_call_operand.vmem [shape: f32[1,24], index: 4, kind: input, shape index: {}]
  %s5 = inlined_call_operand.vmem [shape: bf16[24,12], index: 5, kind: input, shape index: {}]
  %s6 = inlined_call_operand.vmem [shape: f32[1,12], index: 6, kind: input, shape index: {}]
  %s7 = inlined_call_operand.vmem [shape: bf16[12,4], index: 7, kind: input, shape index: {}]
  %s8 = inlined_call_operand.vmem [shape: f32[1,4], index: 8, kind: input, shape index: {}]
  %s9 = inlined_call_operand.vmem [shape: f32[1,4], index: 9, kind: input, shape index: {}]
  %s10 = inlined_call_operand.vmem [shape: f32[1,4], index: 10, kind: input, shape index: {}]
  %s11 = inlined_call_operand.vmem [shape: f32[1,4], index: 11, kind: input, shape index: {}]
  %s12 = inlined_call_operand.vmem [shape: f32[4,32], index: 12, kind: input, shape index: {}]
  %s13 = inlined_call_operand.vmem [shape: f32[300,4], index: 13, kind: output, shape index: {0}]
  %s14 = inlined_call_operand.vmem [shape: f32[300,32], index: 14, kind: output, shape index: {1}]
  %15 = xla_tuple %s13, %s14
  %s16 = sld [smem:[#allocation0]]
  $region70: #{autoencoder_forward.1} parent=0
    _
  %s18 = ssub.s32 1, %s16
  %s19 = scalar_select 0, %s18, %s16
  // Predicated region
  $region2: #{autoencoder_forward.1} parent=0 // pred_check
    _
  $region3: #{autoencoder_forward.1} parent=0 // pred_check_branch
    %21 = sbr.rel (0) target = $region5
  $region4: #{autoencoder_forward.1} parent=0 // pred_region
    _
  $region5: #{autoencoder_forward.1} parent=0 // pred_fallthru
    _
  // Predicated region
  $region6: #{autoencoder_forward.1} parent=0 // pred_check
    _
  $region7: #{autoencoder_forward.1} parent=0 // pred_check_branch
    %23 = sbr.rel (0) target = $region9
  $region8: #{autoencoder_forward.1} parent=0 // pred_region
    _
  $region9: #{autoencoder_forward.1} parent=0 // pred_fallthru
    _
  // Predicated region
  $region10: #{autoencoder_forward.1} parent=0 // pred_check
    _
  $region11: #{autoencoder_forward.1} parent=0 // pred_check_branch
    %25 = sbr.rel (0) target = $region13
  $region12: #{autoencoder_forward.1} parent=0 // pred_region
    _
  $region13: #{autoencoder_forward.1} parent=0 // pred_fallthru
    _
  // Predicated region
  $region14: #{autoencoder_forward.1} parent=0 // pred_check
    _
  $region15: #{autoencoder_forward.1} parent=0 // pred_check_branch
    %27 = sbr.rel (0) target = $region17
  $region16: #{autoencoder_forward.1} parent=0 // pred_region
    _
  $region17: #{autoencoder_forward.1} parent=0 // pred_fallthru
    _
  // Predicated region
  $region18: #{autoencoder_forward.1} parent=0 // pred_check
    _
  $region19: #{autoencoder_forward.1} parent=0 // pred_check_branch
    %29 = sbr.rel (0) target = $region21
  $region20: #{autoencoder_forward.1} parent=0 // pred_region
    _
  $region21: #{autoencoder_forward.1} parent=0 // pred_fallthru
    _
  // Predicated region
  $region22: #{autoencoder_forward.1} parent=0 // pred_check
    _
  $region23: #{autoencoder_forward.1} parent=0 // pred_check_branch
    %31 = sbr.rel (0) target = $region25
  $region24: #{autoencoder_forward.1} parent=0 // pred_region
    _
  $region25: #{autoencoder_forward.1} parent=0 // pred_fallthru
    _
  // Predicated region
  $region26: #{autoencoder_forward.1} parent=0 // pred_check
    _
  $region27: #{autoencoder_forward.1} parent=0 // pred_check_branch
    %33 = sbr.rel (0) target = $region29
  $region28: #{autoencoder_forward.1} parent=0 // pred_region
    _
  $region29: #{autoencoder_forward.1} parent=0 // pred_fallthru
    _
  // Predicated region
  $region30: #{autoencoder_forward.1} parent=0 // pred_check
    _
  $region31: #{autoencoder_forward.1} parent=0 // pred_check_branch
    %35 = sbr.rel (0) target = $region33
  $region32: #{autoencoder_forward.1} parent=0 // pred_region
    _
  $region33: #{autoencoder_forward.1} parent=0 // pred_fallthru
    _
  // Predicated region
  $region34: #{autoencoder_forward.1} parent=0 // pred_check
    _
  $region35: #{autoencoder_forward.1} parent=0 // pred_check_branch
    %37 = sbr.rel (0) target = $region37
  $region36: #{autoencoder_forward.1} parent=0 // pred_region
    _
  $region37: #{autoencoder_forward.1} parent=0 // pred_fallthru
    _
  // Predicated region
  $region38: #{autoencoder_forward.1} parent=0 // pred_check
    _
  $region39: #{autoencoder_forward.1} parent=0 // pred_check_branch
    %39 = sbr.rel (0) target = $region41
  $region40: #{autoencoder_forward.1} parent=0 // pred_region
    _
  $region41: #{autoencoder_forward.1} parent=0 // pred_fallthru
    _
  // Predicated region
  $region42: #{autoencoder_forward.1} parent=0 // pred_check
    _
  $region43: #{autoencoder_forward.1} parent=0 // pred_check_branch
    %41 = sbr.rel (0) target = $region45
  $region44: #{autoencoder_forward.1} parent=0 // pred_region
    _
  $region45: #{autoencoder_forward.1} parent=0 // pred_fallthru
    _
  // Predicated region
  $region46: #{autoencoder_forward.1} parent=0 // pred_check
    _
  $region47: #{autoencoder_forward.1} parent=0 // pred_check_branch
    %43 = sbr.rel (0) target = $region49
  $region48: #{autoencoder_forward.1} parent=0 // pred_region
    _
  $region49: #{autoencoder_forward.1} parent=0 // pred_fallthru
    _
  // Predicated region
  $region50: #{autoencoder_forward.1} parent=0 // pred_check
    _
  $region51: #{autoencoder_forward.1} parent=0 // pred_check_branch
    %45 = sbr.rel (0) target = $region53
  $region52: #{autoencoder_forward.1} parent=0 // pred_region
    _
  $region53: #{autoencoder_forward.1} parent=0 // pred_fallthru
    _
  %v47 = vld [vmem:[%s0] sm:$0xff]
  %v48 = vld [vmem:[%s0 + $0x8] sm:$0xff]
  %v49 = vld [vmem:[%s0 + $0x10] sm:$0xff]
  %v50 = vld [vmem:[%s0 + $0x18] sm:$0xff]
  %v51 = vld [vmem:[%s0 + $0x20] sm:$0xff]
  %v52 = vld [vmem:[%s0 + $0x28] sm:$0xff]
  %v53 = vld [vmem:[%s0 + $0x30] sm:$0xff]
  %v54 = vld [vmem:[%s0 + $0x38] sm:$0xff]
  %v55 = vld [vmem:[%s0 + $0x40] sm:$0xff]
  %v56 = vld [vmem:[%s0 + $0x48] sm:$0xff]
  %v57 = vld [vmem:[%s0 + $0x50] sm:$0xff]
  %v58 = vld [vmem:[%s0 + $0x58] sm:$0xff]
  %v59 = vld [vmem:[%s0 + $0x60] sm:$0xff]
  %v60 = vld [vmem:[%s0 + $0x68] sm:$0xff]
  %v61 = vld [vmem:[%s0 + $0x70] sm:$0xff]
  %v62 = vld [vmem:[%s0 + $0x78] sm:$0xff]
  %v63 = vld [vmem:[%s0 + $0x80] sm:$0xff]
  %v64 = vld [vmem:[%s0 + $0x88] sm:$0xff]
  %v65 = vld [vmem:[%s0 + $0x90] sm:$0xff]
  %v66 = vld [vmem:[%s0 + $0x98] sm:$0xff]
  %v67 = vld [vmem:[%s0 + $0xa0] sm:$0xff]
  %v68 = vld [vmem:[%s0 + $0xa8] sm:$0xff]
  %v69 = vld [vmem:[%s0 + $0xb0] sm:$0xff]
  %v70 = vld [vmem:[%s0 + $0xb8] sm:$0xff]
  %v71 = vld [vmem:[%s0 + $0xc0] sm:$0xff]
  %v72 = vld [vmem:[%s0 + $0xc8] sm:$0xff]
  %v73 = vld [vmem:[%s0 + $0xd0] sm:$0xff]
  %v74 = vld [vmem:[%s0 + $0xd8] sm:$0xff]
  %v75 = vld [vmem:[%s0 + $0xe0] sm:$0xff]
  %v76 = vld [vmem:[%s0 + $0xe8] sm:$0xff]
  %v77 = vld [vmem:[%s0 + $0xf0] sm:$0xff]
  %v78 = vld [vmem:[%s0 + $0xf8] sm:$0xff]
  %v79 = vld [vmem:[%s0 + $0x100] sm:$0xff]
  %v80 = vld [vmem:[%s0 + $0x108] sm:$0xff]
  %v81 = vld [vmem:[%s0 + $0x110] sm:$0xff]
  %v82 = vld [vmem:[%s0 + $0x118] sm:$0xff]
  %v83 = vld [vmem:[%s0 + $0x120] sm:$0xff]
  %v84 = vld [vmem:[%s0 + $0x128] sm:$0xf]
  %v85 = vpack.c.bf16 %v48, %v47
  %v86 = vpack.c.bf16 %v50, %v49
  %v87 = vpack.c.bf16 %v52, %v51
  %v88 = vpack.c.bf16 %v54, %v53
  %v89 = vpack.c.bf16 %v56, %v55
  %v90 = vpack.c.bf16 %v58, %v57
  %v91 = vpack.c.bf16 %v60, %v59
  %v92 = vpack.c.bf16 %v62, %v61
  %v93 = vpack.c.bf16 %v64, %v63
  %v94 = vpack.c.bf16 %v66, %v65
  %v95 = vpack.c.bf16 %v68, %v67
  %v96 = vpack.c.bf16 %v70, %v69
  %v97 = vpack.c.bf16 %v72, %v71
  %v98 = vpack.c.bf16 %v74, %v73
  %v99 = vpack.c.bf16 %v76, %v75
  %v100 = vpack.c.bf16 %v78, %v77
  %v101 = vpack.c.bf16 %v80, %v79
  %v102 = vpack.c.bf16 %v82, %v81
  %v103 = vpack.c.bf16 %v84, %v83
  %v104 = vld [vmem:[%s1] sm:$0xf]
  %v105 = vld [vmem:[%s1 + $0x4] sm:$0xf]
  %v106 = vld [vmem:[%s1 + $0x8] sm:$0xf]
  %v107 = vld [vmem:[%s1 + $0xc] sm:$0xf]
  %v108 = vld [vmem:[%s2] sm:$0x1]
  %v110 = vperm.slane %v108, 0
  %v116 = vunpack.c.l.b16 %v104
  %v117 = vunpack.c.l.b16 %v105
  %v118 = vunpack.c.l.b16 %v106
  %v119 = vunpack.c.l.b16 %v107
  %v120 = vpack.c.b16 %v117, %v116
  %v121 = vpack.c.b16 %v119, %v118
  %vm124 = vcmask 261120
  %v126 = vsel %vm124, %v85, 0
  %v129 = vsel %vm124, %v86, 0
  %v132 = vsel %vm124, %v87, 0
  %v135 = vsel %vm124, %v88, 0
  %v138 = vsel %vm124, %v89, 0
  %v141 = vsel %vm124, %v90, 0
  %v144 = vsel %vm124, %v91, 0
  %v147 = vsel %vm124, %v92, 0
  %v150 = vsel %vm124, %v93, 0
  %v153 = vsel %vm124, %v94, 0
  %v156 = vsel %vm124, %v95, 0
  %v159 = vsel %vm124, %v96, 0
  %v162 = vsel %vm124, %v97, 0
  %v165 = vsel %vm124, %v98, 0
  %v168 = vsel %vm124, %v99, 0
  %v171 = vsel %vm124, %v100, 0
  %v174 = vsel %vm124, %v101, 0
  %v177 = vsel %vm124, %v102, 0
  %v180 = vsel %vm124, %v103, 0
  %182 = vmatpush.bf16.msra.mxu0 0
  %183 = vmatpush.bf16.msra.mxu0 0
  %184 = vmatpush.bf16.msra.mxu0 0
  %185 = vmatpush.bf16.msra.mxu0 0
  %186 = vmatpush.bf16.msra.mxu0 0
  %187 = vmatpush.bf16.msra.mxu0 0
  %188 = vmatpush.bf16.msra.mxu0 %v121
  %189 = vmatpush.bf16.msra.mxu0 %v120
  %190 = vmatmul.bf16.gmra.mxu0 %v126
  %v191 = vpop.f32.mrf.mxu0
  %v192 = vadd.f32 %v110, %v191
  %v193 = vpop.f32.mrf.mxu0
  %v194 = vadd.f32 %v110, %v193
  %195 = vmatmul.bf16.gmra.mxu0 %v129
  %v196 = vpop.f32.mrf.mxu0
  %v197 = vadd.f32 %v110, %v196
  %v198 = vpop.f32.mrf.mxu0
  %v199 = vadd.f32 %v110, %v198
  %200 = vmatmul.bf16.gmra.mxu0 %v132
  %v201 = vpop.f32.mrf.mxu0
  %v202 = vadd.f32 %v110, %v201
  %v203 = vpop.f32.mrf.mxu0
  %v204 = vadd.f32 %v110, %v203
  %205 = vmatmul.bf16.gmra.mxu0 %v135
  %v206 = vpop.f32.mrf.mxu0
  %v207 = vadd.f32 %v110, %v206
  %v208 = vpop.f32.mrf.mxu0
  %v209 = vadd.f32 %v110, %v208
  %210 = vmatmul.bf16.gmra.mxu0 %v138
  %v211 = vpop.f32.mrf.mxu0
  %v212 = vadd.f32 %v110, %v211
  %v213 = vpop.f32.mrf.mxu0
  %v214 = vadd.f32 %v110, %v213
  %215 = vmatmul.bf16.gmra.mxu0 %v141
  %v216 = vpop.f32.mrf.mxu0
  %v217 = vadd.f32 %v110, %v216
  %v218 = vpop.f32.mrf.mxu0
  %v219 = vadd.f32 %v110, %v218
  %220 = vmatmul.bf16.gmra.mxu0 %v144
  %v221 = vpop.f32.mrf.mxu0
  %v222 = vadd.f32 %v110, %v221
  %v223 = vpop.f32.mrf.mxu0
  %v224 = vadd.f32 %v110, %v223
  %225 = vmatmul.bf16.gmra.mxu0 %v147
  %v226 = vpop.f32.mrf.mxu0
  %v227 = vadd.f32 %v110, %v226
  %v228 = vpop.f32.mrf.mxu0
  %v229 = vadd.f32 %v110, %v228
  %230 = vmatmul.bf16.gmra.mxu0 %v150
  %v231 = vpop.f32.mrf.mxu0
  %v232 = vadd.f32 %v110, %v231
  %v233 = vpop.f32.mrf.mxu0
  %v234 = vadd.f32 %v110, %v233
  %235 = vmatmul.bf16.gmra.mxu0 %v153
  %v236 = vpop.f32.mrf.mxu0
  %v237 = vadd.f32 %v110, %v236
  %v238 = vpop.f32.mrf.mxu0
  %v239 = vadd.f32 %v110, %v238
  %240 = vmatmul.bf16.gmra.mxu0 %v156
  %v241 = vpop.f32.mrf.mxu0
  %v242 = vadd.f32 %v110, %v241
  %v243 = vpop.f32.mrf.mxu0
  %v244 = vadd.f32 %v110, %v243
  %245 = vmatmul.bf16.gmra.mxu0 %v159
  %v246 = vpop.f32.mrf.mxu0
  %v247 = vadd.f32 %v110, %v246
  %v248 = vpop.f32.mrf.mxu0
  %v249 = vadd.f32 %v110, %v248
  %250 = vmatmul.bf16.gmra.mxu0 %v162
  %v251 = vpop.f32.mrf.mxu0
  %v252 = vadd.f32 %v110, %v251
  %v253 = vpop.f32.mrf.mxu0
  %v254 = vadd.f32 %v110, %v253
  %255 = vmatmul.bf16.gmra.mxu0 %v165
  %v256 = vpop.f32.mrf.mxu0
  %v257 = vadd.f32 %v110, %v256
  %v258 = vpop.f32.mrf.mxu0
  %v259 = vadd.f32 %v110, %v258
  %260 = vmatmul.bf16.gmra.mxu0 %v168
  %v261 = vpop.f32.mrf.mxu0
  %v262 = vadd.f32 %v110, %v261
  %v263 = vpop.f32.mrf.mxu0
  %v264 = vadd.f32 %v110, %v263
  %265 = vmatmul.bf16.gmra.mxu0 %v171
  %v266 = vpop.f32.mrf.mxu0
  %v267 = vadd.f32 %v110, %v266
  %v268 = vpop.f32.mrf.mxu0
  %v269 = vadd.f32 %v110, %v268
  %270 = vmatmul.bf16.gmra.mxu0 %v174
  %v271 = vpop.f32.mrf.mxu0
  %v272 = vadd.f32 %v110, %v271
  %v273 = vpop.f32.mrf.mxu0
  %v274 = vadd.f32 %v110, %v273
  %275 = vmatmul.bf16.gmra.mxu0 %v177
  %v276 = vpop.f32.mrf.mxu0
  %v277 = vadd.f32 %v110, %v276
  %v278 = vpop.f32.mrf.mxu0
  %v279 = vadd.f32 %v110, %v278
  %280 = vmatmul.bf16.gmra.mxu0 %v180
  %v281 = vpop.f32.mrf.mxu0
  %v282 = vadd.f32 %v110, %v281
  %v283 = vpop.f32.mrf.mxu0
  %v284 = vadd.f32 %v110, %v283
  %285 = vdwg.mxu0
  %v286 = vxor.u32 %v192, 2147483648
  %v287 = vxor.u32 %v194, 2147483648
  %v288 = vxor.u32 %v197, 2147483648
  %v289 = vxor.u32 %v199, 2147483648
  %v290 = vxor.u32 %v202, 2147483648
  %v291 = vxor.u32 %v204, 2147483648
  %v292 = vxor.u32 %v207, 2147483648
  %v293 = vxor.u32 %v209, 2147483648
  %v294 = vxor.u32 %v212, 2147483648
  %v295 = vxor.u32 %v214, 2147483648
  %v296 = vxor.u32 %v217, 2147483648
  %v297 = vxor.u32 %v219, 2147483648
  %v298 = vxor.u32 %v222, 2147483648
  %v299 = vxor.u32 %v224, 2147483648
  %v300 = vxor.u32 %v227, 2147483648
  %v301 = vxor.u32 %v229, 2147483648
  %v302 = vxor.u32 %v232, 2147483648
  %v303 = vxor.u32 %v234, 2147483648
  %v304 = vxor.u32 %v237, 2147483648
  %v305 = vxor.u32 %v239, 2147483648
  %v306 = vxor.u32 %v242, 2147483648
  %v307 = vxor.u32 %v244, 2147483648
  %v308 = vxor.u32 %v247, 2147483648
  %v309 = vxor.u32 %v249, 2147483648
  %v310 = vxor.u32 %v252, 2147483648
  %v311 = vxor.u32 %v254, 2147483648
  %v312 = vxor.u32 %v257, 2147483648
  %v313 = vxor.u32 %v259, 2147483648
  %v314 = vxor.u32 %v262, 2147483648
  %v315 = vxor.u32 %v264, 2147483648
  %v316 = vxor.u32 %v267, 2147483648
  %v317 = vxor.u32 %v269, 2147483648
  %v318 = vxor.u32 %v272, 2147483648
  %v319 = vxor.u32 %v274, 2147483648
  %v320 = vxor.u32 %v277, 2147483648
  %v321 = vxor.u32 %v279, 2147483648
  %v322 = vxor.u32 %v282, 2147483648
  %v323 = vxor.u32 %v284, 2147483648
  %v324 = vmul.f32 %v286, 1.442695
  %v325 = vpow.pop %v324
  %v326 = vmul.f32 %v287, 1.442695
  %v327 = vpow.pop %v326
  %v328 = vmul.f32 %v288, 1.442695
  %v329 = vpow.pop %v328
  %v330 = vmul.f32 %v289, 1.442695
  %v331 = vpow.pop %v330
  %v332 = vmul.f32 %v290, 1.442695
  %v333 = vpow.pop %v332
  %v334 = vmul.f32 %v291, 1.442695
  %v335 = vpow.pop %v334
  %v336 = vmul.f32 %v292, 1.442695
  %v337 = vpow.pop %v336
  %v338 = vmul.f32 %v293, 1.442695
  %v339 = vpow.pop %v338
  %v340 = vmul.f32 %v294, 1.442695
  %v341 = vpow.pop %v340
  %v342 = vmul.f32 %v295, 1.442695
  %v343 = vpow.pop %v342
  %v344 = vmul.f32 %v296, 1.442695
  %v345 = vpow.pop %v344
  %v346 = vmul.f32 %v297, 1.442695
  %v347 = vpow.pop %v346
  %v348 = vmul.f32 %v298, 1.442695
  %v349 = vpow.pop %v348
  %v350 = vmul.f32 %v299, 1.442695
  %v351 = vpow.pop %v350
  %v352 = vmul.f32 %v300, 1.442695
  %v353 = vpow.pop %v352
  %v354 = vmul.f32 %v301, 1.442695
  %v355 = vpow.pop %v354
  %v356 = vmul.f32 %v302, 1.442695
  %v357 = vpow.pop %v356
  %v358 = vmul.f32 %v303, 1.442695
  %v359 = vpow.pop %v358
  %v360 = vmul.f32 %v304, 1.442695
  %v361 = vpow.pop %v360
  %v362 = vmul.f32 %v305, 1.442695
  %v363 = vpow.pop %v362
  %v364 = vmul.f32 %v306, 1.442695
  %v365 = vpow.pop %v364
  %v366 = vmul.f32 %v307, 1.442695
  %v367 = vpow.pop %v366
  %v368 = vmul.f32 %v308, 1.442695
  %v369 = vpow.pop %v368
  %v370 = vmul.f32 %v309, 1.442695
  %v371 = vpow.pop %v370
  %v372 = vmul.f32 %v310, 1.442695
  %v373 = vpow.pop %v372
  %v374 = vmul.f32 %v311, 1.442695
  %v375 = vpow.pop %v374
  %v376 = vmul.f32 %v312, 1.442695
  %v377 = vpow.pop %v376
  %v378 = vmul.f32 %v313, 1.442695
  %v379 = vpow.pop %v378
  %v380 = vmul.f32 %v314, 1.442695
  %v381 = vpow.pop %v380
  %v382 = vmul.f32 %v315, 1.442695
  %v383 = vpow.pop %v382
  %v384 = vmul.f32 %v316, 1.442695
  %v385 = vpow.pop %v384
  %v386 = vmul.f32 %v317, 1.442695
  %v387 = vpow.pop %v386
  %v388 = vmul.f32 %v318, 1.442695
  %v389 = vpow.pop %v388
  %v390 = vmul.f32 %v319, 1.442695
  %v391 = vpow.pop %v390
  %v392 = vmul.f32 %v320, 1.442695
  %v393 = vpow.pop %v392
  %v394 = vmul.f32 %v321, 1.442695
  %v395 = vpow.pop %v394
  %v396 = vmul.f32 %v322, 1.442695
  %v397 = vpow.pop %v396
  %v398 = vmul.f32 %v323, 1.442695
  %v399 = vpow.pop %v398
  %v400 = vadd.f32 %v325, 1.0
  %v401 = vadd.f32 %v327, 1.0
  %v402 = vadd.f32 %v329, 1.0
  %v403 = vadd.f32 %v331, 1.0
  %v404 = vadd.f32 %v333, 1.0
  %v405 = vadd.f32 %v335, 1.0
  %v406 = vadd.f32 %v337, 1.0
  %v407 = vadd.f32 %v339, 1.0
  %v408 = vadd.f32 %v341, 1.0
  %v409 = vadd.f32 %v343, 1.0
  %v410 = vadd.f32 %v345, 1.0
  %v411 = vadd.f32 %v347, 1.0
  %v412 = vadd.f32 %v349, 1.0
  %v413 = vadd.f32 %v351, 1.0
  %v414 = vadd.f32 %v353, 1.0
  %v415 = vadd.f32 %v355, 1.0
  %v416 = vadd.f32 %v357, 1.0
  %v417 = vadd.f32 %v359, 1.0
  %v418 = vadd.f32 %v361, 1.0
  %v419 = vadd.f32 %v363, 1.0
  %v420 = vadd.f32 %v365, 1.0
  %v421 = vadd.f32 %v367, 1.0
  %v422 = vadd.f32 %v369, 1.0
  %v423 = vadd.f32 %v371, 1.0
  %v424 = vadd.f32 %v373, 1.0
  %v425 = vadd.f32 %v375, 1.0
  %v426 = vadd.f32 %v377, 1.0
  %v427 = vadd.f32 %v379, 1.0
  %v428 = vadd.f32 %v381, 1.0
  %v429 = vadd.f32 %v383, 1.0
  %v430 = vadd.f32 %v385, 1.0
  %v431 = vadd.f32 %v387, 1.0
  %v432 = vadd.f32 %v389, 1.0
  %v433 = vadd.f32 %v391, 1.0
  %v434 = vadd.f32 %v393, 1.0
  %v435 = vadd.f32 %v395, 1.0
  %v436 = vadd.f32 %v397, 1.0
  %v437 = vadd.f32 %v399, 1.0
  %v438 = vrcp.pop %v400
  %v439 = vmul.f32 %v400, %v438
  %v440 = vsub.f32 1.0, %v439
  %v441 = vmul.f32 %v438, %v440
  %v442 = vadd.f32 %v438, %v441
  %vm443 = vweird.f32 %v400
  %vm444 = vweird.f32 %v438
  %vm445 = vmor %vm443, %vm444
  %v446 = vsel %vm445, %v438, %v442
  %v447 = vand.u32 2147483647, %v400
  %vm448 = vcmp.eq.f32.partialorder %v447, 8.507059e+37
  %v449 = vand.u32 %v400, 2147483648
  %v450 = vor.u32 1.1754944e-38, %v449
  %v451 = vsel %vm448, %v450, %v446
  %v452 = vmul.f32 1.0, %v451
  %v453 = vrcp.pop %v401
  %v454 = vmul.f32 %v401, %v453
  %v455 = vsub.f32 1.0, %v454
  %v456 = vmul.f32 %v453, %v455
  %v457 = vadd.f32 %v453, %v456
  %vm458 = vweird.f32 %v401
  %vm459 = vweird.f32 %v453
  %vm460 = vmor %vm458, %vm459
  %v461 = vsel %vm460, %v453, %v457
  %v462 = vand.u32 2147483647, %v401
  %vm463 = vcmp.eq.f32.partialorder %v462, 8.507059e+37
  %v464 = vand.u32 %v401, 2147483648
  %v465 = vor.u32 1.1754944e-38, %v464
  %v466 = vsel %vm463, %v465, %v461
  %v467 = vmul.f32 1.0, %v466
  %v468 = vrcp.pop %v402
  %v469 = vmul.f32 %v402, %v468
  %v470 = vsub.f32 1.0, %v469
  %v471 = vmul.f32 %v468, %v470
  %v472 = vadd.f32 %v468, %v471
  %vm473 = vweird.f32 %v402
  %vm474 = vweird.f32 %v468
  %vm475 = vmor %vm473, %vm474
  %v476 = vsel %vm475, %v468, %v472
  %v477 = vand.u32 2147483647, %v402
  %vm478 = vcmp.eq.f32.partialorder %v477, 8.507059e+37
  %v479 = vand.u32 %v402, 2147483648
  %v480 = vor.u32 1.1754944e-38, %v479
  %v481 = vsel %vm478, %v480, %v476
  %v482 = vmul.f32 1.0, %v481
  %v483 = vrcp.pop %v403
  %v484 = vmul.f32 %v403, %v483
  %v485 = vsub.f32 1.0, %v484
  %v486 = vmul.f32 %v483, %v485
  %v487 = vadd.f32 %v483, %v486
  %vm488 = vweird.f32 %v403
  %vm489 = vweird.f32 %v483
  %vm490 = vmor %vm488, %vm489
  %v491 = vsel %vm490, %v483, %v487
  %v492 = vand.u32 2147483647, %v403
  %vm493 = vcmp.eq.f32.partialorder %v492, 8.507059e+37
  %v494 = vand.u32 %v403, 2147483648
  %v495 = vor.u32 1.1754944e-38, %v494
  %v496 = vsel %vm493, %v495, %v491
  %v497 = vmul.f32 1.0, %v496
  %v498 = vrcp.pop %v404
  %v499 = vmul.f32 %v404, %v498
  %v500 = vsub.f32 1.0, %v499
  %v501 = vmul.f32 %v498, %v500
  %v502 = vadd.f32 %v498, %v501
  %vm503 = vweird.f32 %v404
  %vm504 = vweird.f32 %v498
  %vm505 = vmor %vm503, %vm504
  %v506 = vsel %vm505, %v498, %v502
  %v507 = vand.u32 2147483647, %v404
  %vm508 = vcmp.eq.f32.partialorder %v507, 8.507059e+37
  %v509 = vand.u32 %v404, 2147483648
  %v510 = vor.u32 1.1754944e-38, %v509
  %v511 = vsel %vm508, %v510, %v506
  %v512 = vmul.f32 1.0, %v511
  %v513 = vrcp.pop %v405
  %v514 = vmul.f32 %v405, %v513
  %v515 = vsub.f32 1.0, %v514
  %v516 = vmul.f32 %v513, %v515
  %v517 = vadd.f32 %v513, %v516
  %vm518 = vweird.f32 %v405
  %vm519 = vweird.f32 %v513
  %vm520 = vmor %vm518, %vm519
  %v521 = vsel %vm520, %v513, %v517
  %v522 = vand.u32 2147483647, %v405
  %vm523 = vcmp.eq.f32.partialorder %v522, 8.507059e+37
  %v524 = vand.u32 %v405, 2147483648
  %v525 = vor.u32 1.1754944e-38, %v524
  %v526 = vsel %vm523, %v525, %v521
  %v527 = vmul.f32 1.0, %v526
  %v528 = vrcp.pop %v406
  %v529 = vmul.f32 %v406, %v528
  %v530 = vsub.f32 1.0, %v529
  %v531 = vmul.f32 %v528, %v530
  %v532 = vadd.f32 %v528, %v531
  %vm533 = vweird.f32 %v406
  %vm534 = vweird.f32 %v528
  %vm535 = vmor %vm533, %vm534
  %v536 = vsel %vm535, %v528, %v532
  %v537 = vand.u32 2147483647, %v406
  %vm538 = vcmp.eq.f32.partialorder %v537, 8.507059e+37
  %v539 = vand.u32 %v406, 2147483648
  %v540 = vor.u32 1.1754944e-38, %v539
  %v541 = vsel %vm538, %v540, %v536
  %v542 = vmul.f32 1.0, %v541
  %v543 = vrcp.pop %v407
  %v544 = vmul.f32 %v407, %v543
  %v545 = vsub.f32 1.0, %v544
  %v546 = vmul.f32 %v543, %v545
  %v547 = vadd.f32 %v543, %v546
  %vm548 = vweird.f32 %v407
  %vm549 = vweird.f32 %v543
  %vm550 = vmor %vm548, %vm549
  %v551 = vsel %vm550, %v543, %v547
  %v552 = vand.u32 2147483647, %v407
  %vm553 = vcmp.eq.f32.partialorder %v552, 8.507059e+37
  %v554 = vand.u32 %v407, 2147483648
  %v555 = vor.u32 1.1754944e-38, %v554
  %v556 = vsel %vm553, %v555, %v551
  %v557 = vmul.f32 1.0, %v556
  %v558 = vrcp.pop %v408
  %v559 = vmul.f32 %v408, %v558
  %v560 = vsub.f32 1.0, %v559
  %v561 = vmul.f32 %v558, %v560
  %v562 = vadd.f32 %v558, %v561
  %vm563 = vweird.f32 %v408
  %vm564 = vweird.f32 %v558
  %vm565 = vmor %vm563, %vm564
  %v566 = vsel %vm565, %v558, %v562
  %v567 = vand.u32 2147483647, %v408
  %vm568 = vcmp.eq.f32.partialorder %v567, 8.507059e+37
  %v569 = vand.u32 %v408, 2147483648
  %v570 = vor.u32 1.1754944e-38, %v569
  %v571 = vsel %vm568, %v570, %v566
  %v572 = vmul.f32 1.0, %v571
  %v573 = vrcp.pop %v409
  %v574 = vmul.f32 %v409, %v573
  %v575 = vsub.f32 1.0, %v574
  %v576 = vmul.f32 %v573, %v575
  %v577 = vadd.f32 %v573, %v576
  %vm578 = vweird.f32 %v409
  %vm579 = vweird.f32 %v573
  %vm580 = vmor %vm578, %vm579
  %v581 = vsel %vm580, %v573, %v577
  %v582 = vand.u32 2147483647, %v409
  %vm583 = vcmp.eq.f32.partialorder %v582, 8.507059e+37
  %v584 = vand.u32 %v409, 2147483648
  %v585 = vor.u32 1.1754944e-38, %v584
  %v586 = vsel %vm583, %v585, %v581
  %v587 = vmul.f32 1.0, %v586
  %v588 = vrcp.pop %v410
  %v589 = vmul.f32 %v410, %v588
  %v590 = vsub.f32 1.0, %v589
  %v591 = vmul.f32 %v588, %v590
  %v592 = vadd.f32 %v588, %v591
  %vm593 = vweird.f32 %v410
  %vm594 = vweird.f32 %v588
  %vm595 = vmor %vm593, %vm594
  %v596 = vsel %vm595, %v588, %v592
  %v597 = vand.u32 2147483647, %v410
  %vm598 = vcmp.eq.f32.partialorder %v597, 8.507059e+37
  %v599 = vand.u32 %v410, 2147483648
  %v600 = vor.u32 1.1754944e-38, %v599
  %v601 = vsel %vm598, %v600, %v596
  %v602 = vmul.f32 1.0, %v601
  %v603 = vrcp.pop %v411
  %v604 = vmul.f32 %v411, %v603
  %v605 = vsub.f32 1.0, %v604
  %v606 = vmul.f32 %v603, %v605
  %v607 = vadd.f32 %v603, %v606
  %vm608 = vweird.f32 %v411
  %vm609 = vweird.f32 %v603
  %vm610 = vmor %vm608, %vm609
  %v611 = vsel %vm610, %v603, %v607
  %v612 = vand.u32 2147483647, %v411
  %vm613 = vcmp.eq.f32.partialorder %v612, 8.507059e+37
  %v614 = vand.u32 %v411, 2147483648
  %v615 = vor.u32 1.1754944e-38, %v614
  %v616 = vsel %vm613, %v615, %v611
  %v617 = vmul.f32 1.0, %v616
  %v618 = vrcp.pop %v412
  %v619 = vmul.f32 %v412, %v618
  %v620 = vsub.f32 1.0, %v619
  %v621 = vmul.f32 %v618, %v620
  %v622 = vadd.f32 %v618, %v621
  %vm623 = vweird.f32 %v412
  %vm624 = vweird.f32 %v618
  %vm625 = vmor %vm623, %vm624
  %v626 = vsel %vm625, %v618, %v622
  %v627 = vand.u32 2147483647, %v412
  %vm628 = vcmp.eq.f32.partialorder %v627, 8.507059e+37
  %v629 = vand.u32 %v412, 2147483648
  %v630 = vor.u32 1.1754944e-38, %v629
  %v631 = vsel %vm628, %v630, %v626
  %v632 = vmul.f32 1.0, %v631
  %v633 = vrcp.pop %v413
  %v634 = vmul.f32 %v413, %v633
  %v635 = vsub.f32 1.0, %v634
  %v636 = vmul.f32 %v633, %v635
  %v637 = vadd.f32 %v633, %v636
  %vm638 = vweird.f32 %v413
  %vm639 = vweird.f32 %v633
  %vm640 = vmor %vm638, %vm639
  %v641 = vsel %vm640, %v633, %v637
  %v642 = vand.u32 2147483647, %v413
  %vm643 = vcmp.eq.f32.partialorder %v642, 8.507059e+37
  %v644 = vand.u32 %v413, 2147483648
  %v645 = vor.u32 1.1754944e-38, %v644
  %v646 = vsel %vm643, %v645, %v641
  %v647 = vmul.f32 1.0, %v646
  %v648 = vrcp.pop %v414
  %v649 = vmul.f32 %v414, %v648
  %v650 = vsub.f32 1.0, %v649
  %v651 = vmul.f32 %v648, %v650
  %v652 = vadd.f32 %v648, %v651
  %vm653 = vweird.f32 %v414
  %vm654 = vweird.f32 %v648
  %vm655 = vmor %vm653, %vm654
  %v656 = vsel %vm655, %v648, %v652
  %v657 = vand.u32 2147483647, %v414
  %vm658 = vcmp.eq.f32.partialorder %v657, 8.507059e+37
  %v659 = vand.u32 %v414, 2147483648
  %v660 = vor.u32 1.1754944e-38, %v659
  %v661 = vsel %vm658, %v660, %v656
  %v662 = vmul.f32 1.0, %v661
  %v663 = vrcp.pop %v415
  %v664 = vmul.f32 %v415, %v663
  %v665 = vsub.f32 1.0, %v664
  %v666 = vmul.f32 %v663, %v665
  %v667 = vadd.f32 %v663, %v666
  %vm668 = vweird.f32 %v415
  %vm669 = vweird.f32 %v663
  %vm670 = vmor %vm668, %vm669
  %v671 = vsel %vm670, %v663, %v667
  %v672 = vand.u32 2147483647, %v415
  %vm673 = vcmp.eq.f32.partialorder %v672, 8.507059e+37
  %v674 = vand.u32 %v415, 2147483648
  %v675 = vor.u32 1.1754944e-38, %v674
  %v676 = vsel %vm673, %v675, %v671
  %v677 = vmul.f32 1.0, %v676
  %v678 = vrcp.pop %v416
  %v679 = vmul.f32 %v416, %v678
  %v680 = vsub.f32 1.0, %v679
  %v681 = vmul.f32 %v678, %v680
  %v682 = vadd.f32 %v678, %v681
  %vm683 = vweird.f32 %v416
  %vm684 = vweird.f32 %v678
  %vm685 = vmor %vm683, %vm684
  %v686 = vsel %vm685, %v678, %v682
  %v687 = vand.u32 2147483647, %v416
  %vm688 = vcmp.eq.f32.partialorder %v687, 8.507059e+37
  %v689 = vand.u32 %v416, 2147483648
  %v690 = vor.u32 1.1754944e-38, %v689
  %v691 = vsel %vm688, %v690, %v686
  %v692 = vmul.f32 1.0, %v691
  %v693 = vrcp.pop %v417
  %v694 = vmul.f32 %v417, %v693
  %v695 = vsub.f32 1.0, %v694
  %v696 = vmul.f32 %v693, %v695
  %v697 = vadd.f32 %v693, %v696
  %vm698 = vweird.f32 %v417
  %vm699 = vweird.f32 %v693
  %vm700 = vmor %vm698, %vm699
  %v701 = vsel %vm700, %v693, %v697
  %v702 = vand.u32 2147483647, %v417
  %vm703 = vcmp.eq.f32.partialorder %v702, 8.507059e+37
  %v704 = vand.u32 %v417, 2147483648
  %v705 = vor.u32 1.1754944e-38, %v704
  %v706 = vsel %vm703, %v705, %v701
  %v707 = vmul.f32 1.0, %v706
  %v708 = vrcp.pop %v418
  %v709 = vmul.f32 %v418, %v708
  %v710 = vsub.f32 1.0, %v709
  %v711 = vmul.f32 %v708, %v710
  %v712 = vadd.f32 %v708, %v711
  %vm713 = vweird.f32 %v418
  %vm714 = vweird.f32 %v708
  %vm715 = vmor %vm713, %vm714
  %v716 = vsel %vm715, %v708, %v712
  %v717 = vand.u32 2147483647, %v418
  %vm718 = vcmp.eq.f32.partialorder %v717, 8.507059e+37
  %v719 = vand.u32 %v418, 2147483648
  %v720 = vor.u32 1.1754944e-38, %v719
  %v721 = vsel %vm718, %v720, %v716
  %v722 = vmul.f32 1.0, %v721
  %v723 = vrcp.pop %v419
  %v724 = vmul.f32 %v419, %v723
  %v725 = vsub.f32 1.0, %v724
  %v726 = vmul.f32 %v723, %v725
  %v727 = vadd.f32 %v723, %v726
  %vm728 = vweird.f32 %v419
  %vm729 = vweird.f32 %v723
  %vm730 = vmor %vm728, %vm729
  %v731 = vsel %vm730, %v723, %v727
  %v732 = vand.u32 2147483647, %v419
  %vm733 = vcmp.eq.f32.partialorder %v732, 8.507059e+37
  %v734 = vand.u32 %v419, 2147483648
  %v735 = vor.u32 1.1754944e-38, %v734
  %v736 = vsel %vm733, %v735, %v731
  %v737 = vmul.f32 1.0, %v736
  %v738 = vrcp.pop %v420
  %v739 = vmul.f32 %v420, %v738
  %v740 = vsub.f32 1.0, %v739
  %v741 = vmul.f32 %v738, %v740
  %v742 = vadd.f32 %v738, %v741
  %vm743 = vweird.f32 %v420
  %vm744 = vweird.f32 %v738
  %vm745 = vmor %vm743, %vm744
  %v746 = vsel %vm745, %v738, %v742
  %v747 = vand.u32 2147483647, %v420
  %vm748 = vcmp.eq.f32.partialorder %v747, 8.507059e+37
  %v749 = vand.u32 %v420, 2147483648
  %v750 = vor.u32 1.1754944e-38, %v749
  %v751 = vsel %vm748, %v750, %v746
  %v752 = vmul.f32 1.0, %v751
  %v753 = vrcp.pop %v421
  %v754 = vmul.f32 %v421, %v753
  %v755 = vsub.f32 1.0, %v754
  %v756 = vmul.f32 %v753, %v755
  %v757 = vadd.f32 %v753, %v756
  %vm758 = vweird.f32 %v421
  %vm759 = vweird.f32 %v753
  %vm760 = vmor %vm758, %vm759
  %v761 = vsel %vm760, %v753, %v757
  %v762 = vand.u32 2147483647, %v421
  %vm763 = vcmp.eq.f32.partialorder %v762, 8.507059e+37
  %v764 = vand.u32 %v421, 2147483648
  %v765 = vor.u32 1.1754944e-38, %v764
  %v766 = vsel %vm763, %v765, %v761
  %v767 = vmul.f32 1.0, %v766
  %v768 = vrcp.pop %v422
  %v769 = vmul.f32 %v422, %v768
  %v770 = vsub.f32 1.0, %v769
  %v771 = vmul.f32 %v768, %v770
  %v772 = vadd.f32 %v768, %v771
  %vm773 = vweird.f32 %v422
  %vm774 = vweird.f32 %v768
  %vm775 = vmor %vm773, %vm774
  %v776 = vsel %vm775, %v768, %v772
  %v777 = vand.u32 2147483647, %v422
  %vm778 = vcmp.eq.f32.partialorder %v777, 8.507059e+37
  %v779 = vand.u32 %v422, 2147483648
  %v780 = vor.u32 1.1754944e-38, %v779
  %v781 = vsel %vm778, %v780, %v776
  %v782 = vmul.f32 1.0, %v781
  %v783 = vrcp.pop %v423
  %v784 = vmul.f32 %v423, %v783
  %v785 = vsub.f32 1.0, %v784
  %v786 = vmul.f32 %v783, %v785
  %v787 = vadd.f32 %v783, %v786
  %vm788 = vweird.f32 %v423
  %vm789 = vweird.f32 %v783
  %vm790 = vmor %vm788, %vm789
  %v791 = vsel %vm790, %v783, %v787
  %v792 = vand.u32 2147483647, %v423
  %vm793 = vcmp.eq.f32.partialorder %v792, 8.507059e+37
  %v794 = vand.u32 %v423, 2147483648
  %v795 = vor.u32 1.1754944e-38, %v794
  %v796 = vsel %vm793, %v795, %v791
  %v797 = vmul.f32 1.0, %v796
  %v798 = vrcp.pop %v424
  %v799 = vmul.f32 %v424, %v798
  %v800 = vsub.f32 1.0, %v799
  %v801 = vmul.f32 %v798, %v800
  %v802 = vadd.f32 %v798, %v801
  %vm803 = vweird.f32 %v424
  %vm804 = vweird.f32 %v798
  %vm805 = vmor %vm803, %vm804
  %v806 = vsel %vm805, %v798, %v802
  %v807 = vand.u32 2147483647, %v424
  %vm808 = vcmp.eq.f32.partialorder %v807, 8.507059e+37
  %v809 = vand.u32 %v424, 2147483648
  %v810 = vor.u32 1.1754944e-38, %v809
  %v811 = vsel %vm808, %v810, %v806
  %v812 = vmul.f32 1.0, %v811
  %v813 = vrcp.pop %v425
  %v814 = vmul.f32 %v425, %v813
  %v815 = vsub.f32 1.0, %v814
  %v816 = vmul.f32 %v813, %v815
  %v817 = vadd.f32 %v813, %v816
  %vm818 = vweird.f32 %v425
  %vm819 = vweird.f32 %v813
  %vm820 = vmor %vm818, %vm819
  %v821 = vsel %vm820, %v813, %v817
  %v822 = vand.u32 2147483647, %v425
  %vm823 = vcmp.eq.f32.partialorder %v822, 8.507059e+37
  %v824 = vand.u32 %v425, 2147483648
  %v825 = vor.u32 1.1754944e-38, %v824
  %v826 = vsel %vm823, %v825, %v821
  %v827 = vmul.f32 1.0, %v826
  %v828 = vrcp.pop %v426
  %v829 = vmul.f32 %v426, %v828
  %v830 = vsub.f32 1.0, %v829
  %v831 = vmul.f32 %v828, %v830
  %v832 = vadd.f32 %v828, %v831
  %vm833 = vweird.f32 %v426
  %vm834 = vweird.f32 %v828
  %vm835 = vmor %vm833, %vm834
  %v836 = vsel %vm835, %v828, %v832
  %v837 = vand.u32 2147483647, %v426
  %vm838 = vcmp.eq.f32.partialorder %v837, 8.507059e+37
  %v839 = vand.u32 %v426, 2147483648
  %v840 = vor.u32 1.1754944e-38, %v839
  %v841 = vsel %vm838, %v840, %v836
  %v842 = vmul.f32 1.0, %v841
  %v843 = vrcp.pop %v427
  %v844 = vmul.f32 %v427, %v843
  %v845 = vsub.f32 1.0, %v844
  %v846 = vmul.f32 %v843, %v845
  %v847 = vadd.f32 %v843, %v846
  %vm848 = vweird.f32 %v427
  %vm849 = vweird.f32 %v843
  %vm850 = vmor %vm848, %vm849
  %v851 = vsel %vm850, %v843, %v847
  %v852 = vand.u32 2147483647, %v427
  %vm853 = vcmp.eq.f32.partialorder %v852, 8.507059e+37
  %v854 = vand.u32 %v427, 2147483648
  %v855 = vor.u32 1.1754944e-38, %v854
  %v856 = vsel %vm853, %v855, %v851
  %v857 = vmul.f32 1.0, %v856
  %v858 = vrcp.pop %v428
  %v859 = vmul.f32 %v428, %v858
  %v860 = vsub.f32 1.0, %v859
  %v861 = vmul.f32 %v858, %v860
  %v862 = vadd.f32 %v858, %v861
  %vm863 = vweird.f32 %v428
  %vm864 = vweird.f32 %v858
  %vm865 = vmor %vm863, %vm864
  %v866 = vsel %vm865, %v858, %v862
  %v867 = vand.u32 2147483647, %v428
  %vm868 = vcmp.eq.f32.partialorder %v867, 8.507059e+37
  %v869 = vand.u32 %v428, 2147483648
  %v870 = vor.u32 1.1754944e-38, %v869
  %v871 = vsel %vm868, %v870, %v866
  %v872 = vmul.f32 1.0, %v871
  %v873 = vrcp.pop %v429
  %v874 = vmul.f32 %v429, %v873
  %v875 = vsub.f32 1.0, %v874
  %v876 = vmul.f32 %v873, %v875
  %v877 = vadd.f32 %v873, %v876
  %vm878 = vweird.f32 %v429
  %vm879 = vweird.f32 %v873
  %vm880 = vmor %vm878, %vm879
  %v881 = vsel %vm880, %v873, %v877
  %v882 = vand.u32 2147483647, %v429
  %vm883 = vcmp.eq.f32.partialorder %v882, 8.507059e+37
  %v884 = vand.u32 %v429, 2147483648
  %v885 = vor.u32 1.1754944e-38, %v884
  %v886 = vsel %vm883, %v885, %v881
  %v887 = vmul.f32 1.0, %v886
  %v888 = vrcp.pop %v430
  %v889 = vmul.f32 %v430, %v888
  %v890 = vsub.f32 1.0, %v889
  %v891 = vmul.f32 %v888, %v890
  %v892 = vadd.f32 %v888, %v891
  %vm893 = vweird.f32 %v430
  %vm894 = vweird.f32 %v888
  %vm895 = vmor %vm893, %vm894
  %v896 = vsel %vm895, %v888, %v892
  %v897 = vand.u32 2147483647, %v430
  %vm898 = vcmp.eq.f32.partialorder %v897, 8.507059e+37
  %v899 = vand.u32 %v430, 2147483648
  %v900 = vor.u32 1.1754944e-38, %v899
  %v901 = vsel %vm898, %v900, %v896
  %v902 = vmul.f32 1.0, %v901
  %v903 = vrcp.pop %v431
  %v904 = vmul.f32 %v431, %v903
  %v905 = vsub.f32 1.0, %v904
  %v906 = vmul.f32 %v903, %v905
  %v907 = vadd.f32 %v903, %v906
  %vm908 = vweird.f32 %v431
  %vm909 = vweird.f32 %v903
  %vm910 = vmor %vm908, %vm909
  %v911 = vsel %vm910, %v903, %v907
  %v912 = vand.u32 2147483647, %v431
  %vm913 = vcmp.eq.f32.partialorder %v912, 8.507059e+37
  %v914 = vand.u32 %v431, 2147483648
  %v915 = vor.u32 1.1754944e-38, %v914
  %v916 = vsel %vm913, %v915, %v911
  %v917 = vmul.f32 1.0, %v916
  %v918 = vrcp.pop %v432
  %v919 = vmul.f32 %v432, %v918
  %v920 = vsub.f32 1.0, %v919
  %v921 = vmul.f32 %v918, %v920
  %v922 = vadd.f32 %v918, %v921
  %vm923 = vweird.f32 %v432
  %vm924 = vweird.f32 %v918
  %vm925 = vmor %vm923, %vm924
  %v926 = vsel %vm925, %v918, %v922
  %v927 = vand.u32 2147483647, %v432
  %vm928 = vcmp.eq.f32.partialorder %v927, 8.507059e+37
  %v929 = vand.u32 %v432, 2147483648
  %v930 = vor.u32 1.1754944e-38, %v929
  %v931 = vsel %vm928, %v930, %v926
  %v932 = vmul.f32 1.0, %v931
  %v933 = vrcp.pop %v433
  %v934 = vmul.f32 %v433, %v933
  %v935 = vsub.f32 1.0, %v934
  %v936 = vmul.f32 %v933, %v935
  %v937 = vadd.f32 %v933, %v936
  %vm938 = vweird.f32 %v433
  %vm939 = vweird.f32 %v933
  %vm940 = vmor %vm938, %vm939
  %v941 = vsel %vm940, %v933, %v937
  %v942 = vand.u32 2147483647, %v433
  %vm943 = vcmp.eq.f32.partialorder %v942, 8.507059e+37
  %v944 = vand.u32 %v433, 2147483648
  %v945 = vor.u32 1.1754944e-38, %v944
  %v946 = vsel %vm943, %v945, %v941
  %v947 = vmul.f32 1.0, %v946
  %v948 = vrcp.pop %v434
  %v949 = vmul.f32 %v434, %v948
  %v950 = vsub.f32 1.0, %v949
  %v951 = vmul.f32 %v948, %v950
  %v952 = vadd.f32 %v948, %v951
  %vm953 = vweird.f32 %v434
  %vm954 = vweird.f32 %v948
  %vm955 = vmor %vm953, %vm954
  %v956 = vsel %vm955, %v948, %v952
  %v957 = vand.u32 2147483647, %v434
  %vm958 = vcmp.eq.f32.partialorder %v957, 8.507059e+37
  %v959 = vand.u32 %v434, 2147483648
  %v960 = vor.u32 1.1754944e-38, %v959
  %v961 = vsel %vm958, %v960, %v956
  %v962 = vmul.f32 1.0, %v961
  %v963 = vrcp.pop %v435
  %v964 = vmul.f32 %v435, %v963
  %v965 = vsub.f32 1.0, %v964
  %v966 = vmul.f32 %v963, %v965
  %v967 = vadd.f32 %v963, %v966
  %vm968 = vweird.f32 %v435
  %vm969 = vweird.f32 %v963
  %vm970 = vmor %vm968, %vm969
  %v971 = vsel %vm970, %v963, %v967
  %v972 = vand.u32 2147483647, %v435
  %vm973 = vcmp.eq.f32.partialorder %v972, 8.507059e+37
  %v974 = vand.u32 %v435, 2147483648
  %v975 = vor.u32 1.1754944e-38, %v974
  %v976 = vsel %vm973, %v975, %v971
  %v977 = vmul.f32 1.0, %v976
  %v978 = vrcp.pop %v436
  %v979 = vmul.f32 %v436, %v978
  %v980 = vsub.f32 1.0, %v979
  %v981 = vmul.f32 %v978, %v980
  %v982 = vadd.f32 %v978, %v981
  %vm983 = vweird.f32 %v436
  %vm984 = vweird.f32 %v978
  %vm985 = vmor %vm983, %vm984
  %v986 = vsel %vm985, %v978, %v982
  %v987 = vand.u32 2147483647, %v436
  %vm988 = vcmp.eq.f32.partialorder %v987, 8.507059e+37
  %v989 = vand.u32 %v436, 2147483648
  %v990 = vor.u32 1.1754944e-38, %v989
  %v991 = vsel %vm988, %v990, %v986
  %v992 = vmul.f32 1.0, %v991
  %v993 = vrcp.pop %v437
  %v994 = vmul.f32 %v437, %v993
  %v995 = vsub.f32 1.0, %v994
  %v996 = vmul.f32 %v993, %v995
  %v997 = vadd.f32 %v993, %v996
  %vm998 = vweird.f32 %v437
  %vm999 = vweird.f32 %v993
  %vm1000 = vmor %vm998, %vm999
  %v1001 = vsel %vm1000, %v993, %v997
  %v1002 = vand.u32 2147483647, %v437
  %vm1003 = vcmp.eq.f32.partialorder %v1002, 8.507059e+37
  %v1004 = vand.u32 %v437, 2147483648
  %v1005 = vor.u32 1.1754944e-38, %v1004
  %v1006 = vsel %vm1003, %v1005, %v1001
  %v1007 = vmul.f32 1.0, %v1006
  %v1008 = vpack.c.bf16 %v467, %v452
  %v1009 = vpack.c.bf16 %v497, %v482
  %v1010 = vpack.c.bf16 %v527, %v512
  %v1011 = vpack.c.bf16 %v557, %v542
  %v1012 = vpack.c.bf16 %v587, %v572
  %v1013 = vpack.c.bf16 %v617, %v602
  %v1014 = vpack.c.bf16 %v647, %v632
  %v1015 = vpack.c.bf16 %v677, %v662
  %v1016 = vpack.c.bf16 %v707, %v692
  %v1017 = vpack.c.bf16 %v737, %v722
  %v1018 = vpack.c.bf16 %v767, %v752
  %v1019 = vpack.c.bf16 %v797, %v782
  %v1020 = vpack.c.bf16 %v827, %v812
  %v1021 = vpack.c.bf16 %v857, %v842
  %v1022 = vpack.c.bf16 %v887, %v872
  %v1023 = vpack.c.bf16 %v917, %v902
  %v1024 = vpack.c.bf16 %v947, %v932
  %v1025 = vpack.c.bf16 %v977, %v962
  %v1026 = vpack.c.bf16 %v1007, %v992
  %v1027 = vld [vmem:[%s3] sm:$0xf]
  %v1028 = vld [vmem:[%s3 + $0x4] sm:$0xf]
  %v1029 = vld [vmem:[%s3 + $0x8] sm:$0xf]
  %v1030 = vld [vmem:[%s3 + $0xc] sm:$0xf]
  %v1031 = vld [vmem:[%s3 + $0x10] sm:$0x3]
  %v1032 = vld [vmem:[%s4] sm:$0x1]
  %v1034 = vperm.slane %v1032, 0
  %v1041 = vunpack.c.l.b16 %v1027
  %v1042 = vunpack.c.l.b16 %v1028
  %v1043 = vunpack.c.l.b16 %v1029
  %v1044 = vunpack.c.l.b16 %v1030
  %v1045 = vunpack.c.l.b16 %v1031
  %v1046 = vpack.c.b16 %v1042, %v1041
  %v1047 = vpack.c.b16 %v1044, %v1043
  %v1048 = vpack.c.b16 %v1045, %v1045
  %vm1051 = vcmask 293888
  %v1053 = vsel %vm1051, %v1008, 0
  %v1056 = vsel %vm1051, %v1009, 0
  %v1059 = vsel %vm1051, %v1010, 0
  %v1062 = vsel %vm1051, %v1011, 0
  %v1065 = vsel %vm1051, %v1012, 0
  %v1068 = vsel %vm1051, %v1013, 0
  %v1071 = vsel %vm1051, %v1014, 0
  %v1074 = vsel %vm1051, %v1015, 0
  %v1077 = vsel %vm1051, %v1016, 0
  %v1080 = vsel %vm1051, %v1017, 0
  %v1083 = vsel %vm1051, %v1018, 0
  %v1086 = vsel %vm1051, %v1019, 0
  %v1089 = vsel %vm1051, %v1020, 0
  %v1092 = vsel %vm1051, %v1021, 0
  %v1095 = vsel %vm1051, %v1022, 0
  %v1098 = vsel %vm1051, %v1023, 0
  %v1101 = vsel %vm1051, %v1024, 0
  %v1104 = vsel %vm1051, %v1025, 0
  %v1107 = vsel %vm1051, %v1026, 0
  %vm1109 = vcmask 1041408
  %v1111 = vsel %vm1109, %v1048, 0
  %1113 = vmatpush.bf16.msra.mxu0 0
  %1114 = vmatpush.bf16.msra.mxu0 0
  %1115 = vmatpush.bf16.msra.mxu0 0
  %1116 = vmatpush.bf16.msra.mxu0 0
  %1117 = vmatpush.bf16.msra.mxu0 0
  %1118 = vmatpush.bf16.msra.mxu0 %v1111
  %1119 = vmatpush.bf16.msra.mxu0 %v1047
  %1120 = vmatpush.bf16.msra.mxu0 %v1046
  %1121 = vmatmul.bf16.gmra.mxu0 %v1053
  %v1122 = vpop.f32.mrf.mxu0
  %v1123 = vadd.f32 %v1034, %v1122
  %v1124 = vpop.f32.mrf.mxu0
  %v1125 = vadd.f32 %v1034, %v1124
  %1126 = vmatmul.bf16.gmra.mxu0 %v1056
  %v1127 = vpop.f32.mrf.mxu0
  %v1128 = vadd.f32 %v1034, %v1127
  %v1129 = vpop.f32.mrf.mxu0
  %v1130 = vadd.f32 %v1034, %v1129
  %1131 = vmatmul.bf16.gmra.mxu0 %v1059
  %v1132 = vpop.f32.mrf.mxu0
  %v1133 = vadd.f32 %v1034, %v1132
  %v1134 = vpop.f32.mrf.mxu0
  %v1135 = vadd.f32 %v1034, %v1134
  %1136 = vmatmul.bf16.gmra.mxu0 %v1062
  %v1137 = vpop.f32.mrf.mxu0
  %v1138 = vadd.f32 %v1034, %v1137
  %v1139 = vpop.f32.mrf.mxu0
  %v1140 = vadd.f32 %v1034, %v1139
  %1141 = vmatmul.bf16.gmra.mxu0 %v1065
  %v1142 = vpop.f32.mrf.mxu0
  %v1143 = vadd.f32 %v1034, %v1142
  %v1144 = vpop.f32.mrf.mxu0
  %v1145 = vadd.f32 %v1034, %v1144
  %1146 = vmatmul.bf16.gmra.mxu0 %v1068
  %v1147 = vpop.f32.mrf.mxu0
  %v1148 = vadd.f32 %v1034, %v1147
  %v1149 = vpop.f32.mrf.mxu0
  %v1150 = vadd.f32 %v1034, %v1149
  %1151 = vmatmul.bf16.gmra.mxu0 %v1071
  %v1152 = vpop.f32.mrf.mxu0
  %v1153 = vadd.f32 %v1034, %v1152
  %v1154 = vpop.f32.mrf.mxu0
  %v1155 = vadd.f32 %v1034, %v1154
  %1156 = vmatmul.bf16.gmra.mxu0 %v1074
  %v1157 = vpop.f32.mrf.mxu0
  %v1158 = vadd.f32 %v1034, %v1157
  %v1159 = vpop.f32.mrf.mxu0
  %v1160 = vadd.f32 %v1034, %v1159
  %1161 = vmatmul.bf16.gmra.mxu0 %v1077
  %v1162 = vpop.f32.mrf.mxu0
  %v1163 = vadd.f32 %v1034, %v1162
  %v1164 = vpop.f32.mrf.mxu0
  %v1165 = vadd.f32 %v1034, %v1164
  %1166 = vmatmul.bf16.gmra.mxu0 %v1080
  %v1167 = vpop.f32.mrf.mxu0
  %v1168 = vadd.f32 %v1034, %v1167
  %v1169 = vpop.f32.mrf.mxu0
  %v1170 = vadd.f32 %v1034, %v1169
  %1171 = vmatmul.bf16.gmra.mxu0 %v1083
  %v1172 = vpop.f32.mrf.mxu0
  %v1173 = vadd.f32 %v1034, %v1172
  %v1174 = vpop.f32.mrf.mxu0
  %v1175 = vadd.f32 %v1034, %v1174
  %1176 = vmatmul.bf16.gmra.mxu0 %v1086
  %v1177 = vpop.f32.mrf.mxu0
  %v1178 = vadd.f32 %v1034, %v1177
  %v1179 = vpop.f32.mrf.mxu0
  %v1180 = vadd.f32 %v1034, %v1179
  %1181 = vmatmul.bf16.gmra.mxu0 %v1089
  %v1182 = vpop.f32.mrf.mxu0
  %v1183 = vadd.f32 %v1034, %v1182
  %v1184 = vpop.f32.mrf.mxu0
  %v1185 = vadd.f32 %v1034, %v1184
  %1186 = vmatmul.bf16.gmra.mxu0 %v1092
  %v1187 = vpop.f32.mrf.mxu0
  %v1188 = vadd.f32 %v1034, %v1187
  %v1189 = vpop.f32.mrf.mxu0
  %v1190 = vadd.f32 %v1034, %v1189
  %1191 = vmatmul.bf16.gmra.mxu0 %v1095
  %v1192 = vpop.f32.mrf.mxu0
  %v1193 = vadd.f32 %v1034, %v1192
  %v1194 = vpop.f32.mrf.mxu0
  %v1195 = vadd.f32 %v1034, %v1194
  %1196 = vmatmul.bf16.gmra.mxu0 %v1098
  %v1197 = vpop.f32.mrf.mxu0
  %v1198 = vadd.f32 %v1034, %v1197
  %v1199 = vpop.f32.mrf.mxu0
  %v1200 = vadd.f32 %v1034, %v1199
  %1201 = vmatmul.bf16.gmra.mxu0 %v1101
  %v1202 = vpop.f32.mrf.mxu0
  %v1203 = vadd.f32 %v1034, %v1202
  %v1204 = vpop.f32.mrf.mxu0
  %v1205 = vadd.f32 %v1034, %v1204
  %1206 = vmatmul.bf16.gmra.mxu0 %v1104
  %v1207 = vpop.f32.mrf.mxu0
  %v1208 = vadd.f32 %v1034, %v1207
  %v1209 = vpop.f32.mrf.mxu0
  %v1210 = vadd.f32 %v1034, %v1209
  %1211 = vmatmul.bf16.gmra.mxu0 %v1107
  %v1212 = vpop.f32.mrf.mxu0
  %v1213 = vadd.f32 %v1034, %v1212
  %v1214 = vpop.f32.mrf.mxu0
  %v1215 = vadd.f32 %v1034, %v1214
  %1216 = vdwg.mxu0
  %v1217 = vxor.u32 %v1123, 2147483648
  %v1218 = vxor.u32 %v1125, 2147483648
  %v1219 = vxor.u32 %v1128, 2147483648
  %v1220 = vxor.u32 %v1130, 2147483648
  %v1221 = vxor.u32 %v1133, 2147483648
  %v1222 = vxor.u32 %v1135, 2147483648
  %v1223 = vxor.u32 %v1138, 2147483648
  %v1224 = vxor.u32 %v1140, 2147483648
  %v1225 = vxor.u32 %v1143, 2147483648
  %v1226 = vxor.u32 %v1145, 2147483648
  %v1227 = vxor.u32 %v1148, 2147483648
  %v1228 = vxor.u32 %v1150, 2147483648
  %v1229 = vxor.u32 %v1153, 2147483648
  %v1230 = vxor.u32 %v1155, 2147483648
  %v1231 = vxor.u32 %v1158, 2147483648
  %v1232 = vxor.u32 %v1160, 2147483648
  %v1233 = vxor.u32 %v1163, 2147483648
  %v1234 = vxor.u32 %v1165, 2147483648
  %v1235 = vxor.u32 %v1168, 2147483648
  %v1236 = vxor.u32 %v1170, 2147483648
  %v1237 = vxor.u32 %v1173, 2147483648
  %v1238 = vxor.u32 %v1175, 2147483648
  %v1239 = vxor.u32 %v1178, 2147483648
  %v1240 = vxor.u32 %v1180, 2147483648
  %v1241 = vxor.u32 %v1183, 2147483648
  %v1242 = vxor.u32 %v1185, 2147483648
  %v1243 = vxor.u32 %v1188, 2147483648
  %v1244 = vxor.u32 %v1190, 2147483648
  %v1245 = vxor.u32 %v1193, 2147483648
  %v1246 = vxor.u32 %v1195, 2147483648
  %v1247 = vxor.u32 %v1198, 2147483648
  %v1248 = vxor.u32 %v1200, 2147483648
  %v1249 = vxor.u32 %v1203, 2147483648
  %v1250 = vxor.u32 %v1205, 2147483648
  %v1251 = vxor.u32 %v1208, 2147483648
  %v1252 = vxor.u32 %v1210, 2147483648
  %v1253 = vxor.u32 %v1213, 2147483648
  %v1254 = vxor.u32 %v1215, 2147483648
  %v1255 = vmul.f32 %v1217, 1.442695
  %v1256 = vpow.pop %v1255
  %v1257 = vmul.f32 %v1218, 1.442695
  %v1258 = vpow.pop %v1257
  %v1259 = vmul.f32 %v1219, 1.442695
  %v1260 = vpow.pop %v1259
  %v1261 = vmul.f32 %v1220, 1.442695
  %v1262 = vpow.pop %v1261
  %v1263 = vmul.f32 %v1221, 1.442695
  %v1264 = vpow.pop %v1263
  %v1265 = vmul.f32 %v1222, 1.442695
  %v1266 = vpow.pop %v1265
  %v1267 = vmul.f32 %v1223, 1.442695
  %v1268 = vpow.pop %v1267
  %v1269 = vmul.f32 %v1224, 1.442695
  %v1270 = vpow.pop %v1269
  %v1271 = vmul.f32 %v1225, 1.442695
  %v1272 = vpow.pop %v1271
  %v1273 = vmul.f32 %v1226, 1.442695
  %v1274 = vpow.pop %v1273
  %v1275 = vmul.f32 %v1227, 1.442695
  %v1276 = vpow.pop %v1275
  %v1277 = vmul.f32 %v1228, 1.442695
  %v1278 = vpow.pop %v1277
  %v1279 = vmul.f32 %v1229, 1.442695
  %v1280 = vpow.pop %v1279
  %v1281 = vmul.f32 %v1230, 1.442695
  %v1282 = vpow.pop %v1281
  %v1283 = vmul.f32 %v1231, 1.442695
  %v1284 = vpow.pop %v1283
  %v1285 = vmul.f32 %v1232, 1.442695
  %v1286 = vpow.pop %v1285
  %v1287 = vmul.f32 %v1233, 1.442695
  %v1288 = vpow.pop %v1287
  %v1289 = vmul.f32 %v1234, 1.442695
  %v1290 = vpow.pop %v1289
  %v1291 = vmul.f32 %v1235, 1.442695
  %v1292 = vpow.pop %v1291
  %v1293 = vmul.f32 %v1236, 1.442695
  %v1294 = vpow.pop %v1293
  %v1295 = vmul.f32 %v1237, 1.442695
  %v1296 = vpow.pop %v1295
  %v1297 = vmul.f32 %v1238, 1.442695
  %v1298 = vpow.pop %v1297
  %v1299 = vmul.f32 %v1239, 1.442695
  %v1300 = vpow.pop %v1299
  %v1301 = vmul.f32 %v1240, 1.442695
  %v1302 = vpow.pop %v1301
  %v1303 = vmul.f32 %v1241, 1.442695
  %v1304 = vpow.pop %v1303
  %v1305 = vmul.f32 %v1242, 1.442695
  %v1306 = vpow.pop %v1305
  %v1307 = vmul.f32 %v1243, 1.442695
  %v1308 = vpow.pop %v1307
  %v1309 = vmul.f32 %v1244, 1.442695
  %v1310 = vpow.pop %v1309
  %v1311 = vmul.f32 %v1245, 1.442695
  %v1312 = vpow.pop %v1311
  %v1313 = vmul.f32 %v1246, 1.442695
  %v1314 = vpow.pop %v1313
  %v1315 = vmul.f32 %v1247, 1.442695
  %v1316 = vpow.pop %v1315
  %v1317 = vmul.f32 %v1248, 1.442695
  %v1318 = vpow.pop %v1317
  %v1319 = vmul.f32 %v1249, 1.442695
  %v1320 = vpow.pop %v1319
  %v1321 = vmul.f32 %v1250, 1.442695
  %v1322 = vpow.pop %v1321
  %v1323 = vmul.f32 %v1251, 1.442695
  %v1324 = vpow.pop %v1323
  %v1325 = vmul.f32 %v1252, 1.442695
  %v1326 = vpow.pop %v1325
  %v1327 = vmul.f32 %v1253, 1.442695
  %v1328 = vpow.pop %v1327
  %v1329 = vmul.f32 %v1254, 1.442695
  %v1330 = vpow.pop %v1329
  %v1331 = vadd.f32 %v1256, 1.0
  %v1332 = vadd.f32 %v1258, 1.0
  %v1333 = vadd.f32 %v1260, 1.0
  %v1334 = vadd.f32 %v1262, 1.0
  %v1335 = vadd.f32 %v1264, 1.0
  %v1336 = vadd.f32 %v1266, 1.0
  %v1337 = vadd.f32 %v1268, 1.0
  %v1338 = vadd.f32 %v1270, 1.0
  %v1339 = vadd.f32 %v1272, 1.0
  %v1340 = vadd.f32 %v1274, 1.0
  %v1341 = vadd.f32 %v1276, 1.0
  %v1342 = vadd.f32 %v1278, 1.0
  %v1343 = vadd.f32 %v1280, 1.0
  %v1344 = vadd.f32 %v1282, 1.0
  %v1345 = vadd.f32 %v1284, 1.0
  %v1346 = vadd.f32 %v1286, 1.0
  %v1347 = vadd.f32 %v1288, 1.0
  %v1348 = vadd.f32 %v1290, 1.0
  %v1349 = vadd.f32 %v1292, 1.0
  %v1350 = vadd.f32 %v1294, 1.0
  %v1351 = vadd.f32 %v1296, 1.0
  %v1352 = vadd.f32 %v1298, 1.0
  %v1353 = vadd.f32 %v1300, 1.0
  %v1354 = vadd.f32 %v1302, 1.0
  %v1355 = vadd.f32 %v1304, 1.0
  %v1356 = vadd.f32 %v1306, 1.0
  %v1357 = vadd.f32 %v1308, 1.0
  %v1358 = vadd.f32 %v1310, 1.0
  %v1359 = vadd.f32 %v1312, 1.0
  %v1360 = vadd.f32 %v1314, 1.0
  %v1361 = vadd.f32 %v1316, 1.0
  %v1362 = vadd.f32 %v1318, 1.0
  %v1363 = vadd.f32 %v1320, 1.0
  %v1364 = vadd.f32 %v1322, 1.0
  %v1365 = vadd.f32 %v1324, 1.0
  %v1366 = vadd.f32 %v1326, 1.0
  %v1367 = vadd.f32 %v1328, 1.0
  %v1368 = vadd.f32 %v1330, 1.0
  %v1369 = vrcp.pop %v1331
  %v1370 = vmul.f32 %v1331, %v1369
  %v1371 = vsub.f32 1.0, %v1370
  %v1372 = vmul.f32 %v1369, %v1371
  %v1373 = vadd.f32 %v1369, %v1372
  %vm1374 = vweird.f32 %v1331
  %vm1375 = vweird.f32 %v1369
  %vm1376 = vmor %vm1374, %vm1375
  %v1377 = vsel %vm1376, %v1369, %v1373
  %v1378 = vand.u32 2147483647, %v1331
  %vm1379 = vcmp.eq.f32.partialorder %v1378, 8.507059e+37
  %v1380 = vand.u32 %v1331, 2147483648
  %v1381 = vor.u32 1.1754944e-38, %v1380
  %v1382 = vsel %vm1379, %v1381, %v1377
  %v1383 = vmul.f32 1.0, %v1382
  %v1384 = vrcp.pop %v1332
  %v1385 = vmul.f32 %v1332, %v1384
  %v1386 = vsub.f32 1.0, %v1385
  %v1387 = vmul.f32 %v1384, %v1386
  %v1388 = vadd.f32 %v1384, %v1387
  %vm1389 = vweird.f32 %v1332
  %vm1390 = vweird.f32 %v1384
  %vm1391 = vmor %vm1389, %vm1390
  %v1392 = vsel %vm1391, %v1384, %v1388
  %v1393 = vand.u32 2147483647, %v1332
  %vm1394 = vcmp.eq.f32.partialorder %v1393, 8.507059e+37
  %v1395 = vand.u32 %v1332, 2147483648
  %v1396 = vor.u32 1.1754944e-38, %v1395
  %v1397 = vsel %vm1394, %v1396, %v1392
  %v1398 = vmul.f32 1.0, %v1397
  %v1399 = vrcp.pop %v1333
  %v1400 = vmul.f32 %v1333, %v1399
  %v1401 = vsub.f32 1.0, %v1400
  %v1402 = vmul.f32 %v1399, %v1401
  %v1403 = vadd.f32 %v1399, %v1402
  %vm1404 = vweird.f32 %v1333
  %vm1405 = vweird.f32 %v1399
  %vm1406 = vmor %vm1404, %vm1405
  %v1407 = vsel %vm1406, %v1399, %v1403
  %v1408 = vand.u32 2147483647, %v1333
  %vm1409 = vcmp.eq.f32.partialorder %v1408, 8.507059e+37
  %v1410 = vand.u32 %v1333, 2147483648
  %v1411 = vor.u32 1.1754944e-38, %v1410
  %v1412 = vsel %vm1409, %v1411, %v1407
  %v1413 = vmul.f32 1.0, %v1412
  %v1414 = vrcp.pop %v1334
  %v1415 = vmul.f32 %v1334, %v1414
  %v1416 = vsub.f32 1.0, %v1415
  %v1417 = vmul.f32 %v1414, %v1416
  %v1418 = vadd.f32 %v1414, %v1417
  %vm1419 = vweird.f32 %v1334
  %vm1420 = vweird.f32 %v1414
  %vm1421 = vmor %vm1419, %vm1420
  %v1422 = vsel %vm1421, %v1414, %v1418
  %v1423 = vand.u32 2147483647, %v1334
  %vm1424 = vcmp.eq.f32.partialorder %v1423, 8.507059e+37
  %v1425 = vand.u32 %v1334, 2147483648
  %v1426 = vor.u32 1.1754944e-38, %v1425
  %v1427 = vsel %vm1424, %v1426, %v1422
  %v1428 = vmul.f32 1.0, %v1427
  %v1429 = vrcp.pop %v1335
  %v1430 = vmul.f32 %v1335, %v1429
  %v1431 = vsub.f32 1.0, %v1430
  %v1432 = vmul.f32 %v1429, %v1431
  %v1433 = vadd.f32 %v1429, %v1432
  %vm1434 = vweird.f32 %v1335
  %vm1435 = vweird.f32 %v1429
  %vm1436 = vmor %vm1434, %vm1435
  %v1437 = vsel %vm1436, %v1429, %v1433
  %v1438 = vand.u32 2147483647, %v1335
  %vm1439 = vcmp.eq.f32.partialorder %v1438, 8.507059e+37
  %v1440 = vand.u32 %v1335, 2147483648
  %v1441 = vor.u32 1.1754944e-38, %v1440
  %v1442 = vsel %vm1439, %v1441, %v1437
  %v1443 = vmul.f32 1.0, %v1442
  %v1444 = vrcp.pop %v1336
  %v1445 = vmul.f32 %v1336, %v1444
  %v1446 = vsub.f32 1.0, %v1445
  %v1447 = vmul.f32 %v1444, %v1446
  %v1448 = vadd.f32 %v1444, %v1447
  %vm1449 = vweird.f32 %v1336
  %vm1450 = vweird.f32 %v1444
  %vm1451 = vmor %vm1449, %vm1450
  %v1452 = vsel %vm1451, %v1444, %v1448
  %v1453 = vand.u32 2147483647, %v1336
  %vm1454 = vcmp.eq.f32.partialorder %v1453, 8.507059e+37
  %v1455 = vand.u32 %v1336, 2147483648
  %v1456 = vor.u32 1.1754944e-38, %v1455
  %v1457 = vsel %vm1454, %v1456, %v1452
  %v1458 = vmul.f32 1.0, %v1457
  %v1459 = vrcp.pop %v1337
  %v1460 = vmul.f32 %v1337, %v1459
  %v1461 = vsub.f32 1.0, %v1460
  %v1462 = vmul.f32 %v1459, %v1461
  %v1463 = vadd.f32 %v1459, %v1462
  %vm1464 = vweird.f32 %v1337
  %vm1465 = vweird.f32 %v1459
  %vm1466 = vmor %vm1464, %vm1465
  %v1467 = vsel %vm1466, %v1459, %v1463
  %v1468 = vand.u32 2147483647, %v1337
  %vm1469 = vcmp.eq.f32.partialorder %v1468, 8.507059e+37
  %v1470 = vand.u32 %v1337, 2147483648
  %v1471 = vor.u32 1.1754944e-38, %v1470
  %v1472 = vsel %vm1469, %v1471, %v1467
  %v1473 = vmul.f32 1.0, %v1472
  %v1474 = vrcp.pop %v1338
  %v1475 = vmul.f32 %v1338, %v1474
  %v1476 = vsub.f32 1.0, %v1475
  %v1477 = vmul.f32 %v1474, %v1476
  %v1478 = vadd.f32 %v1474, %v1477
  %vm1479 = vweird.f32 %v1338
  %vm1480 = vweird.f32 %v1474
  %vm1481 = vmor %vm1479, %vm1480
  %v1482 = vsel %vm1481, %v1474, %v1478
  %v1483 = vand.u32 2147483647, %v1338
  %vm1484 = vcmp.eq.f32.partialorder %v1483, 8.507059e+37
  %v1485 = vand.u32 %v1338, 2147483648
  %v1486 = vor.u32 1.1754944e-38, %v1485
  %v1487 = vsel %vm1484, %v1486, %v1482
  %v1488 = vmul.f32 1.0, %v1487
  %v1489 = vrcp.pop %v1339
  %v1490 = vmul.f32 %v1339, %v1489
  %v1491 = vsub.f32 1.0, %v1490
  %v1492 = vmul.f32 %v1489, %v1491
  %v1493 = vadd.f32 %v1489, %v1492
  %vm1494 = vweird.f32 %v1339
  %vm1495 = vweird.f32 %v1489
  %vm1496 = vmor %vm1494, %vm1495
  %v1497 = vsel %vm1496, %v1489, %v1493
  %v1498 = vand.u32 2147483647, %v1339
  %vm1499 = vcmp.eq.f32.partialorder %v1498, 8.507059e+37
  %v1500 = vand.u32 %v1339, 2147483648
  %v1501 = vor.u32 1.1754944e-38, %v1500
  %v1502 = vsel %vm1499, %v1501, %v1497
  %v1503 = vmul.f32 1.0, %v1502
  %v1504 = vrcp.pop %v1340
  %v1505 = vmul.f32 %v1340, %v1504
  %v1506 = vsub.f32 1.0, %v1505
  %v1507 = vmul.f32 %v1504, %v1506
  %v1508 = vadd.f32 %v1504, %v1507
  %vm1509 = vweird.f32 %v1340
  %vm1510 = vweird.f32 %v1504
  %vm1511 = vmor %vm1509, %vm1510
  %v1512 = vsel %vm1511, %v1504, %v1508
  %v1513 = vand.u32 2147483647, %v1340
  %vm1514 = vcmp.eq.f32.partialorder %v1513, 8.507059e+37
  %v1515 = vand.u32 %v1340, 2147483648
  %v1516 = vor.u32 1.1754944e-38, %v1515
  %v1517 = vsel %vm1514, %v1516, %v1512
  %v1518 = vmul.f32 1.0, %v1517
  %v1519 = vrcp.pop %v1341
  %v1520 = vmul.f32 %v1341, %v1519
  %v1521 = vsub.f32 1.0, %v1520
  %v1522 = vmul.f32 %v1519, %v1521
  %v1523 = vadd.f32 %v1519, %v1522
  %vm1524 = vweird.f32 %v1341
  %vm1525 = vweird.f32 %v1519
  %vm1526 = vmor %vm1524, %vm1525
  %v1527 = vsel %vm1526, %v1519, %v1523
  %v1528 = vand.u32 2147483647, %v1341
  %vm1529 = vcmp.eq.f32.partialorder %v1528, 8.507059e+37
  %v1530 = vand.u32 %v1341, 2147483648
  %v1531 = vor.u32 1.1754944e-38, %v1530
  %v1532 = vsel %vm1529, %v1531, %v1527
  %v1533 = vmul.f32 1.0, %v1532
  %v1534 = vrcp.pop %v1342
  %v1535 = vmul.f32 %v1342, %v1534
  %v1536 = vsub.f32 1.0, %v1535
  %v1537 = vmul.f32 %v1534, %v1536
  %v1538 = vadd.f32 %v1534, %v1537
  %vm1539 = vweird.f32 %v1342
  %vm1540 = vweird.f32 %v1534
  %vm1541 = vmor %vm1539, %vm1540
  %v1542 = vsel %vm1541, %v1534, %v1538
  %v1543 = vand.u32 2147483647, %v1342
  %vm1544 = vcmp.eq.f32.partialorder %v1543, 8.507059e+37
  %v1545 = vand.u32 %v1342, 2147483648
  %v1546 = vor.u32 1.1754944e-38, %v1545
  %v1547 = vsel %vm1544, %v1546, %v1542
  %v1548 = vmul.f32 1.0, %v1547
  %v1549 = vrcp.pop %v1343
  %v1550 = vmul.f32 %v1343, %v1549
  %v1551 = vsub.f32 1.0, %v1550
  %v1552 = vmul.f32 %v1549, %v1551
  %v1553 = vadd.f32 %v1549, %v1552
  %vm1554 = vweird.f32 %v1343
  %vm1555 = vweird.f32 %v1549
  %vm1556 = vmor %vm1554, %vm1555
  %v1557 = vsel %vm1556, %v1549, %v1553
  %v1558 = vand.u32 2147483647, %v1343
  %vm1559 = vcmp.eq.f32.partialorder %v1558, 8.507059e+37
  %v1560 = vand.u32 %v1343, 2147483648
  %v1561 = vor.u32 1.1754944e-38, %v1560
  %v1562 = vsel %vm1559, %v1561, %v1557
  %v1563 = vmul.f32 1.0, %v1562
  %v1564 = vrcp.pop %v1344
  %v1565 = vmul.f32 %v1344, %v1564
  %v1566 = vsub.f32 1.0, %v1565
  %v1567 = vmul.f32 %v1564, %v1566
  %v1568 = vadd.f32 %v1564, %v1567
  %vm1569 = vweird.f32 %v1344
  %vm1570 = vweird.f32 %v1564
  %vm1571 = vmor %vm1569, %vm1570
  %v1572 = vsel %vm1571, %v1564, %v1568
  %v1573 = vand.u32 2147483647, %v1344
  %vm1574 = vcmp.eq.f32.partialorder %v1573, 8.507059e+37
  %v1575 = vand.u32 %v1344, 2147483648
  %v1576 = vor.u32 1.1754944e-38, %v1575
  %v1577 = vsel %vm1574, %v1576, %v1572
  %v1578 = vmul.f32 1.0, %v1577
  %v1579 = vrcp.pop %v1345
  %v1580 = vmul.f32 %v1345, %v1579
  %v1581 = vsub.f32 1.0, %v1580
  %v1582 = vmul.f32 %v1579, %v1581
  %v1583 = vadd.f32 %v1579, %v1582
  %vm1584 = vweird.f32 %v1345
  %vm1585 = vweird.f32 %v1579
  %vm1586 = vmor %vm1584, %vm1585
  %v1587 = vsel %vm1586, %v1579, %v1583
  %v1588 = vand.u32 2147483647, %v1345
  %vm1589 = vcmp.eq.f32.partialorder %v1588, 8.507059e+37
  %v1590 = vand.u32 %v1345, 2147483648
  %v1591 = vor.u32 1.1754944e-38, %v1590
  %v1592 = vsel %vm1589, %v1591, %v1587
  %v1593 = vmul.f32 1.0, %v1592
  %v1594 = vrcp.pop %v1346
  %v1595 = vmul.f32 %v1346, %v1594
  %v1596 = vsub.f32 1.0, %v1595
  %v1597 = vmul.f32 %v1594, %v1596
  %v1598 = vadd.f32 %v1594, %v1597
  %vm1599 = vweird.f32 %v1346
  %vm1600 = vweird.f32 %v1594
  %vm1601 = vmor %vm1599, %vm1600
  %v1602 = vsel %vm1601, %v1594, %v1598
  %v1603 = vand.u32 2147483647, %v1346
  %vm1604 = vcmp.eq.f32.partialorder %v1603, 8.507059e+37
  %v1605 = vand.u32 %v1346, 2147483648
  %v1606 = vor.u32 1.1754944e-38, %v1605
  %v1607 = vsel %vm1604, %v1606, %v1602
  %v1608 = vmul.f32 1.0, %v1607
  %v1609 = vrcp.pop %v1347
  %v1610 = vmul.f32 %v1347, %v1609
  %v1611 = vsub.f32 1.0, %v1610
  %v1612 = vmul.f32 %v1609, %v1611
  %v1613 = vadd.f32 %v1609, %v1612
  %vm1614 = vweird.f32 %v1347
  %vm1615 = vweird.f32 %v1609
  %vm1616 = vmor %vm1614, %vm1615
  %v1617 = vsel %vm1616, %v1609, %v1613
  %v1618 = vand.u32 2147483647, %v1347
  %vm1619 = vcmp.eq.f32.partialorder %v1618, 8.507059e+37
  %v1620 = vand.u32 %v1347, 2147483648
  %v1621 = vor.u32 1.1754944e-38, %v1620
  %v1622 = vsel %vm1619, %v1621, %v1617
  %v1623 = vmul.f32 1.0, %v1622
  %v1624 = vrcp.pop %v1348
  %v1625 = vmul.f32 %v1348, %v1624
  %v1626 = vsub.f32 1.0, %v1625
  %v1627 = vmul.f32 %v1624, %v1626
  %v1628 = vadd.f32 %v1624, %v1627
  %vm1629 = vweird.f32 %v1348
  %vm1630 = vweird.f32 %v1624
  %vm1631 = vmor %vm1629, %vm1630
  %v1632 = vsel %vm1631, %v1624, %v1628
  %v1633 = vand.u32 2147483647, %v1348
  %vm1634 = vcmp.eq.f32.partialorder %v1633, 8.507059e+37
  %v1635 = vand.u32 %v1348, 2147483648
  %v1636 = vor.u32 1.1754944e-38, %v1635
  %v1637 = vsel %vm1634, %v1636, %v1632
  %v1638 = vmul.f32 1.0, %v1637
  %v1639 = vrcp.pop %v1349
  %v1640 = vmul.f32 %v1349, %v1639
  %v1641 = vsub.f32 1.0, %v1640
  %v1642 = vmul.f32 %v1639, %v1641
  %v1643 = vadd.f32 %v1639, %v1642
  %vm1644 = vweird.f32 %v1349
  %vm1645 = vweird.f32 %v1639
  %vm1646 = vmor %vm1644, %vm1645
  %v1647 = vsel %vm1646, %v1639, %v1643
  %v1648 = vand.u32 2147483647, %v1349
  %vm1649 = vcmp.eq.f32.partialorder %v1648, 8.507059e+37
  %v1650 = vand.u32 %v1349, 2147483648
  %v1651 = vor.u32 1.1754944e-38, %v1650
  %v1652 = vsel %vm1649, %v1651, %v1647
  %v1653 = vmul.f32 1.0, %v1652
  %v1654 = vrcp.pop %v1350
  %v1655 = vmul.f32 %v1350, %v1654
  %v1656 = vsub.f32 1.0, %v1655
  %v1657 = vmul.f32 %v1654, %v1656
  %v1658 = vadd.f32 %v1654, %v1657
  %vm1659 = vweird.f32 %v1350
  %vm1660 = vweird.f32 %v1654
  %vm1661 = vmor %vm1659, %vm1660
  %v1662 = vsel %vm1661, %v1654, %v1658
  %v1663 = vand.u32 2147483647, %v1350
  %vm1664 = vcmp.eq.f32.partialorder %v1663, 8.507059e+37
  %v1665 = vand.u32 %v1350, 2147483648
  %v1666 = vor.u32 1.1754944e-38, %v1665
  %v1667 = vsel %vm1664, %v1666, %v1662
  %v1668 = vmul.f32 1.0, %v1667
  %v1669 = vrcp.pop %v1351
  %v1670 = vmul.f32 %v1351, %v1669
  %v1671 = vsub.f32 1.0, %v1670
  %v1672 = vmul.f32 %v1669, %v1671
  %v1673 = vadd.f32 %v1669, %v1672
  %vm1674 = vweird.f32 %v1351
  %vm1675 = vweird.f32 %v1669
  %vm1676 = vmor %vm1674, %vm1675
  %v1677 = vsel %vm1676, %v1669, %v1673
  %v1678 = vand.u32 2147483647, %v1351
  %vm1679 = vcmp.eq.f32.partialorder %v1678, 8.507059e+37
  %v1680 = vand.u32 %v1351, 2147483648
  %v1681 = vor.u32 1.1754944e-38, %v1680
  %v1682 = vsel %vm1679, %v1681, %v1677
  %v1683 = vmul.f32 1.0, %v1682
  %v1684 = vrcp.pop %v1352
  %v1685 = vmul.f32 %v1352, %v1684
  %v1686 = vsub.f32 1.0, %v1685
  %v1687 = vmul.f32 %v1684, %v1686
  %v1688 = vadd.f32 %v1684, %v1687
  %vm1689 = vweird.f32 %v1352
  %vm1690 = vweird.f32 %v1684
  %vm1691 = vmor %vm1689, %vm1690
  %v1692 = vsel %vm1691, %v1684, %v1688
  %v1693 = vand.u32 2147483647, %v1352
  %vm1694 = vcmp.eq.f32.partialorder %v1693, 8.507059e+37
  %v1695 = vand.u32 %v1352, 2147483648
  %v1696 = vor.u32 1.1754944e-38, %v1695
  %v1697 = vsel %vm1694, %v1696, %v1692
  %v1698 = vmul.f32 1.0, %v1697
  %v1699 = vrcp.pop %v1353
  %v1700 = vmul.f32 %v1353, %v1699
  %v1701 = vsub.f32 1.0, %v1700
  %v1702 = vmul.f32 %v1699, %v1701
  %v1703 = vadd.f32 %v1699, %v1702
  %vm1704 = vweird.f32 %v1353
  %vm1705 = vweird.f32 %v1699
  %vm1706 = vmor %vm1704, %vm1705
  %v1707 = vsel %vm1706, %v1699, %v1703
  %v1708 = vand.u32 2147483647, %v1353
  %vm1709 = vcmp.eq.f32.partialorder %v1708, 8.507059e+37
  %v1710 = vand.u32 %v1353, 2147483648
  %v1711 = vor.u32 1.1754944e-38, %v1710
  %v1712 = vsel %vm1709, %v1711, %v1707
  %v1713 = vmul.f32 1.0, %v1712
  %v1714 = vrcp.pop %v1354
  %v1715 = vmul.f32 %v1354, %v1714
  %v1716 = vsub.f32 1.0, %v1715
  %v1717 = vmul.f32 %v1714, %v1716
  %v1718 = vadd.f32 %v1714, %v1717
  %vm1719 = vweird.f32 %v1354
  %vm1720 = vweird.f32 %v1714
  %vm1721 = vmor %vm1719, %vm1720
  %v1722 = vsel %vm1721, %v1714, %v1718
  %v1723 = vand.u32 2147483647, %v1354
  %vm1724 = vcmp.eq.f32.partialorder %v1723, 8.507059e+37
  %v1725 = vand.u32 %v1354, 2147483648
  %v1726 = vor.u32 1.1754944e-38, %v1725
  %v1727 = vsel %vm1724, %v1726, %v1722
  %v1728 = vmul.f32 1.0, %v1727
  %v1729 = vrcp.pop %v1355
  %v1730 = vmul.f32 %v1355, %v1729
  %v1731 = vsub.f32 1.0, %v1730
  %v1732 = vmul.f32 %v1729, %v1731
  %v1733 = vadd.f32 %v1729, %v1732
  %vm1734 = vweird.f32 %v1355
  %vm1735 = vweird.f32 %v1729
  %vm1736 = vmor %vm1734, %vm1735
  %v1737 = vsel %vm1736, %v1729, %v1733
  %v1738 = vand.u32 2147483647, %v1355
  %vm1739 = vcmp.eq.f32.partialorder %v1738, 8.507059e+37
  %v1740 = vand.u32 %v1355, 2147483648
  %v1741 = vor.u32 1.1754944e-38, %v1740
  %v1742 = vsel %vm1739, %v1741, %v1737
  %v1743 = vmul.f32 1.0, %v1742
  %v1744 = vrcp.pop %v1356
  %v1745 = vmul.f32 %v1356, %v1744
  %v1746 = vsub.f32 1.0, %v1745
  %v1747 = vmul.f32 %v1744, %v1746
  %v1748 = vadd.f32 %v1744, %v1747
  %vm1749 = vweird.f32 %v1356
  %vm1750 = vweird.f32 %v1744
  %vm1751 = vmor %vm1749, %vm1750
  %v1752 = vsel %vm1751, %v1744, %v1748
  %v1753 = vand.u32 2147483647, %v1356
  %vm1754 = vcmp.eq.f32.partialorder %v1753, 8.507059e+37
  %v1755 = vand.u32 %v1356, 2147483648
  %v1756 = vor.u32 1.1754944e-38, %v1755
  %v1757 = vsel %vm1754, %v1756, %v1752
  %v1758 = vmul.f32 1.0, %v1757
  %v1759 = vrcp.pop %v1357
  %v1760 = vmul.f32 %v1357, %v1759
  %v1761 = vsub.f32 1.0, %v1760
  %v1762 = vmul.f32 %v1759, %v1761
  %v1763 = vadd.f32 %v1759, %v1762
  %vm1764 = vweird.f32 %v1357
  %vm1765 = vweird.f32 %v1759
  %vm1766 = vmor %vm1764, %vm1765
  %v1767 = vsel %vm1766, %v1759, %v1763
  %v1768 = vand.u32 2147483647, %v1357
  %vm1769 = vcmp.eq.f32.partialorder %v1768, 8.507059e+37
  %v1770 = vand.u32 %v1357, 2147483648
  %v1771 = vor.u32 1.1754944e-38, %v1770
  %v1772 = vsel %vm1769, %v1771, %v1767
  %v1773 = vmul.f32 1.0, %v1772
  %v1774 = vrcp.pop %v1358
  %v1775 = vmul.f32 %v1358, %v1774
  %v1776 = vsub.f32 1.0, %v1775
  %v1777 = vmul.f32 %v1774, %v1776
  %v1778 = vadd.f32 %v1774, %v1777
  %vm1779 = vweird.f32 %v1358
  %vm1780 = vweird.f32 %v1774
  %vm1781 = vmor %vm1779, %vm1780
  %v1782 = vsel %vm1781, %v1774, %v1778
  %v1783 = vand.u32 2147483647, %v1358
  %vm1784 = vcmp.eq.f32.partialorder %v1783, 8.507059e+37
  %v1785 = vand.u32 %v1358, 2147483648
  %v1786 = vor.u32 1.1754944e-38, %v1785
  %v1787 = vsel %vm1784, %v1786, %v1782
  %v1788 = vmul.f32 1.0, %v1787
  %v1789 = vrcp.pop %v1359
  %v1790 = vmul.f32 %v1359, %v1789
  %v1791 = vsub.f32 1.0, %v1790
  %v1792 = vmul.f32 %v1789, %v1791
  %v1793 = vadd.f32 %v1789, %v1792
  %vm1794 = vweird.f32 %v1359
  %vm1795 = vweird.f32 %v1789
  %vm1796 = vmor %vm1794, %vm1795
  %v1797 = vsel %vm1796, %v1789, %v1793
  %v1798 = vand.u32 2147483647, %v1359
  %vm1799 = vcmp.eq.f32.partialorder %v1798, 8.507059e+37
  %v1800 = vand.u32 %v1359, 2147483648
  %v1801 = vor.u32 1.1754944e-38, %v1800
  %v1802 = vsel %vm1799, %v1801, %v1797
  %v1803 = vmul.f32 1.0, %v1802
  %v1804 = vrcp.pop %v1360
  %v1805 = vmul.f32 %v1360, %v1804
  %v1806 = vsub.f32 1.0, %v1805
  %v1807 = vmul.f32 %v1804, %v1806
  %v1808 = vadd.f32 %v1804, %v1807
  %vm1809 = vweird.f32 %v1360
  %vm1810 = vweird.f32 %v1804
  %vm1811 = vmor %vm1809, %vm1810
  %v1812 = vsel %vm1811, %v1804, %v1808
  %v1813 = vand.u32 2147483647, %v1360
  %vm1814 = vcmp.eq.f32.partialorder %v1813, 8.507059e+37
  %v1815 = vand.u32 %v1360, 2147483648
  %v1816 = vor.u32 1.1754944e-38, %v1815
  %v1817 = vsel %vm1814, %v1816, %v1812
  %v1818 = vmul.f32 1.0, %v1817
  %v1819 = vrcp.pop %v1361
  %v1820 = vmul.f32 %v1361, %v1819
  %v1821 = vsub.f32 1.0, %v1820
  %v1822 = vmul.f32 %v1819, %v1821
  %v1823 = vadd.f32 %v1819, %v1822
  %vm1824 = vweird.f32 %v1361
  %vm1825 = vweird.f32 %v1819
  %vm1826 = vmor %vm1824, %vm1825
  %v1827 = vsel %vm1826, %v1819, %v1823
  %v1828 = vand.u32 2147483647, %v1361
  %vm1829 = vcmp.eq.f32.partialorder %v1828, 8.507059e+37
  %v1830 = vand.u32 %v1361, 2147483648
  %v1831 = vor.u32 1.1754944e-38, %v1830
  %v1832 = vsel %vm1829, %v1831, %v1827
  %v1833 = vmul.f32 1.0, %v1832
  %v1834 = vrcp.pop %v1362
  %v1835 = vmul.f32 %v1362, %v1834
  %v1836 = vsub.f32 1.0, %v1835
  %v1837 = vmul.f32 %v1834, %v1836
  %v1838 = vadd.f32 %v1834, %v1837
  %vm1839 = vweird.f32 %v1362
  %vm1840 = vweird.f32 %v1834
  %vm1841 = vmor %vm1839, %vm1840
  %v1842 = vsel %vm1841, %v1834, %v1838
  %v1843 = vand.u32 2147483647, %v1362
  %vm1844 = vcmp.eq.f32.partialorder %v1843, 8.507059e+37
  %v1845 = vand.u32 %v1362, 2147483648
  %v1846 = vor.u32 1.1754944e-38, %v1845
  %v1847 = vsel %vm1844, %v1846, %v1842
  %v1848 = vmul.f32 1.0, %v1847
  %v1849 = vrcp.pop %v1363
  %v1850 = vmul.f32 %v1363, %v1849
  %v1851 = vsub.f32 1.0, %v1850
  %v1852 = vmul.f32 %v1849, %v1851
  %v1853 = vadd.f32 %v1849, %v1852
  %vm1854 = vweird.f32 %v1363
  %vm1855 = vweird.f32 %v1849
  %vm1856 = vmor %vm1854, %vm1855
  %v1857 = vsel %vm1856, %v1849, %v1853
  %v1858 = vand.u32 2147483647, %v1363
  %vm1859 = vcmp.eq.f32.partialorder %v1858, 8.507059e+37
  %v1860 = vand.u32 %v1363, 2147483648
  %v1861 = vor.u32 1.1754944e-38, %v1860
  %v1862 = vsel %vm1859, %v1861, %v1857
  %v1863 = vmul.f32 1.0, %v1862
  %v1864 = vrcp.pop %v1364
  %v1865 = vmul.f32 %v1364, %v1864
  %v1866 = vsub.f32 1.0, %v1865
  %v1867 = vmul.f32 %v1864, %v1866
  %v1868 = vadd.f32 %v1864, %v1867
  %vm1869 = vweird.f32 %v1364
  %vm1870 = vweird.f32 %v1864
  %vm1871 = vmor %vm1869, %vm1870
  %v1872 = vsel %vm1871, %v1864, %v1868
  %v1873 = vand.u32 2147483647, %v1364
  %vm1874 = vcmp.eq.f32.partialorder %v1873, 8.507059e+37
  %v1875 = vand.u32 %v1364, 2147483648
  %v1876 = vor.u32 1.1754944e-38, %v1875
  %v1877 = vsel %vm1874, %v1876, %v1872
  %v1878 = vmul.f32 1.0, %v1877
  %v1879 = vrcp.pop %v1365
  %v1880 = vmul.f32 %v1365, %v1879
  %v1881 = vsub.f32 1.0, %v1880
  %v1882 = vmul.f32 %v1879, %v1881
  %v1883 = vadd.f32 %v1879, %v1882
  %vm1884 = vweird.f32 %v1365
  %vm1885 = vweird.f32 %v1879
  %vm1886 = vmor %vm1884, %vm1885
  %v1887 = vsel %vm1886, %v1879, %v1883
  %v1888 = vand.u32 2147483647, %v1365
  %vm1889 = vcmp.eq.f32.partialorder %v1888, 8.507059e+37
  %v1890 = vand.u32 %v1365, 2147483648
  %v1891 = vor.u32 1.1754944e-38, %v1890
  %v1892 = vsel %vm1889, %v1891, %v1887
  %v1893 = vmul.f32 1.0, %v1892
  %v1894 = vrcp.pop %v1366
  %v1895 = vmul.f32 %v1366, %v1894
  %v1896 = vsub.f32 1.0, %v1895
  %v1897 = vmul.f32 %v1894, %v1896
  %v1898 = vadd.f32 %v1894, %v1897
  %vm1899 = vweird.f32 %v1366
  %vm1900 = vweird.f32 %v1894
  %vm1901 = vmor %vm1899, %vm1900
  %v1902 = vsel %vm1901, %v1894, %v1898
  %v1903 = vand.u32 2147483647, %v1366
  %vm1904 = vcmp.eq.f32.partialorder %v1903, 8.507059e+37
  %v1905 = vand.u32 %v1366, 2147483648
  %v1906 = vor.u32 1.1754944e-38, %v1905
  %v1907 = vsel %vm1904, %v1906, %v1902
  %v1908 = vmul.f32 1.0, %v1907
  %v1909 = vrcp.pop %v1367
  %v1910 = vmul.f32 %v1367, %v1909
  %v1911 = vsub.f32 1.0, %v1910
  %v1912 = vmul.f32 %v1909, %v1911
  %v1913 = vadd.f32 %v1909, %v1912
  %vm1914 = vweird.f32 %v1367
  %vm1915 = vweird.f32 %v1909
  %vm1916 = vmor %vm1914, %vm1915
  %v1917 = vsel %vm1916, %v1909, %v1913
  %v1918 = vand.u32 2147483647, %v1367
  %vm1919 = vcmp.eq.f32.partialorder %v1918, 8.507059e+37
  %v1920 = vand.u32 %v1367, 2147483648
  %v1921 = vor.u32 1.1754944e-38, %v1920
  %v1922 = vsel %vm1919, %v1921, %v1917
  %v1923 = vmul.f32 1.0, %v1922
  %v1924 = vrcp.pop %v1368
  %v1925 = vmul.f32 %v1368, %v1924
  %v1926 = vsub.f32 1.0, %v1925
  %v1927 = vmul.f32 %v1924, %v1926
  %v1928 = vadd.f32 %v1924, %v1927
  %vm1929 = vweird.f32 %v1368
  %vm1930 = vweird.f32 %v1924
  %vm1931 = vmor %vm1929, %vm1930
  %v1932 = vsel %vm1931, %v1924, %v1928
  %v1933 = vand.u32 2147483647, %v1368
  %vm1934 = vcmp.eq.f32.partialorder %v1933, 8.507059e+37
  %v1935 = vand.u32 %v1368, 2147483648
  %v1936 = vor.u32 1.1754944e-38, %v1935
  %v1937 = vsel %vm1934, %v1936, %v1932
  %v1938 = vmul.f32 1.0, %v1937
  %v1939 = vpack.c.bf16 %v1398, %v1383
  %v1940 = vpack.c.bf16 %v1428, %v1413
  %v1941 = vpack.c.bf16 %v1458, %v1443
  %v1942 = vpack.c.bf16 %v1488, %v1473
  %v1943 = vpack.c.bf16 %v1518, %v1503
  %v1944 = vpack.c.bf16 %v1548, %v1533
  %v1945 = vpack.c.bf16 %v1578, %v1563
  %v1946 = vpack.c.bf16 %v1608, %v1593
  %v1947 = vpack.c.bf16 %v1638, %v1623
  %v1948 = vpack.c.bf16 %v1668, %v1653
  %v1949 = vpack.c.bf16 %v1698, %v1683
  %v1950 = vpack.c.bf16 %v1728, %v1713
  %v1951 = vpack.c.bf16 %v1758, %v1743
  %v1952 = vpack.c.bf16 %v1788, %v1773
  %v1953 = vpack.c.bf16 %v1818, %v1803
  %v1954 = vpack.c.bf16 %v1848, %v1833
  %v1955 = vpack.c.bf16 %v1878, %v1863
  %v1956 = vpack.c.bf16 %v1908, %v1893
  %v1957 = vpack.c.bf16 %v1938, %v1923
  %v1958 = vld [vmem:[%s5] sm:$0xf]
  %v1959 = vld [vmem:[%s5 + $0x4] sm:$0xf]
  %v1960 = vld [vmem:[%s5 + $0x8] sm:$0xf]
  %v1961 = vld [vmem:[%s6] sm:$0x1]
  %v1963 = vperm.slane %v1961, 0
  %v1968 = vunpack.c.l.b16 %v1958
  %v1969 = vunpack.c.l.b16 %v1959
  %v1970 = vunpack.c.l.b16 %v1960
  %v1971 = vpack.c.b16 %v1969, %v1968
  %v1972 = vpack.c.b16 %v1970, %v1970
  %vm1974 = vcmask 195584
  %v1976 = vsel %vm1974, %v1939, 0
  %v1979 = vsel %vm1974, %v1940, 0
  %v1982 = vsel %vm1974, %v1941, 0
  %v1985 = vsel %vm1974, %v1942, 0
  %v1988 = vsel %vm1974, %v1943, 0
  %v1991 = vsel %vm1974, %v1944, 0
  %v1994 = vsel %vm1974, %v1945, 0
  %v1997 = vsel %vm1974, %v1946, 0
  %v2000 = vsel %vm1974, %v1947, 0
  %v2003 = vsel %vm1974, %v1948, 0
  %v2006 = vsel %vm1974, %v1949, 0
  %v2009 = vsel %vm1974, %v1950, 0
  %v2012 = vsel %vm1974, %v1951, 0
  %v2015 = vsel %vm1974, %v1952, 0
  %v2018 = vsel %vm1974, %v1953, 0
  %v2021 = vsel %vm1974, %v1954, 0
  %v2024 = vsel %vm1974, %v1955, 0
  %v2027 = vsel %vm1974, %v1956, 0
  %v2030 = vsel %vm1974, %v1957, 0
  %vm2032 = vcmask 1043456
  %v2034 = vsel %vm2032, %v1972, 0
  %2036 = vmatpush.bf16.msra.mxu0 0
  %2037 = vmatpush.bf16.msra.mxu0 0
  %2038 = vmatpush.bf16.msra.mxu0 0
  %2039 = vmatpush.bf16.msra.mxu0 0
  %2040 = vmatpush.bf16.msra.mxu0 0
  %2041 = vmatpush.bf16.msra.mxu0 0
  %2042 = vmatpush.bf16.msra.mxu0 %v2034
  %2043 = vmatpush.bf16.msra.mxu0 %v1971
  %2044 = vmatmul.bf16.gmra.mxu0 %v1976
  %v2045 = vpop.f32.mrf.mxu0
  %v2046 = vadd.f32 %v1963, %v2045
  %v2047 = vpop.f32.mrf.mxu0
  %v2048 = vadd.f32 %v1963, %v2047
  %2049 = vmatmul.bf16.gmra.mxu0 %v1979
  %v2050 = vpop.f32.mrf.mxu0
  %v2051 = vadd.f32 %v1963, %v2050
  %v2052 = vpop.f32.mrf.mxu0
  %v2053 = vadd.f32 %v1963, %v2052
  %2054 = vmatmul.bf16.gmra.mxu0 %v1982
  %v2055 = vpop.f32.mrf.mxu0
  %v2056 = vadd.f32 %v1963, %v2055
  %v2057 = vpop.f32.mrf.mxu0
  %v2058 = vadd.f32 %v1963, %v2057
  %2059 = vmatmul.bf16.gmra.mxu0 %v1985
  %v2060 = vpop.f32.mrf.mxu0
  %v2061 = vadd.f32 %v1963, %v2060
  %v2062 = vpop.f32.mrf.mxu0
  %v2063 = vadd.f32 %v1963, %v2062
  %2064 = vmatmul.bf16.gmra.mxu0 %v1988
  %v2065 = vpop.f32.mrf.mxu0
  %v2066 = vadd.f32 %v1963, %v2065
  %v2067 = vpop.f32.mrf.mxu0
  %v2068 = vadd.f32 %v1963, %v2067
  %2069 = vmatmul.bf16.gmra.mxu0 %v1991
  %v2070 = vpop.f32.mrf.mxu0
  %v2071 = vadd.f32 %v1963, %v2070
  %v2072 = vpop.f32.mrf.mxu0
  %v2073 = vadd.f32 %v1963, %v2072
  %2074 = vmatmul.bf16.gmra.mxu0 %v1994
  %v2075 = vpop.f32.mrf.mxu0
  %v2076 = vadd.f32 %v1963, %v2075
  %v2077 = vpop.f32.mrf.mxu0
  %v2078 = vadd.f32 %v1963, %v2077
  %2079 = vmatmul.bf16.gmra.mxu0 %v1997
  %v2080 = vpop.f32.mrf.mxu0
  %v2081 = vadd.f32 %v1963, %v2080
  %v2082 = vpop.f32.mrf.mxu0
  %v2083 = vadd.f32 %v1963, %v2082
  %2084 = vmatmul.bf16.gmra.mxu0 %v2000
  %v2085 = vpop.f32.mrf.mxu0
  %v2086 = vadd.f32 %v1963, %v2085
  %v2087 = vpop.f32.mrf.mxu0
  %v2088 = vadd.f32 %v1963, %v2087
  %2089 = vmatmul.bf16.gmra.mxu0 %v2003
  %v2090 = vpop.f32.mrf.mxu0
  %v2091 = vadd.f32 %v1963, %v2090
  %v2092 = vpop.f32.mrf.mxu0
  %v2093 = vadd.f32 %v1963, %v2092
  %2094 = vmatmul.bf16.gmra.mxu0 %v2006
  %v2095 = vpop.f32.mrf.mxu0
  %v2096 = vadd.f32 %v1963, %v2095
  %v2097 = vpop.f32.mrf.mxu0
  %v2098 = vadd.f32 %v1963, %v2097
  %2099 = vmatmul.bf16.gmra.mxu0 %v2009
  %v2100 = vpop.f32.mrf.mxu0
  %v2101 = vadd.f32 %v1963, %v2100
  %v2102 = vpop.f32.mrf.mxu0
  %v2103 = vadd.f32 %v1963, %v2102
  %2104 = vmatmul.bf16.gmra.mxu0 %v2012
  %v2105 = vpop.f32.mrf.mxu0
  %v2106 = vadd.f32 %v1963, %v2105
  %v2107 = vpop.f32.mrf.mxu0
  %v2108 = vadd.f32 %v1963, %v2107
  %2109 = vmatmul.bf16.gmra.mxu0 %v2015
  %v2110 = vpop.f32.mrf.mxu0
  %v2111 = vadd.f32 %v1963, %v2110
  %v2112 = vpop.f32.mrf.mxu0
  %v2113 = vadd.f32 %v1963, %v2112
  %2114 = vmatmul.bf16.gmra.mxu0 %v2018
  %v2115 = vpop.f32.mrf.mxu0
  %v2116 = vadd.f32 %v1963, %v2115
  %v2117 = vpop.f32.mrf.mxu0
  %v2118 = vadd.f32 %v1963, %v2117
  %2119 = vmatmul.bf16.gmra.mxu0 %v2021
  %v2120 = vpop.f32.mrf.mxu0
  %v2121 = vadd.f32 %v1963, %v2120
  %v2122 = vpop.f32.mrf.mxu0
  %v2123 = vadd.f32 %v1963, %v2122
  %2124 = vmatmul.bf16.gmra.mxu0 %v2024
  %v2125 = vpop.f32.mrf.mxu0
  %v2126 = vadd.f32 %v1963, %v2125
  %v2127 = vpop.f32.mrf.mxu0
  %v2128 = vadd.f32 %v1963, %v2127
  %2129 = vmatmul.bf16.gmra.mxu0 %v2027
  %v2130 = vpop.f32.mrf.mxu0
  %v2131 = vadd.f32 %v1963, %v2130
  %v2132 = vpop.f32.mrf.mxu0
  %v2133 = vadd.f32 %v1963, %v2132
  %2134 = vmatmul.bf16.gmra.mxu0 %v2030
  %v2135 = vpop.f32.mrf.mxu0
  %v2136 = vadd.f32 %v1963, %v2135
  %v2137 = vpop.f32.mrf.mxu0
  %v2138 = vadd.f32 %v1963, %v2137
  %2139 = vdwg.mxu0
  %v2140 = vxor.u32 %v2046, 2147483648
  %v2141 = vxor.u32 %v2048, 2147483648
  %v2142 = vxor.u32 %v2051, 2147483648
  %v2143 = vxor.u32 %v2053, 2147483648
  %v2144 = vxor.u32 %v2056, 2147483648
  %v2145 = vxor.u32 %v2058, 2147483648
  %v2146 = vxor.u32 %v2061, 2147483648
  %v2147 = vxor.u32 %v2063, 2147483648
  %v2148 = vxor.u32 %v2066, 2147483648
  %v2149 = vxor.u32 %v2068, 2147483648
  %v2150 = vxor.u32 %v2071, 2147483648
  %v2151 = vxor.u32 %v2073, 2147483648
  %v2152 = vxor.u32 %v2076, 2147483648
  %v2153 = vxor.u32 %v2078, 2147483648
  %v2154 = vxor.u32 %v2081, 2147483648
  %v2155 = vxor.u32 %v2083, 2147483648
  %v2156 = vxor.u32 %v2086, 2147483648
  %v2157 = vxor.u32 %v2088, 2147483648
  %v2158 = vxor.u32 %v2091, 2147483648
  %v2159 = vxor.u32 %v2093, 2147483648
  %v2160 = vxor.u32 %v2096, 2147483648
  %v2161 = vxor.u32 %v2098, 2147483648
  %v2162 = vxor.u32 %v2101, 2147483648
  %v2163 = vxor.u32 %v2103, 2147483648
  %v2164 = vxor.u32 %v2106, 2147483648
  %v2165 = vxor.u32 %v2108, 2147483648
  %v2166 = vxor.u32 %v2111, 2147483648
  %v2167 = vxor.u32 %v2113, 2147483648
  %v2168 = vxor.u32 %v2116, 2147483648
  %v2169 = vxor.u32 %v2118, 2147483648
  %v2170 = vxor.u32 %v2121, 2147483648
  %v2171 = vxor.u32 %v2123, 2147483648
  %v2172 = vxor.u32 %v2126, 2147483648
  %v2173 = vxor.u32 %v2128, 2147483648
  %v2174 = vxor.u32 %v2131, 2147483648
  %v2175 = vxor.u32 %v2133, 2147483648
  %v2176 = vxor.u32 %v2136, 2147483648
  %v2177 = vxor.u32 %v2138, 2147483648
  %v2178 = vmul.f32 %v2140, 1.442695
  %v2179 = vpow.pop %v2178
  %v2180 = vmul.f32 %v2141, 1.442695
  %v2181 = vpow.pop %v2180
  %v2182 = vmul.f32 %v2142, 1.442695
  %v2183 = vpow.pop %v2182
  %v2184 = vmul.f32 %v2143, 1.442695
  %v2185 = vpow.pop %v2184
  %v2186 = vmul.f32 %v2144, 1.442695
  %v2187 = vpow.pop %v2186
  %v2188 = vmul.f32 %v2145, 1.442695
  %v2189 = vpow.pop %v2188
  %v2190 = vmul.f32 %v2146, 1.442695
  %v2191 = vpow.pop %v2190
  %v2192 = vmul.f32 %v2147, 1.442695
  %v2193 = vpow.pop %v2192
  %v2194 = vmul.f32 %v2148, 1.442695
  %v2195 = vpow.pop %v2194
  %v2196 = vmul.f32 %v2149, 1.442695
  %v2197 = vpow.pop %v2196
  %v2198 = vmul.f32 %v2150, 1.442695
  %v2199 = vpow.pop %v2198
  %v2200 = vmul.f32 %v2151, 1.442695
  %v2201 = vpow.pop %v2200
  %v2202 = vmul.f32 %v2152, 1.442695
  %v2203 = vpow.pop %v2202
  %v2204 = vmul.f32 %v2153, 1.442695
  %v2205 = vpow.pop %v2204
  %v2206 = vmul.f32 %v2154, 1.442695
  %v2207 = vpow.pop %v2206
  %v2208 = vmul.f32 %v2155, 1.442695
  %v2209 = vpow.pop %v2208
  %v2210 = vmul.f32 %v2156, 1.442695
  %v2211 = vpow.pop %v2210
  %v2212 = vmul.f32 %v2157, 1.442695
  %v2213 = vpow.pop %v2212
  %v2214 = vmul.f32 %v2158, 1.442695
  %v2215 = vpow.pop %v2214
  %v2216 = vmul.f32 %v2159, 1.442695
  %v2217 = vpow.pop %v2216
  %v2218 = vmul.f32 %v2160, 1.442695
  %v2219 = vpow.pop %v2218
  %v2220 = vmul.f32 %v2161, 1.442695
  %v2221 = vpow.pop %v2220
  %v2222 = vmul.f32 %v2162, 1.442695
  %v2223 = vpow.pop %v2222
  %v2224 = vmul.f32 %v2163, 1.442695
  %v2225 = vpow.pop %v2224
  %v2226 = vmul.f32 %v2164, 1.442695
  %v2227 = vpow.pop %v2226
  %v2228 = vmul.f32 %v2165, 1.442695
  %v2229 = vpow.pop %v2228
  %v2230 = vmul.f32 %v2166, 1.442695
  %v2231 = vpow.pop %v2230
  %v2232 = vmul.f32 %v2167, 1.442695
  %v2233 = vpow.pop %v2232
  %v2234 = vmul.f32 %v2168, 1.442695
  %v2235 = vpow.pop %v2234
  %v2236 = vmul.f32 %v2169, 1.442695
  %v2237 = vpow.pop %v2236
  %v2238 = vmul.f32 %v2170, 1.442695
  %v2239 = vpow.pop %v2238
  %v2240 = vmul.f32 %v2171, 1.442695
  %v2241 = vpow.pop %v2240
  %v2242 = vmul.f32 %v2172, 1.442695
  %v2243 = vpow.pop %v2242
  %v2244 = vmul.f32 %v2173, 1.442695
  %v2245 = vpow.pop %v2244
  %v2246 = vmul.f32 %v2174, 1.442695
  %v2247 = vpow.pop %v2246
  %v2248 = vmul.f32 %v2175, 1.442695
  %v2249 = vpow.pop %v2248
  %v2250 = vmul.f32 %v2176, 1.442695
  %v2251 = vpow.pop %v2250
  %v2252 = vmul.f32 %v2177, 1.442695
  %v2253 = vpow.pop %v2252
  %v2254 = vadd.f32 %v2179, 1.0
  %v2255 = vadd.f32 %v2181, 1.0
  %v2256 = vadd.f32 %v2183, 1.0
  %v2257 = vadd.f32 %v2185, 1.0
  %v2258 = vadd.f32 %v2187, 1.0
  %v2259 = vadd.f32 %v2189, 1.0
  %v2260 = vadd.f32 %v2191, 1.0
  %v2261 = vadd.f32 %v2193, 1.0
  %v2262 = vadd.f32 %v2195, 1.0
  %v2263 = vadd.f32 %v2197, 1.0
  %v2264 = vadd.f32 %v2199, 1.0
  %v2265 = vadd.f32 %v2201, 1.0
  %v2266 = vadd.f32 %v2203, 1.0
  %v2267 = vadd.f32 %v2205, 1.0
  %v2268 = vadd.f32 %v2207, 1.0
  %v2269 = vadd.f32 %v2209, 1.0
  %v2270 = vadd.f32 %v2211, 1.0
  %v2271 = vadd.f32 %v2213, 1.0
  %v2272 = vadd.f32 %v2215, 1.0
  %v2273 = vadd.f32 %v2217, 1.0
  %v2274 = vadd.f32 %v2219, 1.0
  %v2275 = vadd.f32 %v2221, 1.0
  %v2276 = vadd.f32 %v2223, 1.0
  %v2277 = vadd.f32 %v2225, 1.0
  %v2278 = vadd.f32 %v2227, 1.0
  %v2279 = vadd.f32 %v2229, 1.0
  %v2280 = vadd.f32 %v2231, 1.0
  %v2281 = vadd.f32 %v2233, 1.0
  %v2282 = vadd.f32 %v2235, 1.0
  %v2283 = vadd.f32 %v2237, 1.0
  %v2284 = vadd.f32 %v2239, 1.0
  %v2285 = vadd.f32 %v2241, 1.0
  %v2286 = vadd.f32 %v2243, 1.0
  %v2287 = vadd.f32 %v2245, 1.0
  %v2288 = vadd.f32 %v2247, 1.0
  %v2289 = vadd.f32 %v2249, 1.0
  %v2290 = vadd.f32 %v2251, 1.0
  %v2291 = vadd.f32 %v2253, 1.0
  %v2292 = vrcp.pop %v2254
  %v2293 = vmul.f32 %v2254, %v2292
  %v2294 = vsub.f32 1.0, %v2293
  %v2295 = vmul.f32 %v2292, %v2294
  %v2296 = vadd.f32 %v2292, %v2295
  %vm2297 = vweird.f32 %v2254
  %vm2298 = vweird.f32 %v2292
  %vm2299 = vmor %vm2297, %vm2298
  %v2300 = vsel %vm2299, %v2292, %v2296
  %v2301 = vand.u32 2147483647, %v2254
  %vm2302 = vcmp.eq.f32.partialorder %v2301, 8.507059e+37
  %v2303 = vand.u32 %v2254, 2147483648
  %v2304 = vor.u32 1.1754944e-38, %v2303
  %v2305 = vsel %vm2302, %v2304, %v2300
  %v2306 = vmul.f32 1.0, %v2305
  %v2307 = vrcp.pop %v2255
  %v2308 = vmul.f32 %v2255, %v2307
  %v2309 = vsub.f32 1.0, %v2308
  %v2310 = vmul.f32 %v2307, %v2309
  %v2311 = vadd.f32 %v2307, %v2310
  %vm2312 = vweird.f32 %v2255
  %vm2313 = vweird.f32 %v2307
  %vm2314 = vmor %vm2312, %vm2313
  %v2315 = vsel %vm2314, %v2307, %v2311
  %v2316 = vand.u32 2147483647, %v2255
  %vm2317 = vcmp.eq.f32.partialorder %v2316, 8.507059e+37
  %v2318 = vand.u32 %v2255, 2147483648
  %v2319 = vor.u32 1.1754944e-38, %v2318
  %v2320 = vsel %vm2317, %v2319, %v2315
  %v2321 = vmul.f32 1.0, %v2320
  %v2322 = vrcp.pop %v2256
  %v2323 = vmul.f32 %v2256, %v2322
  %v2324 = vsub.f32 1.0, %v2323
  %v2325 = vmul.f32 %v2322, %v2324
  %v2326 = vadd.f32 %v2322, %v2325
  %vm2327 = vweird.f32 %v2256
  %vm2328 = vweird.f32 %v2322
  %vm2329 = vmor %vm2327, %vm2328
  %v2330 = vsel %vm2329, %v2322, %v2326
  %v2331 = vand.u32 2147483647, %v2256
  %vm2332 = vcmp.eq.f32.partialorder %v2331, 8.507059e+37
  %v2333 = vand.u32 %v2256, 2147483648
  %v2334 = vor.u32 1.1754944e-38, %v2333
  %v2335 = vsel %vm2332, %v2334, %v2330
  %v2336 = vmul.f32 1.0, %v2335
  %v2337 = vrcp.pop %v2257
  %v2338 = vmul.f32 %v2257, %v2337
  %v2339 = vsub.f32 1.0, %v2338
  %v2340 = vmul.f32 %v2337, %v2339
  %v2341 = vadd.f32 %v2337, %v2340
  %vm2342 = vweird.f32 %v2257
  %vm2343 = vweird.f32 %v2337
  %vm2344 = vmor %vm2342, %vm2343
  %v2345 = vsel %vm2344, %v2337, %v2341
  %v2346 = vand.u32 2147483647, %v2257
  %vm2347 = vcmp.eq.f32.partialorder %v2346, 8.507059e+37
  %v2348 = vand.u32 %v2257, 2147483648
  %v2349 = vor.u32 1.1754944e-38, %v2348
  %v2350 = vsel %vm2347, %v2349, %v2345
  %v2351 = vmul.f32 1.0, %v2350
  %v2352 = vrcp.pop %v2258
  %v2353 = vmul.f32 %v2258, %v2352
  %v2354 = vsub.f32 1.0, %v2353
  %v2355 = vmul.f32 %v2352, %v2354
  %v2356 = vadd.f32 %v2352, %v2355
  %vm2357 = vweird.f32 %v2258
  %vm2358 = vweird.f32 %v2352
  %vm2359 = vmor %vm2357, %vm2358
  %v2360 = vsel %vm2359, %v2352, %v2356
  %v2361 = vand.u32 2147483647, %v2258
  %vm2362 = vcmp.eq.f32.partialorder %v2361, 8.507059e+37
  %v2363 = vand.u32 %v2258, 2147483648
  %v2364 = vor.u32 1.1754944e-38, %v2363
  %v2365 = vsel %vm2362, %v2364, %v2360
  %v2366 = vmul.f32 1.0, %v2365
  %v2367 = vrcp.pop %v2259
  %v2368 = vmul.f32 %v2259, %v2367
  %v2369 = vsub.f32 1.0, %v2368
  %v2370 = vmul.f32 %v2367, %v2369
  %v2371 = vadd.f32 %v2367, %v2370
  %vm2372 = vweird.f32 %v2259
  %vm2373 = vweird.f32 %v2367
  %vm2374 = vmor %vm2372, %vm2373
  %v2375 = vsel %vm2374, %v2367, %v2371
  %v2376 = vand.u32 2147483647, %v2259
  %vm2377 = vcmp.eq.f32.partialorder %v2376, 8.507059e+37
  %v2378 = vand.u32 %v2259, 2147483648
  %v2379 = vor.u32 1.1754944e-38, %v2378
  %v2380 = vsel %vm2377, %v2379, %v2375
  %v2381 = vmul.f32 1.0, %v2380
  %v2382 = vrcp.pop %v2260
  %v2383 = vmul.f32 %v2260, %v2382
  %v2384 = vsub.f32 1.0, %v2383
  %v2385 = vmul.f32 %v2382, %v2384
  %v2386 = vadd.f32 %v2382, %v2385
  %vm2387 = vweird.f32 %v2260
  %vm2388 = vweird.f32 %v2382
  %vm2389 = vmor %vm2387, %vm2388
  %v2390 = vsel %vm2389, %v2382, %v2386
  %v2391 = vand.u32 2147483647, %v2260
  %vm2392 = vcmp.eq.f32.partialorder %v2391, 8.507059e+37
  %v2393 = vand.u32 %v2260, 2147483648
  %v2394 = vor.u32 1.1754944e-38, %v2393
  %v2395 = vsel %vm2392, %v2394, %v2390
  %v2396 = vmul.f32 1.0, %v2395
  %v2397 = vrcp.pop %v2261
  %v2398 = vmul.f32 %v2261, %v2397
  %v2399 = vsub.f32 1.0, %v2398
  %v2400 = vmul.f32 %v2397, %v2399
  %v2401 = vadd.f32 %v2397, %v2400
  %vm2402 = vweird.f32 %v2261
  %vm2403 = vweird.f32 %v2397
  %vm2404 = vmor %vm2402, %vm2403
  %v2405 = vsel %vm2404, %v2397, %v2401
  %v2406 = vand.u32 2147483647, %v2261
  %vm2407 = vcmp.eq.f32.partialorder %v2406, 8.507059e+37
  %v2408 = vand.u32 %v2261, 2147483648
  %v2409 = vor.u32 1.1754944e-38, %v2408
  %v2410 = vsel %vm2407, %v2409, %v2405
  %v2411 = vmul.f32 1.0, %v2410
  %v2412 = vrcp.pop %v2262
  %v2413 = vmul.f32 %v2262, %v2412
  %v2414 = vsub.f32 1.0, %v2413
  %v2415 = vmul.f32 %v2412, %v2414
  %v2416 = vadd.f32 %v2412, %v2415
  %vm2417 = vweird.f32 %v2262
  %vm2418 = vweird.f32 %v2412
  %vm2419 = vmor %vm2417, %vm2418
  %v2420 = vsel %vm2419, %v2412, %v2416
  %v2421 = vand.u32 2147483647, %v2262
  %vm2422 = vcmp.eq.f32.partialorder %v2421, 8.507059e+37
  %v2423 = vand.u32 %v2262, 2147483648
  %v2424 = vor.u32 1.1754944e-38, %v2423
  %v2425 = vsel %vm2422, %v2424, %v2420
  %v2426 = vmul.f32 1.0, %v2425
  %v2427 = vrcp.pop %v2263
  %v2428 = vmul.f32 %v2263, %v2427
  %v2429 = vsub.f32 1.0, %v2428
  %v2430 = vmul.f32 %v2427, %v2429
  %v2431 = vadd.f32 %v2427, %v2430
  %vm2432 = vweird.f32 %v2263
  %vm2433 = vweird.f32 %v2427
  %vm2434 = vmor %vm2432, %vm2433
  %v2435 = vsel %vm2434, %v2427, %v2431
  %v2436 = vand.u32 2147483647, %v2263
  %vm2437 = vcmp.eq.f32.partialorder %v2436, 8.507059e+37
  %v2438 = vand.u32 %v2263, 2147483648
  %v2439 = vor.u32 1.1754944e-38, %v2438
  %v2440 = vsel %vm2437, %v2439, %v2435
  %v2441 = vmul.f32 1.0, %v2440
  %v2442 = vrcp.pop %v2264
  %v2443 = vmul.f32 %v2264, %v2442
  %v2444 = vsub.f32 1.0, %v2443
  %v2445 = vmul.f32 %v2442, %v2444
  %v2446 = vadd.f32 %v2442, %v2445
  %vm2447 = vweird.f32 %v2264
  %vm2448 = vweird.f32 %v2442
  %vm2449 = vmor %vm2447, %vm2448
  %v2450 = vsel %vm2449, %v2442, %v2446
  %v2451 = vand.u32 2147483647, %v2264
  %vm2452 = vcmp.eq.f32.partialorder %v2451, 8.507059e+37
  %v2453 = vand.u32 %v2264, 2147483648
  %v2454 = vor.u32 1.1754944e-38, %v2453
  %v2455 = vsel %vm2452, %v2454, %v2450
  %v2456 = vmul.f32 1.0, %v2455
  %v2457 = vrcp.pop %v2265
  %v2458 = vmul.f32 %v2265, %v2457
  %v2459 = vsub.f32 1.0, %v2458
  %v2460 = vmul.f32 %v2457, %v2459
  %v2461 = vadd.f32 %v2457, %v2460
  %vm2462 = vweird.f32 %v2265
  %vm2463 = vweird.f32 %v2457
  %vm2464 = vmor %vm2462, %vm2463
  %v2465 = vsel %vm2464, %v2457, %v2461
  %v2466 = vand.u32 2147483647, %v2265
  %vm2467 = vcmp.eq.f32.partialorder %v2466, 8.507059e+37
  %v2468 = vand.u32 %v2265, 2147483648
  %v2469 = vor.u32 1.1754944e-38, %v2468
  %v2470 = vsel %vm2467, %v2469, %v2465
  %v2471 = vmul.f32 1.0, %v2470
  %v2472 = vrcp.pop %v2266
  %v2473 = vmul.f32 %v2266, %v2472
  %v2474 = vsub.f32 1.0, %v2473
  %v2475 = vmul.f32 %v2472, %v2474
  %v2476 = vadd.f32 %v2472, %v2475
  %vm2477 = vweird.f32 %v2266
  %vm2478 = vweird.f32 %v2472
  %vm2479 = vmor %vm2477, %vm2478
  %v2480 = vsel %vm2479, %v2472, %v2476
  %v2481 = vand.u32 2147483647, %v2266
  %vm2482 = vcmp.eq.f32.partialorder %v2481, 8.507059e+37
  %v2483 = vand.u32 %v2266, 2147483648
  %v2484 = vor.u32 1.1754944e-38, %v2483
  %v2485 = vsel %vm2482, %v2484, %v2480
  %v2486 = vmul.f32 1.0, %v2485
  %v2487 = vrcp.pop %v2267
  %v2488 = vmul.f32 %v2267, %v2487
  %v2489 = vsub.f32 1.0, %v2488
  %v2490 = vmul.f32 %v2487, %v2489
  %v2491 = vadd.f32 %v2487, %v2490
  %vm2492 = vweird.f32 %v2267
  %vm2493 = vweird.f32 %v2487
  %vm2494 = vmor %vm2492, %vm2493
  %v2495 = vsel %vm2494, %v2487, %v2491
  %v2496 = vand.u32 2147483647, %v2267
  %vm2497 = vcmp.eq.f32.partialorder %v2496, 8.507059e+37
  %v2498 = vand.u32 %v2267, 2147483648
  %v2499 = vor.u32 1.1754944e-38, %v2498
  %v2500 = vsel %vm2497, %v2499, %v2495
  %v2501 = vmul.f32 1.0, %v2500
  %v2502 = vrcp.pop %v2268
  %v2503 = vmul.f32 %v2268, %v2502
  %v2504 = vsub.f32 1.0, %v2503
  %v2505 = vmul.f32 %v2502, %v2504
  %v2506 = vadd.f32 %v2502, %v2505
  %vm2507 = vweird.f32 %v2268
  %vm2508 = vweird.f32 %v2502
  %vm2509 = vmor %vm2507, %vm2508
  %v2510 = vsel %vm2509, %v2502, %v2506
  %v2511 = vand.u32 2147483647, %v2268
  %vm2512 = vcmp.eq.f32.partialorder %v2511, 8.507059e+37
  %v2513 = vand.u32 %v2268, 2147483648
  %v2514 = vor.u32 1.1754944e-38, %v2513
  %v2515 = vsel %vm2512, %v2514, %v2510
  %v2516 = vmul.f32 1.0, %v2515
  %v2517 = vrcp.pop %v2269
  %v2518 = vmul.f32 %v2269, %v2517
  %v2519 = vsub.f32 1.0, %v2518
  %v2520 = vmul.f32 %v2517, %v2519
  %v2521 = vadd.f32 %v2517, %v2520
  %vm2522 = vweird.f32 %v2269
  %vm2523 = vweird.f32 %v2517
  %vm2524 = vmor %vm2522, %vm2523
  %v2525 = vsel %vm2524, %v2517, %v2521
  %v2526 = vand.u32 2147483647, %v2269
  %vm2527 = vcmp.eq.f32.partialorder %v2526, 8.507059e+37
  %v2528 = vand.u32 %v2269, 2147483648
  %v2529 = vor.u32 1.1754944e-38, %v2528
  %v2530 = vsel %vm2527, %v2529, %v2525
  %v2531 = vmul.f32 1.0, %v2530
  %v2532 = vrcp.pop %v2270
  %v2533 = vmul.f32 %v2270, %v2532
  %v2534 = vsub.f32 1.0, %v2533
  %v2535 = vmul.f32 %v2532, %v2534
  %v2536 = vadd.f32 %v2532, %v2535
  %vm2537 = vweird.f32 %v2270
  %vm2538 = vweird.f32 %v2532
  %vm2539 = vmor %vm2537, %vm2538
  %v2540 = vsel %vm2539, %v2532, %v2536
  %v2541 = vand.u32 2147483647, %v2270
  %vm2542 = vcmp.eq.f32.partialorder %v2541, 8.507059e+37
  %v2543 = vand.u32 %v2270, 2147483648
  %v2544 = vor.u32 1.1754944e-38, %v2543
  %v2545 = vsel %vm2542, %v2544, %v2540
  %v2546 = vmul.f32 1.0, %v2545
  %v2547 = vrcp.pop %v2271
  %v2548 = vmul.f32 %v2271, %v2547
  %v2549 = vsub.f32 1.0, %v2548
  %v2550 = vmul.f32 %v2547, %v2549
  %v2551 = vadd.f32 %v2547, %v2550
  %vm2552 = vweird.f32 %v2271
  %vm2553 = vweird.f32 %v2547
  %vm2554 = vmor %vm2552, %vm2553
  %v2555 = vsel %vm2554, %v2547, %v2551
  %v2556 = vand.u32 2147483647, %v2271
  %vm2557 = vcmp.eq.f32.partialorder %v2556, 8.507059e+37
  %v2558 = vand.u32 %v2271, 2147483648
  %v2559 = vor.u32 1.1754944e-38, %v2558
  %v2560 = vsel %vm2557, %v2559, %v2555
  %v2561 = vmul.f32 1.0, %v2560
  %v2562 = vrcp.pop %v2272
  %v2563 = vmul.f32 %v2272, %v2562
  %v2564 = vsub.f32 1.0, %v2563
  %v2565 = vmul.f32 %v2562, %v2564
  %v2566 = vadd.f32 %v2562, %v2565
  %vm2567 = vweird.f32 %v2272
  %vm2568 = vweird.f32 %v2562
  %vm2569 = vmor %vm2567, %vm2568
  %v2570 = vsel %vm2569, %v2562, %v2566
  %v2571 = vand.u32 2147483647, %v2272
  %vm2572 = vcmp.eq.f32.partialorder %v2571, 8.507059e+37
  %v2573 = vand.u32 %v2272, 2147483648
  %v2574 = vor.u32 1.1754944e-38, %v2573
  %v2575 = vsel %vm2572, %v2574, %v2570
  %v2576 = vmul.f32 1.0, %v2575
  %v2577 = vrcp.pop %v2273
  %v2578 = vmul.f32 %v2273, %v2577
  %v2579 = vsub.f32 1.0, %v2578
  %v2580 = vmul.f32 %v2577, %v2579
  %v2581 = vadd.f32 %v2577, %v2580
  %vm2582 = vweird.f32 %v2273
  %vm2583 = vweird.f32 %v2577
  %vm2584 = vmor %vm2582, %vm2583
  %v2585 = vsel %vm2584, %v2577, %v2581
  %v2586 = vand.u32 2147483647, %v2273
  %vm2587 = vcmp.eq.f32.partialorder %v2586, 8.507059e+37
  %v2588 = vand.u32 %v2273, 2147483648
  %v2589 = vor.u32 1.1754944e-38, %v2588
  %v2590 = vsel %vm2587, %v2589, %v2585
  %v2591 = vmul.f32 1.0, %v2590
  %v2592 = vrcp.pop %v2274
  %v2593 = vmul.f32 %v2274, %v2592
  %v2594 = vsub.f32 1.0, %v2593
  %v2595 = vmul.f32 %v2592, %v2594
  %v2596 = vadd.f32 %v2592, %v2595
  %vm2597 = vweird.f32 %v2274
  %vm2598 = vweird.f32 %v2592
  %vm2599 = vmor %vm2597, %vm2598
  %v2600 = vsel %vm2599, %v2592, %v2596
  %v2601 = vand.u32 2147483647, %v2274
  %vm2602 = vcmp.eq.f32.partialorder %v2601, 8.507059e+37
  %v2603 = vand.u32 %v2274, 2147483648
  %v2604 = vor.u32 1.1754944e-38, %v2603
  %v2605 = vsel %vm2602, %v2604, %v2600
  %v2606 = vmul.f32 1.0, %v2605
  %v2607 = vrcp.pop %v2275
  %v2608 = vmul.f32 %v2275, %v2607
  %v2609 = vsub.f32 1.0, %v2608
  %v2610 = vmul.f32 %v2607, %v2609
  %v2611 = vadd.f32 %v2607, %v2610
  %vm2612 = vweird.f32 %v2275
  %vm2613 = vweird.f32 %v2607
  %vm2614 = vmor %vm2612, %vm2613
  %v2615 = vsel %vm2614, %v2607, %v2611
  %v2616 = vand.u32 2147483647, %v2275
  %vm2617 = vcmp.eq.f32.partialorder %v2616, 8.507059e+37
  %v2618 = vand.u32 %v2275, 2147483648
  %v2619 = vor.u32 1.1754944e-38, %v2618
  %v2620 = vsel %vm2617, %v2619, %v2615
  %v2621 = vmul.f32 1.0, %v2620
  %v2622 = vrcp.pop %v2276
  %v2623 = vmul.f32 %v2276, %v2622
  %v2624 = vsub.f32 1.0, %v2623
  %v2625 = vmul.f32 %v2622, %v2624
  %v2626 = vadd.f32 %v2622, %v2625
  %vm2627 = vweird.f32 %v2276
  %vm2628 = vweird.f32 %v2622
  %vm2629 = vmor %vm2627, %vm2628
  %v2630 = vsel %vm2629, %v2622, %v2626
  %v2631 = vand.u32 2147483647, %v2276
  %vm2632 = vcmp.eq.f32.partialorder %v2631, 8.507059e+37
  %v2633 = vand.u32 %v2276, 2147483648
  %v2634 = vor.u32 1.1754944e-38, %v2633
  %v2635 = vsel %vm2632, %v2634, %v2630
  %v2636 = vmul.f32 1.0, %v2635
  %v2637 = vrcp.pop %v2277
  %v2638 = vmul.f32 %v2277, %v2637
  %v2639 = vsub.f32 1.0, %v2638
  %v2640 = vmul.f32 %v2637, %v2639
  %v2641 = vadd.f32 %v2637, %v2640
  %vm2642 = vweird.f32 %v2277
  %vm2643 = vweird.f32 %v2637
  %vm2644 = vmor %vm2642, %vm2643
  %v2645 = vsel %vm2644, %v2637, %v2641
  %v2646 = vand.u32 2147483647, %v2277
  %vm2647 = vcmp.eq.f32.partialorder %v2646, 8.507059e+37
  %v2648 = vand.u32 %v2277, 2147483648
  %v2649 = vor.u32 1.1754944e-38, %v2648
  %v2650 = vsel %vm2647, %v2649, %v2645
  %v2651 = vmul.f32 1.0, %v2650
  %v2652 = vrcp.pop %v2278
  %v2653 = vmul.f32 %v2278, %v2652
  %v2654 = vsub.f32 1.0, %v2653
  %v2655 = vmul.f32 %v2652, %v2654
  %v2656 = vadd.f32 %v2652, %v2655
  %vm2657 = vweird.f32 %v2278
  %vm2658 = vweird.f32 %v2652
  %vm2659 = vmor %vm2657, %vm2658
  %v2660 = vsel %vm2659, %v2652, %v2656
  %v2661 = vand.u32 2147483647, %v2278
  %vm2662 = vcmp.eq.f32.partialorder %v2661, 8.507059e+37
  %v2663 = vand.u32 %v2278, 2147483648
  %v2664 = vor.u32 1.1754944e-38, %v2663
  %v2665 = vsel %vm2662, %v2664, %v2660
  %v2666 = vmul.f32 1.0, %v2665
  %v2667 = vrcp.pop %v2279
  %v2668 = vmul.f32 %v2279, %v2667
  %v2669 = vsub.f32 1.0, %v2668
  %v2670 = vmul.f32 %v2667, %v2669
  %v2671 = vadd.f32 %v2667, %v2670
  %vm2672 = vweird.f32 %v2279
  %vm2673 = vweird.f32 %v2667
  %vm2674 = vmor %vm2672, %vm2673
  %v2675 = vsel %vm2674, %v2667, %v2671
  %v2676 = vand.u32 2147483647, %v2279
  %vm2677 = vcmp.eq.f32.partialorder %v2676, 8.507059e+37
  %v2678 = vand.u32 %v2279, 2147483648
  %v2679 = vor.u32 1.1754944e-38, %v2678
  %v2680 = vsel %vm2677, %v2679, %v2675
  %v2681 = vmul.f32 1.0, %v2680
  %v2682 = vrcp.pop %v2280
  %v2683 = vmul.f32 %v2280, %v2682
  %v2684 = vsub.f32 1.0, %v2683
  %v2685 = vmul.f32 %v2682, %v2684
  %v2686 = vadd.f32 %v2682, %v2685
  %vm2687 = vweird.f32 %v2280
  %vm2688 = vweird.f32 %v2682
  %vm2689 = vmor %vm2687, %vm2688
  %v2690 = vsel %vm2689, %v2682, %v2686
  %v2691 = vand.u32 2147483647, %v2280
  %vm2692 = vcmp.eq.f32.partialorder %v2691, 8.507059e+37
  %v2693 = vand.u32 %v2280, 2147483648
  %v2694 = vor.u32 1.1754944e-38, %v2693
  %v2695 = vsel %vm2692, %v2694, %v2690
  %v2696 = vmul.f32 1.0, %v2695
  %v2697 = vrcp.pop %v2281
  %v2698 = vmul.f32 %v2281, %v2697
  %v2699 = vsub.f32 1.0, %v2698
  %v2700 = vmul.f32 %v2697, %v2699
  %v2701 = vadd.f32 %v2697, %v2700
  %vm2702 = vweird.f32 %v2281
  %vm2703 = vweird.f32 %v2697
  %vm2704 = vmor %vm2702, %vm2703
  %v2705 = vsel %vm2704, %v2697, %v2701
  %v2706 = vand.u32 2147483647, %v2281
  %vm2707 = vcmp.eq.f32.partialorder %v2706, 8.507059e+37
  %v2708 = vand.u32 %v2281, 2147483648
  %v2709 = vor.u32 1.1754944e-38, %v2708
  %v2710 = vsel %vm2707, %v2709, %v2705
  %v2711 = vmul.f32 1.0, %v2710
  %v2712 = vrcp.pop %v2282
  %v2713 = vmul.f32 %v2282, %v2712
  %v2714 = vsub.f32 1.0, %v2713
  %v2715 = vmul.f32 %v2712, %v2714
  %v2716 = vadd.f32 %v2712, %v2715
  %vm2717 = vweird.f32 %v2282
  %vm2718 = vweird.f32 %v2712
  %vm2719 = vmor %vm2717, %vm2718
  %v2720 = vsel %vm2719, %v2712, %v2716
  %v2721 = vand.u32 2147483647, %v2282
  %vm2722 = vcmp.eq.f32.partialorder %v2721, 8.507059e+37
  %v2723 = vand.u32 %v2282, 2147483648
  %v2724 = vor.u32 1.1754944e-38, %v2723
  %v2725 = vsel %vm2722, %v2724, %v2720
  %v2726 = vmul.f32 1.0, %v2725
  %v2727 = vrcp.pop %v2283
  %v2728 = vmul.f32 %v2283, %v2727
  %v2729 = vsub.f32 1.0, %v2728
  %v2730 = vmul.f32 %v2727, %v2729
  %v2731 = vadd.f32 %v2727, %v2730
  %vm2732 = vweird.f32 %v2283
  %vm2733 = vweird.f32 %v2727
  %vm2734 = vmor %vm2732, %vm2733
  %v2735 = vsel %vm2734, %v2727, %v2731
  %v2736 = vand.u32 2147483647, %v2283
  %vm2737 = vcmp.eq.f32.partialorder %v2736, 8.507059e+37
  %v2738 = vand.u32 %v2283, 2147483648
  %v2739 = vor.u32 1.1754944e-38, %v2738
  %v2740 = vsel %vm2737, %v2739, %v2735
  %v2741 = vmul.f32 1.0, %v2740
  %v2742 = vrcp.pop %v2284
  %v2743 = vmul.f32 %v2284, %v2742
  %v2744 = vsub.f32 1.0, %v2743
  %v2745 = vmul.f32 %v2742, %v2744
  %v2746 = vadd.f32 %v2742, %v2745
  %vm2747 = vweird.f32 %v2284
  %vm2748 = vweird.f32 %v2742
  %vm2749 = vmor %vm2747, %vm2748
  %v2750 = vsel %vm2749, %v2742, %v2746
  %v2751 = vand.u32 2147483647, %v2284
  %vm2752 = vcmp.eq.f32.partialorder %v2751, 8.507059e+37
  %v2753 = vand.u32 %v2284, 2147483648
  %v2754 = vor.u32 1.1754944e-38, %v2753
  %v2755 = vsel %vm2752, %v2754, %v2750
  %v2756 = vmul.f32 1.0, %v2755
  %v2757 = vrcp.pop %v2285
  %v2758 = vmul.f32 %v2285, %v2757
  %v2759 = vsub.f32 1.0, %v2758
  %v2760 = vmul.f32 %v2757, %v2759
  %v2761 = vadd.f32 %v2757, %v2760
  %vm2762 = vweird.f32 %v2285
  %vm2763 = vweird.f32 %v2757
  %vm2764 = vmor %vm2762, %vm2763
  %v2765 = vsel %vm2764, %v2757, %v2761
  %v2766 = vand.u32 2147483647, %v2285
  %vm2767 = vcmp.eq.f32.partialorder %v2766, 8.507059e+37
  %v2768 = vand.u32 %v2285, 2147483648
  %v2769 = vor.u32 1.1754944e-38, %v2768
  %v2770 = vsel %vm2767, %v2769, %v2765
  %v2771 = vmul.f32 1.0, %v2770
  %v2772 = vrcp.pop %v2286
  %v2773 = vmul.f32 %v2286, %v2772
  %v2774 = vsub.f32 1.0, %v2773
  %v2775 = vmul.f32 %v2772, %v2774
  %v2776 = vadd.f32 %v2772, %v2775
  %vm2777 = vweird.f32 %v2286
  %vm2778 = vweird.f32 %v2772
  %vm2779 = vmor %vm2777, %vm2778
  %v2780 = vsel %vm2779, %v2772, %v2776
  %v2781 = vand.u32 2147483647, %v2286
  %vm2782 = vcmp.eq.f32.partialorder %v2781, 8.507059e+37
  %v2783 = vand.u32 %v2286, 2147483648
  %v2784 = vor.u32 1.1754944e-38, %v2783
  %v2785 = vsel %vm2782, %v2784, %v2780
  %v2786 = vmul.f32 1.0, %v2785
  %v2787 = vrcp.pop %v2287
  %v2788 = vmul.f32 %v2287, %v2787
  %v2789 = vsub.f32 1.0, %v2788
  %v2790 = vmul.f32 %v2787, %v2789
  %v2791 = vadd.f32 %v2787, %v2790
  %vm2792 = vweird.f32 %v2287
  %vm2793 = vweird.f32 %v2787
  %vm2794 = vmor %vm2792, %vm2793
  %v2795 = vsel %vm2794, %v2787, %v2791
  %v2796 = vand.u32 2147483647, %v2287
  %vm2797 = vcmp.eq.f32.partialorder %v2796, 8.507059e+37
  %v2798 = vand.u32 %v2287, 2147483648
  %v2799 = vor.u32 1.1754944e-38, %v2798
  %v2800 = vsel %vm2797, %v2799, %v2795
  %v2801 = vmul.f32 1.0, %v2800
  %v2802 = vrcp.pop %v2288
  %v2803 = vmul.f32 %v2288, %v2802
  %v2804 = vsub.f32 1.0, %v2803
  %v2805 = vmul.f32 %v2802, %v2804
  %v2806 = vadd.f32 %v2802, %v2805
  %vm2807 = vweird.f32 %v2288
  %vm2808 = vweird.f32 %v2802
  %vm2809 = vmor %vm2807, %vm2808
  %v2810 = vsel %vm2809, %v2802, %v2806
  %v2811 = vand.u32 2147483647, %v2288
  %vm2812 = vcmp.eq.f32.partialorder %v2811, 8.507059e+37
  %v2813 = vand.u32 %v2288, 2147483648
  %v2814 = vor.u32 1.1754944e-38, %v2813
  %v2815 = vsel %vm2812, %v2814, %v2810
  %v2816 = vmul.f32 1.0, %v2815
  %v2817 = vrcp.pop %v2289
  %v2818 = vmul.f32 %v2289, %v2817
  %v2819 = vsub.f32 1.0, %v2818
  %v2820 = vmul.f32 %v2817, %v2819
  %v2821 = vadd.f32 %v2817, %v2820
  %vm2822 = vweird.f32 %v2289
  %vm2823 = vweird.f32 %v2817
  %vm2824 = vmor %vm2822, %vm2823
  %v2825 = vsel %vm2824, %v2817, %v2821
  %v2826 = vand.u32 2147483647, %v2289
  %vm2827 = vcmp.eq.f32.partialorder %v2826, 8.507059e+37
  %v2828 = vand.u32 %v2289, 2147483648
  %v2829 = vor.u32 1.1754944e-38, %v2828
  %v2830 = vsel %vm2827, %v2829, %v2825
  %v2831 = vmul.f32 1.0, %v2830
  %v2832 = vrcp.pop %v2290
  %v2833 = vmul.f32 %v2290, %v2832
  %v2834 = vsub.f32 1.0, %v2833
  %v2835 = vmul.f32 %v2832, %v2834
  %v2836 = vadd.f32 %v2832, %v2835
  %vm2837 = vweird.f32 %v2290
  %vm2838 = vweird.f32 %v2832
  %vm2839 = vmor %vm2837, %vm2838
  %v2840 = vsel %vm2839, %v2832, %v2836
  %v2841 = vand.u32 2147483647, %v2290
  %vm2842 = vcmp.eq.f32.partialorder %v2841, 8.507059e+37
  %v2843 = vand.u32 %v2290, 2147483648
  %v2844 = vor.u32 1.1754944e-38, %v2843
  %v2845 = vsel %vm2842, %v2844, %v2840
  %v2846 = vmul.f32 1.0, %v2845
  %v2847 = vrcp.pop %v2291
  %v2848 = vmul.f32 %v2291, %v2847
  %v2849 = vsub.f32 1.0, %v2848
  %v2850 = vmul.f32 %v2847, %v2849
  %v2851 = vadd.f32 %v2847, %v2850
  %vm2852 = vweird.f32 %v2291
  %vm2853 = vweird.f32 %v2847
  %vm2854 = vmor %vm2852, %vm2853
  %v2855 = vsel %vm2854, %v2847, %v2851
  %v2856 = vand.u32 2147483647, %v2291
  %vm2857 = vcmp.eq.f32.partialorder %v2856, 8.507059e+37
  %v2858 = vand.u32 %v2291, 2147483648
  %v2859 = vor.u32 1.1754944e-38, %v2858
  %v2860 = vsel %vm2857, %v2859, %v2855
  %v2861 = vmul.f32 1.0, %v2860
  %v2862 = vpack.c.bf16 %v2321, %v2306
  %v2863 = vpack.c.bf16 %v2351, %v2336
  %v2864 = vpack.c.bf16 %v2381, %v2366
  %v2865 = vpack.c.bf16 %v2411, %v2396
  %v2866 = vpack.c.bf16 %v2441, %v2426
  %v2867 = vpack.c.bf16 %v2471, %v2456
  %v2868 = vpack.c.bf16 %v2501, %v2486
  %v2869 = vpack.c.bf16 %v2531, %v2516
  %v2870 = vpack.c.bf16 %v2561, %v2546
  %v2871 = vpack.c.bf16 %v2591, %v2576
  %v2872 = vpack.c.bf16 %v2621, %v2606
  %v2873 = vpack.c.bf16 %v2651, %v2636
  %v2874 = vpack.c.bf16 %v2681, %v2666
  %v2875 = vpack.c.bf16 %v2711, %v2696
  %v2876 = vpack.c.bf16 %v2741, %v2726
  %v2877 = vpack.c.bf16 %v2771, %v2756
  %v2878 = vpack.c.bf16 %v2801, %v2786
  %v2879 = vpack.c.bf16 %v2831, %v2816
  %v2880 = vpack.c.bf16 %v2861, %v2846
  %v2881 = vld [vmem:[%s7] sm:$0xf]
  %v2882 = vld [vmem:[%s7 + $0x4] sm:$0x3]
  %v2883 = vld [vmem:[%s8] sm:$0x1]
  %v2885 = vperm.slane %v2883, 0
  %v2889 = vunpack.c.l.b16 %v2881
  %v2890 = vunpack.c.l.b16 %v2882
  %v2891 = vpack.c.b16 %v2890, %v2889
  %vm2892 = vcmask 97280
  %v2894 = vsel %vm2892, %v2862, 0
  %v2897 = vsel %vm2892, %v2863, 0
  %v2900 = vsel %vm2892, %v2864, 0
  %v2903 = vsel %vm2892, %v2865, 0
  %v2906 = vsel %vm2892, %v2866, 0
  %v2909 = vsel %vm2892, %v2867, 0
  %v2912 = vsel %vm2892, %v2868, 0
  %v2915 = vsel %vm2892, %v2869, 0
  %v2918 = vsel %vm2892, %v2870, 0
  %v2921 = vsel %vm2892, %v2871, 0
  %v2924 = vsel %vm2892, %v2872, 0
  %v2927 = vsel %vm2892, %v2873, 0
  %v2930 = vsel %vm2892, %v2874, 0
  %v2933 = vsel %vm2892, %v2875, 0
  %v2936 = vsel %vm2892, %v2876, 0
  %v2939 = vsel %vm2892, %v2877, 0
  %v2942 = vsel %vm2892, %v2878, 0
  %v2945 = vsel %vm2892, %v2879, 0
  %v2948 = vsel %vm2892, %v2880, 0
  %vm2950 = vcmask 1045504
  %v2952 = vsel %vm2950, %v2891, 0
  %2954 = vmatpush.bf16.msra.mxu0 0
  %2955 = vmatpush.bf16.msra.mxu0 0
  %2956 = vmatpush.bf16.msra.mxu0 0
  %2957 = vmatpush.bf16.msra.mxu0 0
  %2958 = vmatpush.bf16.msra.mxu0 0
  %2959 = vmatpush.bf16.msra.mxu0 0
  %2960 = vmatpush.bf16.msra.mxu0 0
  %2961 = vmatpush.bf16.msra.mxu0 %v2952
  %2962 = vmatmul.bf16.gmra.mxu0 %v2894
  %v2963 = vpop.f32.mrf.mxu0
  %v2964 = vadd.f32 %v2885, %v2963
  %v2965 = vpop.f32.mrf.mxu0
  %v2966 = vadd.f32 %v2885, %v2965
  %2967 = vmatmul.bf16.gmra.mxu0 %v2897
  %v2968 = vpop.f32.mrf.mxu0
  %v2969 = vadd.f32 %v2885, %v2968
  %v2970 = vpop.f32.mrf.mxu0
  %v2971 = vadd.f32 %v2885, %v2970
  %2972 = vmatmul.bf16.gmra.mxu0 %v2900
  %v2973 = vpop.f32.mrf.mxu0
  %v2974 = vadd.f32 %v2885, %v2973
  %v2975 = vpop.f32.mrf.mxu0
  %v2976 = vadd.f32 %v2885, %v2975
  %2977 = vmatmul.bf16.gmra.mxu0 %v2903
  %v2978 = vpop.f32.mrf.mxu0
  %v2979 = vadd.f32 %v2885, %v2978
  %v2980 = vpop.f32.mrf.mxu0
  %v2981 = vadd.f32 %v2885, %v2980
  %2982 = vmatmul.bf16.gmra.mxu0 %v2906
  %v2983 = vpop.f32.mrf.mxu0
  %v2984 = vadd.f32 %v2885, %v2983
  %v2985 = vpop.f32.mrf.mxu0
  %v2986 = vadd.f32 %v2885, %v2985
  %2987 = vmatmul.bf16.gmra.mxu0 %v2909
  %v2988 = vpop.f32.mrf.mxu0
  %v2989 = vadd.f32 %v2885, %v2988
  %v2990 = vpop.f32.mrf.mxu0
  %v2991 = vadd.f32 %v2885, %v2990
  %2992 = vmatmul.bf16.gmra.mxu0 %v2912
  %v2993 = vpop.f32.mrf.mxu0
  %v2994 = vadd.f32 %v2885, %v2993
  %v2995 = vpop.f32.mrf.mxu0
  %v2996 = vadd.f32 %v2885, %v2995
  %2997 = vmatmul.bf16.gmra.mxu0 %v2915
  %v2998 = vpop.f32.mrf.mxu0
  %v2999 = vadd.f32 %v2885, %v2998
  %v3000 = vpop.f32.mrf.mxu0
  %v3001 = vadd.f32 %v2885, %v3000
  %3002 = vmatmul.bf16.gmra.mxu0 %v2918
  %v3003 = vpop.f32.mrf.mxu0
  %v3004 = vadd.f32 %v2885, %v3003
  %v3005 = vpop.f32.mrf.mxu0
  %v3006 = vadd.f32 %v2885, %v3005
  %3007 = vmatmul.bf16.gmra.mxu0 %v2921
  %v3008 = vpop.f32.mrf.mxu0
  %v3009 = vadd.f32 %v2885, %v3008
  %v3010 = vpop.f32.mrf.mxu0
  %v3011 = vadd.f32 %v2885, %v3010
  %3012 = vmatmul.bf16.gmra.mxu0 %v2924
  %v3013 = vpop.f32.mrf.mxu0
  %v3014 = vadd.f32 %v2885, %v3013
  %v3015 = vpop.f32.mrf.mxu0
  %v3016 = vadd.f32 %v2885, %v3015
  %3017 = vmatmul.bf16.gmra.mxu0 %v2927
  %v3018 = vpop.f32.mrf.mxu0
  %v3019 = vadd.f32 %v2885, %v3018
  %v3020 = vpop.f32.mrf.mxu0
  %v3021 = vadd.f32 %v2885, %v3020
  %3022 = vmatmul.bf16.gmra.mxu0 %v2930
  %v3023 = vpop.f32.mrf.mxu0
  %v3024 = vadd.f32 %v2885, %v3023
  %v3025 = vpop.f32.mrf.mxu0
  %v3026 = vadd.f32 %v2885, %v3025
  %3027 = vmatmul.bf16.gmra.mxu0 %v2933
  %v3028 = vpop.f32.mrf.mxu0
  %v3029 = vadd.f32 %v2885, %v3028
  %v3030 = vpop.f32.mrf.mxu0
  %v3031 = vadd.f32 %v2885, %v3030
  %3032 = vmatmul.bf16.gmra.mxu0 %v2936
  %v3033 = vpop.f32.mrf.mxu0
  %v3034 = vadd.f32 %v2885, %v3033
  %v3035 = vpop.f32.mrf.mxu0
  %v3036 = vadd.f32 %v2885, %v3035
  %3037 = vmatmul.bf16.gmra.mxu0 %v2939
  %v3038 = vpop.f32.mrf.mxu0
  %v3039 = vadd.f32 %v2885, %v3038
  %v3040 = vpop.f32.mrf.mxu0
  %v3041 = vadd.f32 %v2885, %v3040
  %3042 = vmatmul.bf16.gmra.mxu0 %v2942
  %v3043 = vpop.f32.mrf.mxu0
  %v3044 = vadd.f32 %v2885, %v3043
  %v3045 = vpop.f32.mrf.mxu0
  %v3046 = vadd.f32 %v2885, %v3045
  %3047 = vmatmul.bf16.gmra.mxu0 %v2945
  %v3048 = vpop.f32.mrf.mxu0
  %v3049 = vadd.f32 %v2885, %v3048
  %v3050 = vpop.f32.mrf.mxu0
  %v3051 = vadd.f32 %v2885, %v3050
  %3052 = vmatmul.bf16.gmra.mxu0 %v2948
  %v3053 = vpop.f32.mrf.mxu0
  %v3054 = vadd.f32 %v2885, %v3053
  %v3055 = vpop.f32.mrf.mxu0
  %v3056 = vadd.f32 %v2885, %v3055
  %3057 = vdwg.mxu0
  %v3058 = vxor.u32 %v2964, 2147483648
  %v3059 = vxor.u32 %v2966, 2147483648
  %v3060 = vxor.u32 %v2969, 2147483648
  %v3061 = vxor.u32 %v2971, 2147483648
  %v3062 = vxor.u32 %v2974, 2147483648
  %v3063 = vxor.u32 %v2976, 2147483648
  %v3064 = vxor.u32 %v2979, 2147483648
  %v3065 = vxor.u32 %v2981, 2147483648
  %v3066 = vxor.u32 %v2984, 2147483648
  %v3067 = vxor.u32 %v2986, 2147483648
  %v3068 = vxor.u32 %v2989, 2147483648
  %v3069 = vxor.u32 %v2991, 2147483648
  %v3070 = vxor.u32 %v2994, 2147483648
  %v3071 = vxor.u32 %v2996, 2147483648
  %v3072 = vxor.u32 %v2999, 2147483648
  %v3073 = vxor.u32 %v3001, 2147483648
  %v3074 = vxor.u32 %v3004, 2147483648
  %v3075 = vxor.u32 %v3006, 2147483648
  %v3076 = vxor.u32 %v3009, 2147483648
  %v3077 = vxor.u32 %v3011, 2147483648
  %v3078 = vxor.u32 %v3014, 2147483648
  %v3079 = vxor.u32 %v3016, 2147483648
  %v3080 = vxor.u32 %v3019, 2147483648
  %v3081 = vxor.u32 %v3021, 2147483648
  %v3082 = vxor.u32 %v3024, 2147483648
  %v3083 = vxor.u32 %v3026, 2147483648
  %v3084 = vxor.u32 %v3029, 2147483648
  %v3085 = vxor.u32 %v3031, 2147483648
  %v3086 = vxor.u32 %v3034, 2147483648
  %v3087 = vxor.u32 %v3036, 2147483648
  %v3088 = vxor.u32 %v3039, 2147483648
  %v3089 = vxor.u32 %v3041, 2147483648
  %v3090 = vxor.u32 %v3044, 2147483648
  %v3091 = vxor.u32 %v3046, 2147483648
  %v3092 = vxor.u32 %v3049, 2147483648
  %v3093 = vxor.u32 %v3051, 2147483648
  %v3094 = vxor.u32 %v3054, 2147483648
  %v3095 = vxor.u32 %v3056, 2147483648
  %v3096 = vmul.f32 %v3058, 1.442695
  %v3097 = vpow.pop %v3096
  %v3098 = vmul.f32 %v3059, 1.442695
  %v3099 = vpow.pop %v3098
  %v3100 = vmul.f32 %v3060, 1.442695
  %v3101 = vpow.pop %v3100
  %v3102 = vmul.f32 %v3061, 1.442695
  %v3103 = vpow.pop %v3102
  %v3104 = vmul.f32 %v3062, 1.442695
  %v3105 = vpow.pop %v3104
  %v3106 = vmul.f32 %v3063, 1.442695
  %v3107 = vpow.pop %v3106
  %v3108 = vmul.f32 %v3064, 1.442695
  %v3109 = vpow.pop %v3108
  %v3110 = vmul.f32 %v3065, 1.442695
  %v3111 = vpow.pop %v3110
  %v3112 = vmul.f32 %v3066, 1.442695
  %v3113 = vpow.pop %v3112
  %v3114 = vmul.f32 %v3067, 1.442695
  %v3115 = vpow.pop %v3114
  %v3116 = vmul.f32 %v3068, 1.442695
  %v3117 = vpow.pop %v3116
  %v3118 = vmul.f32 %v3069, 1.442695
  %v3119 = vpow.pop %v3118
  %v3120 = vmul.f32 %v3070, 1.442695
  %v3121 = vpow.pop %v3120
  %v3122 = vmul.f32 %v3071, 1.442695
  %v3123 = vpow.pop %v3122
  %v3124 = vmul.f32 %v3072, 1.442695
  %v3125 = vpow.pop %v3124
  %v3126 = vmul.f32 %v3073, 1.442695
  %v3127 = vpow.pop %v3126
  %v3128 = vmul.f32 %v3074, 1.442695
  %v3129 = vpow.pop %v3128
  %v3130 = vmul.f32 %v3075, 1.442695
  %v3131 = vpow.pop %v3130
  %v3132 = vmul.f32 %v3076, 1.442695
  %v3133 = vpow.pop %v3132
  %v3134 = vmul.f32 %v3077, 1.442695
  %v3135 = vpow.pop %v3134
  %v3136 = vmul.f32 %v3078, 1.442695
  %v3137 = vpow.pop %v3136
  %v3138 = vmul.f32 %v3079, 1.442695
  %v3139 = vpow.pop %v3138
  %v3140 = vmul.f32 %v3080, 1.442695
  %v3141 = vpow.pop %v3140
  %v3142 = vmul.f32 %v3081, 1.442695
  %v3143 = vpow.pop %v3142
  %v3144 = vmul.f32 %v3082, 1.442695
  %v3145 = vpow.pop %v3144
  %v3146 = vmul.f32 %v3083, 1.442695
  %v3147 = vpow.pop %v3146
  %v3148 = vmul.f32 %v3084, 1.442695
  %v3149 = vpow.pop %v3148
  %v3150 = vmul.f32 %v3085, 1.442695
  %v3151 = vpow.pop %v3150
  %v3152 = vmul.f32 %v3086, 1.442695
  %v3153 = vpow.pop %v3152
  %v3154 = vmul.f32 %v3087, 1.442695
  %v3155 = vpow.pop %v3154
  %v3156 = vmul.f32 %v3088, 1.442695
  %v3157 = vpow.pop %v3156
  %v3158 = vmul.f32 %v3089, 1.442695
  %v3159 = vpow.pop %v3158
  %v3160 = vmul.f32 %v3090, 1.442695
  %v3161 = vpow.pop %v3160
  %v3162 = vmul.f32 %v3091, 1.442695
  %v3163 = vpow.pop %v3162
  %v3164 = vmul.f32 %v3092, 1.442695
  %v3165 = vpow.pop %v3164
  %v3166 = vmul.f32 %v3093, 1.442695
  %v3167 = vpow.pop %v3166
  %v3168 = vmul.f32 %v3094, 1.442695
  %v3169 = vpow.pop %v3168
  %v3170 = vmul.f32 %v3095, 1.442695
  %v3171 = vpow.pop %v3170
  %v3172 = vadd.f32 %v3097, 1.0
  %v3173 = vadd.f32 %v3099, 1.0
  %v3174 = vadd.f32 %v3101, 1.0
  %v3175 = vadd.f32 %v3103, 1.0
  %v3176 = vadd.f32 %v3105, 1.0
  %v3177 = vadd.f32 %v3107, 1.0
  %v3178 = vadd.f32 %v3109, 1.0
  %v3179 = vadd.f32 %v3111, 1.0
  %v3180 = vadd.f32 %v3113, 1.0
  %v3181 = vadd.f32 %v3115, 1.0
  %v3182 = vadd.f32 %v3117, 1.0
  %v3183 = vadd.f32 %v3119, 1.0
  %v3184 = vadd.f32 %v3121, 1.0
  %v3185 = vadd.f32 %v3123, 1.0
  %v3186 = vadd.f32 %v3125, 1.0
  %v3187 = vadd.f32 %v3127, 1.0
  %v3188 = vadd.f32 %v3129, 1.0
  %v3189 = vadd.f32 %v3131, 1.0
  %v3190 = vadd.f32 %v3133, 1.0
  %v3191 = vadd.f32 %v3135, 1.0
  %v3192 = vadd.f32 %v3137, 1.0
  %v3193 = vadd.f32 %v3139, 1.0
  %v3194 = vadd.f32 %v3141, 1.0
  %v3195 = vadd.f32 %v3143, 1.0
  %v3196 = vadd.f32 %v3145, 1.0
  %v3197 = vadd.f32 %v3147, 1.0
  %v3198 = vadd.f32 %v3149, 1.0
  %v3199 = vadd.f32 %v3151, 1.0
  %v3200 = vadd.f32 %v3153, 1.0
  %v3201 = vadd.f32 %v3155, 1.0
  %v3202 = vadd.f32 %v3157, 1.0
  %v3203 = vadd.f32 %v3159, 1.0
  %v3204 = vadd.f32 %v3161, 1.0
  %v3205 = vadd.f32 %v3163, 1.0
  %v3206 = vadd.f32 %v3165, 1.0
  %v3207 = vadd.f32 %v3167, 1.0
  %v3208 = vadd.f32 %v3169, 1.0
  %v3209 = vadd.f32 %v3171, 1.0
  %v3210 = vrcp.pop %v3172
  %v3211 = vmul.f32 %v3172, %v3210
  %v3212 = vsub.f32 1.0, %v3211
  %v3213 = vmul.f32 %v3210, %v3212
  %v3214 = vadd.f32 %v3210, %v3213
  %vm3215 = vweird.f32 %v3172
  %vm3216 = vweird.f32 %v3210
  %vm3217 = vmor %vm3215, %vm3216
  %v3218 = vsel %vm3217, %v3210, %v3214
  %v3219 = vand.u32 2147483647, %v3172
  %vm3220 = vcmp.eq.f32.partialorder %v3219, 8.507059e+37
  %v3221 = vand.u32 %v3172, 2147483648
  %v3222 = vor.u32 1.1754944e-38, %v3221
  %v3223 = vsel %vm3220, %v3222, %v3218
  %v3224 = vmul.f32 1.0, %v3223
  %v3225 = vrcp.pop %v3173
  %v3226 = vmul.f32 %v3173, %v3225
  %v3227 = vsub.f32 1.0, %v3226
  %v3228 = vmul.f32 %v3225, %v3227
  %v3229 = vadd.f32 %v3225, %v3228
  %vm3230 = vweird.f32 %v3173
  %vm3231 = vweird.f32 %v3225
  %vm3232 = vmor %vm3230, %vm3231
  %v3233 = vsel %vm3232, %v3225, %v3229
  %v3234 = vand.u32 2147483647, %v3173
  %vm3235 = vcmp.eq.f32.partialorder %v3234, 8.507059e+37
  %v3236 = vand.u32 %v3173, 2147483648
  %v3237 = vor.u32 1.1754944e-38, %v3236
  %v3238 = vsel %vm3235, %v3237, %v3233
  %v3239 = vmul.f32 1.0, %v3238
  %v3240 = vrcp.pop %v3174
  %v3241 = vmul.f32 %v3174, %v3240
  %v3242 = vsub.f32 1.0, %v3241
  %v3243 = vmul.f32 %v3240, %v3242
  %v3244 = vadd.f32 %v3240, %v3243
  %vm3245 = vweird.f32 %v3174
  %vm3246 = vweird.f32 %v3240
  %vm3247 = vmor %vm3245, %vm3246
  %v3248 = vsel %vm3247, %v3240, %v3244
  %v3249 = vand.u32 2147483647, %v3174
  %vm3250 = vcmp.eq.f32.partialorder %v3249, 8.507059e+37
  %v3251 = vand.u32 %v3174, 2147483648
  %v3252 = vor.u32 1.1754944e-38, %v3251
  %v3253 = vsel %vm3250, %v3252, %v3248
  %v3254 = vmul.f32 1.0, %v3253
  %v3255 = vrcp.pop %v3175
  %v3256 = vmul.f32 %v3175, %v3255
  %v3257 = vsub.f32 1.0, %v3256
  %v3258 = vmul.f32 %v3255, %v3257
  %v3259 = vadd.f32 %v3255, %v3258
  %vm3260 = vweird.f32 %v3175
  %vm3261 = vweird.f32 %v3255
  %vm3262 = vmor %vm3260, %vm3261
  %v3263 = vsel %vm3262, %v3255, %v3259
  %v3264 = vand.u32 2147483647, %v3175
  %vm3265 = vcmp.eq.f32.partialorder %v3264, 8.507059e+37
  %v3266 = vand.u32 %v3175, 2147483648
  %v3267 = vor.u32 1.1754944e-38, %v3266
  %v3268 = vsel %vm3265, %v3267, %v3263
  %v3269 = vmul.f32 1.0, %v3268
  %v3270 = vrcp.pop %v3176
  %v3271 = vmul.f32 %v3176, %v3270
  %v3272 = vsub.f32 1.0, %v3271
  %v3273 = vmul.f32 %v3270, %v3272
  %v3274 = vadd.f32 %v3270, %v3273
  %vm3275 = vweird.f32 %v3176
  %vm3276 = vweird.f32 %v3270
  %vm3277 = vmor %vm3275, %vm3276
  %v3278 = vsel %vm3277, %v3270, %v3274
  %v3279 = vand.u32 2147483647, %v3176
  %vm3280 = vcmp.eq.f32.partialorder %v3279, 8.507059e+37
  %v3281 = vand.u32 %v3176, 2147483648
  %v3282 = vor.u32 1.1754944e-38, %v3281
  %v3283 = vsel %vm3280, %v3282, %v3278
  %v3284 = vmul.f32 1.0, %v3283
  %v3285 = vrcp.pop %v3177
  %v3286 = vmul.f32 %v3177, %v3285
  %v3287 = vsub.f32 1.0, %v3286
  %v3288 = vmul.f32 %v3285, %v3287
  %v3289 = vadd.f32 %v3285, %v3288
  %vm3290 = vweird.f32 %v3177
  %vm3291 = vweird.f32 %v3285
  %vm3292 = vmor %vm3290, %vm3291
  %v3293 = vsel %vm3292, %v3285, %v3289
  %v3294 = vand.u32 2147483647, %v3177
  %vm3295 = vcmp.eq.f32.partialorder %v3294, 8.507059e+37
  %v3296 = vand.u32 %v3177, 2147483648
  %v3297 = vor.u32 1.1754944e-38, %v3296
  %v3298 = vsel %vm3295, %v3297, %v3293
  %v3299 = vmul.f32 1.0, %v3298
  %v3300 = vrcp.pop %v3178
  %v3301 = vmul.f32 %v3178, %v3300
  %v3302 = vsub.f32 1.0, %v3301
  %v3303 = vmul.f32 %v3300, %v3302
  %v3304 = vadd.f32 %v3300, %v3303
  %vm3305 = vweird.f32 %v3178
  %vm3306 = vweird.f32 %v3300
  %vm3307 = vmor %vm3305, %vm3306
  %v3308 = vsel %vm3307, %v3300, %v3304
  %v3309 = vand.u32 2147483647, %v3178
  %vm3310 = vcmp.eq.f32.partialorder %v3309, 8.507059e+37
  %v3311 = vand.u32 %v3178, 2147483648
  %v3312 = vor.u32 1.1754944e-38, %v3311
  %v3313 = vsel %vm3310, %v3312, %v3308
  %v3314 = vmul.f32 1.0, %v3313
  %v3315 = vrcp.pop %v3179
  %v3316 = vmul.f32 %v3179, %v3315
  %v3317 = vsub.f32 1.0, %v3316
  %v3318 = vmul.f32 %v3315, %v3317
  %v3319 = vadd.f32 %v3315, %v3318
  %vm3320 = vweird.f32 %v3179
  %vm3321 = vweird.f32 %v3315
  %vm3322 = vmor %vm3320, %vm3321
  %v3323 = vsel %vm3322, %v3315, %v3319
  %v3324 = vand.u32 2147483647, %v3179
  %vm3325 = vcmp.eq.f32.partialorder %v3324, 8.507059e+37
  %v3326 = vand.u32 %v3179, 2147483648
  %v3327 = vor.u32 1.1754944e-38, %v3326
  %v3328 = vsel %vm3325, %v3327, %v3323
  %v3329 = vmul.f32 1.0, %v3328
  %v3330 = vrcp.pop %v3180
  %v3331 = vmul.f32 %v3180, %v3330
  %v3332 = vsub.f32 1.0, %v3331
  %v3333 = vmul.f32 %v3330, %v3332
  %v3334 = vadd.f32 %v3330, %v3333
  %vm3335 = vweird.f32 %v3180
  %vm3336 = vweird.f32 %v3330
  %vm3337 = vmor %vm3335, %vm3336
  %v3338 = vsel %vm3337, %v3330, %v3334
  %v3339 = vand.u32 2147483647, %v3180
  %vm3340 = vcmp.eq.f32.partialorder %v3339, 8.507059e+37
  %v3341 = vand.u32 %v3180, 2147483648
  %v3342 = vor.u32 1.1754944e-38, %v3341
  %v3343 = vsel %vm3340, %v3342, %v3338
  %v3344 = vmul.f32 1.0, %v3343
  %v3345 = vrcp.pop %v3181
  %v3346 = vmul.f32 %v3181, %v3345
  %v3347 = vsub.f32 1.0, %v3346
  %v3348 = vmul.f32 %v3345, %v3347
  %v3349 = vadd.f32 %v3345, %v3348
  %vm3350 = vweird.f32 %v3181
  %vm3351 = vweird.f32 %v3345
  %vm3352 = vmor %vm3350, %vm3351
  %v3353 = vsel %vm3352, %v3345, %v3349
  %v3354 = vand.u32 2147483647, %v3181
  %vm3355 = vcmp.eq.f32.partialorder %v3354, 8.507059e+37
  %v3356 = vand.u32 %v3181, 2147483648
  %v3357 = vor.u32 1.1754944e-38, %v3356
  %v3358 = vsel %vm3355, %v3357, %v3353
  %v3359 = vmul.f32 1.0, %v3358
  %v3360 = vrcp.pop %v3182
  %v3361 = vmul.f32 %v3182, %v3360
  %v3362 = vsub.f32 1.0, %v3361
  %v3363 = vmul.f32 %v3360, %v3362
  %v3364 = vadd.f32 %v3360, %v3363
  %vm3365 = vweird.f32 %v3182
  %vm3366 = vweird.f32 %v3360
  %vm3367 = vmor %vm3365, %vm3366
  %v3368 = vsel %vm3367, %v3360, %v3364
  %v3369 = vand.u32 2147483647, %v3182
  %vm3370 = vcmp.eq.f32.partialorder %v3369, 8.507059e+37
  %v3371 = vand.u32 %v3182, 2147483648
  %v3372 = vor.u32 1.1754944e-38, %v3371
  %v3373 = vsel %vm3370, %v3372, %v3368
  %v3374 = vmul.f32 1.0, %v3373
  %v3375 = vrcp.pop %v3183
  %v3376 = vmul.f32 %v3183, %v3375
  %v3377 = vsub.f32 1.0, %v3376
  %v3378 = vmul.f32 %v3375, %v3377
  %v3379 = vadd.f32 %v3375, %v3378
  %vm3380 = vweird.f32 %v3183
  %vm3381 = vweird.f32 %v3375
  %vm3382 = vmor %vm3380, %vm3381
  %v3383 = vsel %vm3382, %v3375, %v3379
  %v3384 = vand.u32 2147483647, %v3183
  %vm3385 = vcmp.eq.f32.partialorder %v3384, 8.507059e+37
  %v3386 = vand.u32 %v3183, 2147483648
  %v3387 = vor.u32 1.1754944e-38, %v3386
  %v3388 = vsel %vm3385, %v3387, %v3383
  %v3389 = vmul.f32 1.0, %v3388
  %v3390 = vrcp.pop %v3184
  %v3391 = vmul.f32 %v3184, %v3390
  %v3392 = vsub.f32 1.0, %v3391
  %v3393 = vmul.f32 %v3390, %v3392
  %v3394 = vadd.f32 %v3390, %v3393
  %vm3395 = vweird.f32 %v3184
  %vm3396 = vweird.f32 %v3390
  %vm3397 = vmor %vm3395, %vm3396
  %v3398 = vsel %vm3397, %v3390, %v3394
  %v3399 = vand.u32 2147483647, %v3184
  %vm3400 = vcmp.eq.f32.partialorder %v3399, 8.507059e+37
  %v3401 = vand.u32 %v3184, 2147483648
  %v3402 = vor.u32 1.1754944e-38, %v3401
  %v3403 = vsel %vm3400, %v3402, %v3398
  %v3404 = vmul.f32 1.0, %v3403
  %v3405 = vrcp.pop %v3185
  %v3406 = vmul.f32 %v3185, %v3405
  %v3407 = vsub.f32 1.0, %v3406
  %v3408 = vmul.f32 %v3405, %v3407
  %v3409 = vadd.f32 %v3405, %v3408
  %vm3410 = vweird.f32 %v3185
  %vm3411 = vweird.f32 %v3405
  %vm3412 = vmor %vm3410, %vm3411
  %v3413 = vsel %vm3412, %v3405, %v3409
  %v3414 = vand.u32 2147483647, %v3185
  %vm3415 = vcmp.eq.f32.partialorder %v3414, 8.507059e+37
  %v3416 = vand.u32 %v3185, 2147483648
  %v3417 = vor.u32 1.1754944e-38, %v3416
  %v3418 = vsel %vm3415, %v3417, %v3413
  %v3419 = vmul.f32 1.0, %v3418
  %v3420 = vrcp.pop %v3186
  %v3421 = vmul.f32 %v3186, %v3420
  %v3422 = vsub.f32 1.0, %v3421
  %v3423 = vmul.f32 %v3420, %v3422
  %v3424 = vadd.f32 %v3420, %v3423
  %vm3425 = vweird.f32 %v3186
  %vm3426 = vweird.f32 %v3420
  %vm3427 = vmor %vm3425, %vm3426
  %v3428 = vsel %vm3427, %v3420, %v3424
  %v3429 = vand.u32 2147483647, %v3186
  %vm3430 = vcmp.eq.f32.partialorder %v3429, 8.507059e+37
  %v3431 = vand.u32 %v3186, 2147483648
  %v3432 = vor.u32 1.1754944e-38, %v3431
  %v3433 = vsel %vm3430, %v3432, %v3428
  %v3434 = vmul.f32 1.0, %v3433
  %v3435 = vrcp.pop %v3187
  %v3436 = vmul.f32 %v3187, %v3435
  %v3437 = vsub.f32 1.0, %v3436
  %v3438 = vmul.f32 %v3435, %v3437
  %v3439 = vadd.f32 %v3435, %v3438
  %vm3440 = vweird.f32 %v3187
  %vm3441 = vweird.f32 %v3435
  %vm3442 = vmor %vm3440, %vm3441
  %v3443 = vsel %vm3442, %v3435, %v3439
  %v3444 = vand.u32 2147483647, %v3187
  %vm3445 = vcmp.eq.f32.partialorder %v3444, 8.507059e+37
  %v3446 = vand.u32 %v3187, 2147483648
  %v3447 = vor.u32 1.1754944e-38, %v3446
  %v3448 = vsel %vm3445, %v3447, %v3443
  %v3449 = vmul.f32 1.0, %v3448
  %v3450 = vrcp.pop %v3188
  %v3451 = vmul.f32 %v3188, %v3450
  %v3452 = vsub.f32 1.0, %v3451
  %v3453 = vmul.f32 %v3450, %v3452
  %v3454 = vadd.f32 %v3450, %v3453
  %vm3455 = vweird.f32 %v3188
  %vm3456 = vweird.f32 %v3450
  %vm3457 = vmor %vm3455, %vm3456
  %v3458 = vsel %vm3457, %v3450, %v3454
  %v3459 = vand.u32 2147483647, %v3188
  %vm3460 = vcmp.eq.f32.partialorder %v3459, 8.507059e+37
  %v3461 = vand.u32 %v3188, 2147483648
  %v3462 = vor.u32 1.1754944e-38, %v3461
  %v3463 = vsel %vm3460, %v3462, %v3458
  %v3464 = vmul.f32 1.0, %v3463
  %v3465 = vrcp.pop %v3189
  %v3466 = vmul.f32 %v3189, %v3465
  %v3467 = vsub.f32 1.0, %v3466
  %v3468 = vmul.f32 %v3465, %v3467
  %v3469 = vadd.f32 %v3465, %v3468
  %vm3470 = vweird.f32 %v3189
  %vm3471 = vweird.f32 %v3465
  %vm3472 = vmor %vm3470, %vm3471
  %v3473 = vsel %vm3472, %v3465, %v3469
  %v3474 = vand.u32 2147483647, %v3189
  %vm3475 = vcmp.eq.f32.partialorder %v3474, 8.507059e+37
  %v3476 = vand.u32 %v3189, 2147483648
  %v3477 = vor.u32 1.1754944e-38, %v3476
  %v3478 = vsel %vm3475, %v3477, %v3473
  %v3479 = vmul.f32 1.0, %v3478
  %v3480 = vrcp.pop %v3190
  %v3481 = vmul.f32 %v3190, %v3480
  %v3482 = vsub.f32 1.0, %v3481
  %v3483 = vmul.f32 %v3480, %v3482
  %v3484 = vadd.f32 %v3480, %v3483
  %vm3485 = vweird.f32 %v3190
  %vm3486 = vweird.f32 %v3480
  %vm3487 = vmor %vm3485, %vm3486
  %v3488 = vsel %vm3487, %v3480, %v3484
  %v3489 = vand.u32 2147483647, %v3190
  %vm3490 = vcmp.eq.f32.partialorder %v3489, 8.507059e+37
  %v3491 = vand.u32 %v3190, 2147483648
  %v3492 = vor.u32 1.1754944e-38, %v3491
  %v3493 = vsel %vm3490, %v3492, %v3488
  %v3494 = vmul.f32 1.0, %v3493
  %v3495 = vrcp.pop %v3191
  %v3496 = vmul.f32 %v3191, %v3495
  %v3497 = vsub.f32 1.0, %v3496
  %v3498 = vmul.f32 %v3495, %v3497
  %v3499 = vadd.f32 %v3495, %v3498
  %vm3500 = vweird.f32 %v3191
  %vm3501 = vweird.f32 %v3495
  %vm3502 = vmor %vm3500, %vm3501
  %v3503 = vsel %vm3502, %v3495, %v3499
  %v3504 = vand.u32 2147483647, %v3191
  %vm3505 = vcmp.eq.f32.partialorder %v3504, 8.507059e+37
  %v3506 = vand.u32 %v3191, 2147483648
  %v3507 = vor.u32 1.1754944e-38, %v3506
  %v3508 = vsel %vm3505, %v3507, %v3503
  %v3509 = vmul.f32 1.0, %v3508
  %v3510 = vrcp.pop %v3192
  %v3511 = vmul.f32 %v3192, %v3510
  %v3512 = vsub.f32 1.0, %v3511
  %v3513 = vmul.f32 %v3510, %v3512
  %v3514 = vadd.f32 %v3510, %v3513
  %vm3515 = vweird.f32 %v3192
  %vm3516 = vweird.f32 %v3510
  %vm3517 = vmor %vm3515, %vm3516
  %v3518 = vsel %vm3517, %v3510, %v3514
  %v3519 = vand.u32 2147483647, %v3192
  %vm3520 = vcmp.eq.f32.partialorder %v3519, 8.507059e+37
  %v3521 = vand.u32 %v3192, 2147483648
  %v3522 = vor.u32 1.1754944e-38, %v3521
  %v3523 = vsel %vm3520, %v3522, %v3518
  %v3524 = vmul.f32 1.0, %v3523
  %v3525 = vrcp.pop %v3193
  %v3526 = vmul.f32 %v3193, %v3525
  %v3527 = vsub.f32 1.0, %v3526
  %v3528 = vmul.f32 %v3525, %v3527
  %v3529 = vadd.f32 %v3525, %v3528
  %vm3530 = vweird.f32 %v3193
  %vm3531 = vweird.f32 %v3525
  %vm3532 = vmor %vm3530, %vm3531
  %v3533 = vsel %vm3532, %v3525, %v3529
  %v3534 = vand.u32 2147483647, %v3193
  %vm3535 = vcmp.eq.f32.partialorder %v3534, 8.507059e+37
  %v3536 = vand.u32 %v3193, 2147483648
  %v3537 = vor.u32 1.1754944e-38, %v3536
  %v3538 = vsel %vm3535, %v3537, %v3533
  %v3539 = vmul.f32 1.0, %v3538
  %v3540 = vrcp.pop %v3194
  %v3541 = vmul.f32 %v3194, %v3540
  %v3542 = vsub.f32 1.0, %v3541
  %v3543 = vmul.f32 %v3540, %v3542
  %v3544 = vadd.f32 %v3540, %v3543
  %vm3545 = vweird.f32 %v3194
  %vm3546 = vweird.f32 %v3540
  %vm3547 = vmor %vm3545, %vm3546
  %v3548 = vsel %vm3547, %v3540, %v3544
  %v3549 = vand.u32 2147483647, %v3194
  %vm3550 = vcmp.eq.f32.partialorder %v3549, 8.507059e+37
  %v3551 = vand.u32 %v3194, 2147483648
  %v3552 = vor.u32 1.1754944e-38, %v3551
  %v3553 = vsel %vm3550, %v3552, %v3548
  %v3554 = vmul.f32 1.0, %v3553
  %v3555 = vrcp.pop %v3195
  %v3556 = vmul.f32 %v3195, %v3555
  %v3557 = vsub.f32 1.0, %v3556
  %v3558 = vmul.f32 %v3555, %v3557
  %v3559 = vadd.f32 %v3555, %v3558
  %vm3560 = vweird.f32 %v3195
  %vm3561 = vweird.f32 %v3555
  %vm3562 = vmor %vm3560, %vm3561
  %v3563 = vsel %vm3562, %v3555, %v3559
  %v3564 = vand.u32 2147483647, %v3195
  %vm3565 = vcmp.eq.f32.partialorder %v3564, 8.507059e+37
  %v3566 = vand.u32 %v3195, 2147483648
  %v3567 = vor.u32 1.1754944e-38, %v3566
  %v3568 = vsel %vm3565, %v3567, %v3563
  %v3569 = vmul.f32 1.0, %v3568
  %v3570 = vrcp.pop %v3196
  %v3571 = vmul.f32 %v3196, %v3570
  %v3572 = vsub.f32 1.0, %v3571
  %v3573 = vmul.f32 %v3570, %v3572
  %v3574 = vadd.f32 %v3570, %v3573
  %vm3575 = vweird.f32 %v3196
  %vm3576 = vweird.f32 %v3570
  %vm3577 = vmor %vm3575, %vm3576
  %v3578 = vsel %vm3577, %v3570, %v3574
  %v3579 = vand.u32 2147483647, %v3196
  %vm3580 = vcmp.eq.f32.partialorder %v3579, 8.507059e+37
  %v3581 = vand.u32 %v3196, 2147483648
  %v3582 = vor.u32 1.1754944e-38, %v3581
  %v3583 = vsel %vm3580, %v3582, %v3578
  %v3584 = vmul.f32 1.0, %v3583
  %v3585 = vrcp.pop %v3197
  %v3586 = vmul.f32 %v3197, %v3585
  %v3587 = vsub.f32 1.0, %v3586
  %v3588 = vmul.f32 %v3585, %v3587
  %v3589 = vadd.f32 %v3585, %v3588
  %vm3590 = vweird.f32 %v3197
  %vm3591 = vweird.f32 %v3585
  %vm3592 = vmor %vm3590, %vm3591
  %v3593 = vsel %vm3592, %v3585, %v3589
  %v3594 = vand.u32 2147483647, %v3197
  %vm3595 = vcmp.eq.f32.partialorder %v3594, 8.507059e+37
  %v3596 = vand.u32 %v3197, 2147483648
  %v3597 = vor.u32 1.1754944e-38, %v3596
  %v3598 = vsel %vm3595, %v3597, %v3593
  %v3599 = vmul.f32 1.0, %v3598
  %v3600 = vrcp.pop %v3198
  %v3601 = vmul.f32 %v3198, %v3600
  %v3602 = vsub.f32 1.0, %v3601
  %v3603 = vmul.f32 %v3600, %v3602
  %v3604 = vadd.f32 %v3600, %v3603
  %vm3605 = vweird.f32 %v3198
  %vm3606 = vweird.f32 %v3600
  %vm3607 = vmor %vm3605, %vm3606
  %v3608 = vsel %vm3607, %v3600, %v3604
  %v3609 = vand.u32 2147483647, %v3198
  %vm3610 = vcmp.eq.f32.partialorder %v3609, 8.507059e+37
  %v3611 = vand.u32 %v3198, 2147483648
  %v3612 = vor.u32 1.1754944e-38, %v3611
  %v3613 = vsel %vm3610, %v3612, %v3608
  %v3614 = vmul.f32 1.0, %v3613
  %v3615 = vrcp.pop %v3199
  %v3616 = vmul.f32 %v3199, %v3615
  %v3617 = vsub.f32 1.0, %v3616
  %v3618 = vmul.f32 %v3615, %v3617
  %v3619 = vadd.f32 %v3615, %v3618
  %vm3620 = vweird.f32 %v3199
  %vm3621 = vweird.f32 %v3615
  %vm3622 = vmor %vm3620, %vm3621
  %v3623 = vsel %vm3622, %v3615, %v3619
  %v3624 = vand.u32 2147483647, %v3199
  %vm3625 = vcmp.eq.f32.partialorder %v3624, 8.507059e+37
  %v3626 = vand.u32 %v3199, 2147483648
  %v3627 = vor.u32 1.1754944e-38, %v3626
  %v3628 = vsel %vm3625, %v3627, %v3623
  %v3629 = vmul.f32 1.0, %v3628
  %v3630 = vrcp.pop %v3200
  %v3631 = vmul.f32 %v3200, %v3630
  %v3632 = vsub.f32 1.0, %v3631
  %v3633 = vmul.f32 %v3630, %v3632
  %v3634 = vadd.f32 %v3630, %v3633
  %vm3635 = vweird.f32 %v3200
  %vm3636 = vweird.f32 %v3630
  %vm3637 = vmor %vm3635, %vm3636
  %v3638 = vsel %vm3637, %v3630, %v3634
  %v3639 = vand.u32 2147483647, %v3200
  %vm3640 = vcmp.eq.f32.partialorder %v3639, 8.507059e+37
  %v3641 = vand.u32 %v3200, 2147483648
  %v3642 = vor.u32 1.1754944e-38, %v3641
  %v3643 = vsel %vm3640, %v3642, %v3638
  %v3644 = vmul.f32 1.0, %v3643
  %v3645 = vrcp.pop %v3201
  %v3646 = vmul.f32 %v3201, %v3645
  %v3647 = vsub.f32 1.0, %v3646
  %v3648 = vmul.f32 %v3645, %v3647
  %v3649 = vadd.f32 %v3645, %v3648
  %vm3650 = vweird.f32 %v3201
  %vm3651 = vweird.f32 %v3645
  %vm3652 = vmor %vm3650, %vm3651
  %v3653 = vsel %vm3652, %v3645, %v3649
  %v3654 = vand.u32 2147483647, %v3201
  %vm3655 = vcmp.eq.f32.partialorder %v3654, 8.507059e+37
  %v3656 = vand.u32 %v3201, 2147483648
  %v3657 = vor.u32 1.1754944e-38, %v3656
  %v3658 = vsel %vm3655, %v3657, %v3653
  %v3659 = vmul.f32 1.0, %v3658
  %v3660 = vrcp.pop %v3202
  %v3661 = vmul.f32 %v3202, %v3660
  %v3662 = vsub.f32 1.0, %v3661
  %v3663 = vmul.f32 %v3660, %v3662
  %v3664 = vadd.f32 %v3660, %v3663
  %vm3665 = vweird.f32 %v3202
  %vm3666 = vweird.f32 %v3660
  %vm3667 = vmor %vm3665, %vm3666
  %v3668 = vsel %vm3667, %v3660, %v3664
  %v3669 = vand.u32 2147483647, %v3202
  %vm3670 = vcmp.eq.f32.partialorder %v3669, 8.507059e+37
  %v3671 = vand.u32 %v3202, 2147483648
  %v3672 = vor.u32 1.1754944e-38, %v3671
  %v3673 = vsel %vm3670, %v3672, %v3668
  %v3674 = vmul.f32 1.0, %v3673
  %v3675 = vrcp.pop %v3203
  %v3676 = vmul.f32 %v3203, %v3675
  %v3677 = vsub.f32 1.0, %v3676
  %v3678 = vmul.f32 %v3675, %v3677
  %v3679 = vadd.f32 %v3675, %v3678
  %vm3680 = vweird.f32 %v3203
  %vm3681 = vweird.f32 %v3675
  %vm3682 = vmor %vm3680, %vm3681
  %v3683 = vsel %vm3682, %v3675, %v3679
  %v3684 = vand.u32 2147483647, %v3203
  %vm3685 = vcmp.eq.f32.partialorder %v3684, 8.507059e+37
  %v3686 = vand.u32 %v3203, 2147483648
  %v3687 = vor.u32 1.1754944e-38, %v3686
  %v3688 = vsel %vm3685, %v3687, %v3683
  %v3689 = vmul.f32 1.0, %v3688
  %v3690 = vrcp.pop %v3204
  %v3691 = vmul.f32 %v3204, %v3690
  %v3692 = vsub.f32 1.0, %v3691
  %v3693 = vmul.f32 %v3690, %v3692
  %v3694 = vadd.f32 %v3690, %v3693
  %vm3695 = vweird.f32 %v3204
  %vm3696 = vweird.f32 %v3690
  %vm3697 = vmor %vm3695, %vm3696
  %v3698 = vsel %vm3697, %v3690, %v3694
  %v3699 = vand.u32 2147483647, %v3204
  %vm3700 = vcmp.eq.f32.partialorder %v3699, 8.507059e+37
  %v3701 = vand.u32 %v3204, 2147483648
  %v3702 = vor.u32 1.1754944e-38, %v3701
  %v3703 = vsel %vm3700, %v3702, %v3698
  %v3704 = vmul.f32 1.0, %v3703
  %v3705 = vrcp.pop %v3205
  %v3706 = vmul.f32 %v3205, %v3705
  %v3707 = vsub.f32 1.0, %v3706
  %v3708 = vmul.f32 %v3705, %v3707
  %v3709 = vadd.f32 %v3705, %v3708
  %vm3710 = vweird.f32 %v3205
  %vm3711 = vweird.f32 %v3705
  %vm3712 = vmor %vm3710, %vm3711
  %v3713 = vsel %vm3712, %v3705, %v3709
  %v3714 = vand.u32 2147483647, %v3205
  %vm3715 = vcmp.eq.f32.partialorder %v3714, 8.507059e+37
  %v3716 = vand.u32 %v3205, 2147483648
  %v3717 = vor.u32 1.1754944e-38, %v3716
  %v3718 = vsel %vm3715, %v3717, %v3713
  %v3719 = vmul.f32 1.0, %v3718
  %v3720 = vrcp.pop %v3206
  %v3721 = vmul.f32 %v3206, %v3720
  %v3722 = vsub.f32 1.0, %v3721
  %v3723 = vmul.f32 %v3720, %v3722
  %v3724 = vadd.f32 %v3720, %v3723
  %vm3725 = vweird.f32 %v3206
  %vm3726 = vweird.f32 %v3720
  %vm3727 = vmor %vm3725, %vm3726
  %v3728 = vsel %vm3727, %v3720, %v3724
  %v3729 = vand.u32 2147483647, %v3206
  %vm3730 = vcmp.eq.f32.partialorder %v3729, 8.507059e+37
  %v3731 = vand.u32 %v3206, 2147483648
  %v3732 = vor.u32 1.1754944e-38, %v3731
  %v3733 = vsel %vm3730, %v3732, %v3728
  %v3734 = vmul.f32 1.0, %v3733
  %v3735 = vrcp.pop %v3207
  %v3736 = vmul.f32 %v3207, %v3735
  %v3737 = vsub.f32 1.0, %v3736
  %v3738 = vmul.f32 %v3735, %v3737
  %v3739 = vadd.f32 %v3735, %v3738
  %vm3740 = vweird.f32 %v3207
  %vm3741 = vweird.f32 %v3735
  %vm3742 = vmor %vm3740, %vm3741
  %v3743 = vsel %vm3742, %v3735, %v3739
  %v3744 = vand.u32 2147483647, %v3207
  %vm3745 = vcmp.eq.f32.partialorder %v3744, 8.507059e+37
  %v3746 = vand.u32 %v3207, 2147483648
  %v3747 = vor.u32 1.1754944e-38, %v3746
  %v3748 = vsel %vm3745, %v3747, %v3743
  %v3749 = vmul.f32 1.0, %v3748
  %v3750 = vrcp.pop %v3208
  %v3751 = vmul.f32 %v3208, %v3750
  %v3752 = vsub.f32 1.0, %v3751
  %v3753 = vmul.f32 %v3750, %v3752
  %v3754 = vadd.f32 %v3750, %v3753
  %vm3755 = vweird.f32 %v3208
  %vm3756 = vweird.f32 %v3750
  %vm3757 = vmor %vm3755, %vm3756
  %v3758 = vsel %vm3757, %v3750, %v3754
  %v3759 = vand.u32 2147483647, %v3208
  %vm3760 = vcmp.eq.f32.partialorder %v3759, 8.507059e+37
  %v3761 = vand.u32 %v3208, 2147483648
  %v3762 = vor.u32 1.1754944e-38, %v3761
  %v3763 = vsel %vm3760, %v3762, %v3758
  %v3764 = vmul.f32 1.0, %v3763
  %v3765 = vrcp.pop %v3209
  %v3766 = vmul.f32 %v3209, %v3765
  %v3767 = vsub.f32 1.0, %v3766
  %v3768 = vmul.f32 %v3765, %v3767
  %v3769 = vadd.f32 %v3765, %v3768
  %vm3770 = vweird.f32 %v3209
  %vm3771 = vweird.f32 %v3765
  %vm3772 = vmor %vm3770, %vm3771
  %v3773 = vsel %vm3772, %v3765, %v3769
  %v3774 = vand.u32 2147483647, %v3209
  %vm3775 = vcmp.eq.f32.partialorder %v3774, 8.507059e+37
  %v3776 = vand.u32 %v3209, 2147483648
  %v3777 = vor.u32 1.1754944e-38, %v3776
  %v3778 = vsel %vm3775, %v3777, %v3773
  %v3779 = vmul.f32 1.0, %v3778
  %vm3780 = vcmask 31744
  %v3781 = vsel %vm3780, %v3224, 0.0
  %v3782 = vsel %vm3780, %v3239, 0.0
  %v3783 = vadd.f32 %v3781, %v3782
  %v3784 = vsel %vm3780, %v3254, 0.0
  %v3785 = vadd.f32 %v3783, %v3784
  %v3786 = vsel %vm3780, %v3269, 0.0
  %v3787 = vadd.f32 %v3785, %v3786
  %v3788 = vsel %vm3780, %v3284, 0.0
  %v3789 = vadd.f32 %v3787, %v3788
  %v3790 = vsel %vm3780, %v3299, 0.0
  %v3791 = vadd.f32 %v3789, %v3790
  %v3792 = vsel %vm3780, %v3314, 0.0
  %v3793 = vadd.f32 %v3791, %v3792
  %v3794 = vsel %vm3780, %v3329, 0.0
  %v3795 = vadd.f32 %v3793, %v3794
  %v3796 = vsel %vm3780, %v3344, 0.0
  %v3797 = vadd.f32 %v3795, %v3796
  %v3798 = vsel %vm3780, %v3359, 0.0
  %v3799 = vadd.f32 %v3797, %v3798
  %v3800 = vsel %vm3780, %v3374, 0.0
  %v3801 = vadd.f32 %v3799, %v3800
  %v3802 = vsel %vm3780, %v3389, 0.0
  %v3803 = vadd.f32 %v3801, %v3802
  %v3804 = vsel %vm3780, %v3404, 0.0
  %v3805 = vadd.f32 %v3803, %v3804
  %v3806 = vsel %vm3780, %v3419, 0.0
  %v3807 = vadd.f32 %v3805, %v3806
  %v3808 = vsel %vm3780, %v3434, 0.0
  %v3809 = vadd.f32 %v3807, %v3808
  %v3810 = vsel %vm3780, %v3449, 0.0
  %v3811 = vadd.f32 %v3809, %v3810
  %v3812 = vsel %vm3780, %v3464, 0.0
  %v3813 = vadd.f32 %v3811, %v3812
  %v3814 = vsel %vm3780, %v3479, 0.0
  %v3815 = vadd.f32 %v3813, %v3814
  %v3816 = vsel %vm3780, %v3494, 0.0
  %v3817 = vadd.f32 %v3815, %v3816
  %v3818 = vsel %vm3780, %v3509, 0.0
  %v3819 = vadd.f32 %v3817, %v3818
  %v3820 = vsel %vm3780, %v3524, 0.0
  %v3821 = vadd.f32 %v3819, %v3820
  %v3822 = vsel %vm3780, %v3539, 0.0
  %v3823 = vadd.f32 %v3821, %v3822
  %v3824 = vsel %vm3780, %v3554, 0.0
  %v3825 = vadd.f32 %v3823, %v3824
  %v3826 = vsel %vm3780, %v3569, 0.0
  %v3827 = vadd.f32 %v3825, %v3826
  %v3828 = vsel %vm3780, %v3584, 0.0
  %v3829 = vadd.f32 %v3827, %v3828
  %v3830 = vsel %vm3780, %v3599, 0.0
  %v3831 = vadd.f32 %v3829, %v3830
  %v3832 = vsel %vm3780, %v3614, 0.0
  %v3833 = vadd.f32 %v3831, %v3832
  %v3834 = vsel %vm3780, %v3629, 0.0
  %v3835 = vadd.f32 %v3833, %v3834
  %v3836 = vsel %vm3780, %v3644, 0.0
  %v3837 = vadd.f32 %v3835, %v3836
  %v3838 = vsel %vm3780, %v3659, 0.0
  %v3839 = vadd.f32 %v3837, %v3838
  %v3840 = vsel %vm3780, %v3674, 0.0
  %v3841 = vadd.f32 %v3839, %v3840
  %v3842 = vsel %vm3780, %v3689, 0.0
  %v3843 = vadd.f32 %v3841, %v3842
  %v3844 = vsel %vm3780, %v3704, 0.0
  %v3845 = vadd.f32 %v3843, %v3844
  %v3846 = vsel %vm3780, %v3719, 0.0
  %v3847 = vadd.f32 %v3845, %v3846
  %v3848 = vsel %vm3780, %v3734, 0.0
  %v3849 = vadd.f32 %v3847, %v3848
  %v3850 = vsel %vm3780, %v3749, 0.0
  %v3851 = vadd.f32 %v3849, %v3850
  %v3852 = vsel %vm3780, %v3764, 0.0
  %v3853 = vadd.f32 %v3851, %v3852
  %vm3854 = vcmask 27648
  %v3855 = vsel %vm3854, %v3779, 0.0
  %v3856 = vadd.f32 %v3853, %v3855
  %v3857 = vrot.slane %v3856, 4
  %v3858 = vadd.f32 %v3856, %v3857
  %v3859 = vrot.slane %v3858, 2
  %v3860 = vadd.f32 %v3858, %v3859
  %v3861 = vrot.slane %v3860, 1
  %v3862 = vadd.f32 %v3860, %v3861
  %v3863 = vrcp.pop 300.0
  %v3864 = vmul.f32 300.0, %v3863
  %v3865 = vsub.f32 1.0, %v3864
  %v3866 = vmul.f32 %v3863, %v3865
  %v3867 = vadd.f32 %v3863, %v3866
  %vm3868 = vweird.f32 %v3863
  %v3869 = vsel %vm3868, %v3863, %v3867
  %v3870 = vmul.f32 %v3862, %v3869
  %v3871 = vsub.f32 %v3224, %v3870
  %v3872 = vsub.f32 %v3239, %v3870
  %v3873 = vsub.f32 %v3254, %v3870
  %v3874 = vsub.f32 %v3269, %v3870
  %v3875 = vsub.f32 %v3284, %v3870
  %v3876 = vsub.f32 %v3299, %v3870
  %v3877 = vsub.f32 %v3314, %v3870
  %v3878 = vsub.f32 %v3329, %v3870
  %v3879 = vsub.f32 %v3344, %v3870
  %v3880 = vsub.f32 %v3359, %v3870
  %v3881 = vsub.f32 %v3374, %v3870
  %v3882 = vsub.f32 %v3389, %v3870
  %v3883 = vsub.f32 %v3404, %v3870
  %v3884 = vsub.f32 %v3419, %v3870
  %v3885 = vsub.f32 %v3434, %v3870
  %v3886 = vsub.f32 %v3449, %v3870
  %v3887 = vsub.f32 %v3464, %v3870
  %v3888 = vsub.f32 %v3479, %v3870
  %v3889 = vsub.f32 %v3494, %v3870
  %v3890 = vsub.f32 %v3509, %v3870
  %v3891 = vsub.f32 %v3524, %v3870
  %v3892 = vsub.f32 %v3539, %v3870
  %v3893 = vsub.f32 %v3554, %v3870
  %v3894 = vsub.f32 %v3569, %v3870
  %v3895 = vsub.f32 %v3584, %v3870
  %v3896 = vsub.f32 %v3599, %v3870
  %v3897 = vsub.f32 %v3614, %v3870
  %v3898 = vsub.f32 %v3629, %v3870
  %v3899 = vsub.f32 %v3644, %v3870
  %v3900 = vsub.f32 %v3659, %v3870
  %v3901 = vsub.f32 %v3674, %v3870
  %v3902 = vsub.f32 %v3689, %v3870
  %v3903 = vsub.f32 %v3704, %v3870
  %v3904 = vsub.f32 %v3719, %v3870
  %v3905 = vsub.f32 %v3734, %v3870
  %v3906 = vsub.f32 %v3749, %v3870
  %v3907 = vsub.f32 %v3764, %v3870
  %v3908 = vsub.f32 %v3779, %v3870
  %v3909 = vmul.f32 %v3871, %v3871
  %v3910 = vmul.f32 %v3872, %v3872
  %v3911 = vmul.f32 %v3873, %v3873
  %v3912 = vmul.f32 %v3874, %v3874
  %v3913 = vmul.f32 %v3875, %v3875
  %v3914 = vmul.f32 %v3876, %v3876
  %v3915 = vmul.f32 %v3877, %v3877
  %v3916 = vmul.f32 %v3878, %v3878
  %v3917 = vmul.f32 %v3879, %v3879
  %v3918 = vmul.f32 %v3880, %v3880
  %v3919 = vmul.f32 %v3881, %v3881
  %v3920 = vmul.f32 %v3882, %v3882
  %v3921 = vmul.f32 %v3883, %v3883
  %v3922 = vmul.f32 %v3884, %v3884
  %v3923 = vmul.f32 %v3885, %v3885
  %v3924 = vmul.f32 %v3886, %v3886
  %v3925 = vmul.f32 %v3887, %v3887
  %v3926 = vmul.f32 %v3888, %v3888
  %v3927 = vmul.f32 %v3889, %v3889
  %v3928 = vmul.f32 %v3890, %v3890
  %v3929 = vmul.f32 %v3891, %v3891
  %v3930 = vmul.f32 %v3892, %v3892
  %v3931 = vmul.f32 %v3893, %v3893
  %v3932 = vmul.f32 %v3894, %v3894
  %v3933 = vmul.f32 %v3895, %v3895
  %v3934 = vmul.f32 %v3896, %v3896
  %v3935 = vmul.f32 %v3897, %v3897
  %v3936 = vmul.f32 %v3898, %v3898
  %v3937 = vmul.f32 %v3899, %v3899
  %v3938 = vmul.f32 %v3900, %v3900
  %v3939 = vmul.f32 %v3901, %v3901
  %v3940 = vmul.f32 %v3902, %v3902
  %v3941 = vmul.f32 %v3903, %v3903
  %v3942 = vmul.f32 %v3904, %v3904
  %v3943 = vmul.f32 %v3905, %v3905
  %v3944 = vmul.f32 %v3906, %v3906
  %v3945 = vmul.f32 %v3907, %v3907
  %v3946 = vmul.f32 %v3908, %v3908
  %v3947 = vsel %vm3780, %v3909, 0.0
  %v3948 = vsel %vm3780, %v3910, 0.0
  %v3949 = vadd.f32 %v3947, %v3948
  %v3950 = vsel %vm3780, %v3911, 0.0
  %v3951 = vadd.f32 %v3949, %v3950
  %v3952 = vsel %vm3780, %v3912, 0.0
  %v3953 = vadd.f32 %v3951, %v3952
  %v3954 = vsel %vm3780, %v3913, 0.0
  %v3955 = vadd.f32 %v3953, %v3954
  %v3956 = vsel %vm3780, %v3914, 0.0
  %v3957 = vadd.f32 %v3955, %v3956
  %v3958 = vsel %vm3780, %v3915, 0.0
  %v3959 = vadd.f32 %v3957, %v3958
  %v3960 = vsel %vm3780, %v3916, 0.0
  %v3961 = vadd.f32 %v3959, %v3960
  %v3962 = vsel %vm3780, %v3917, 0.0
  %v3963 = vadd.f32 %v3961, %v3962
  %v3964 = vsel %vm3780, %v3918, 0.0
  %v3965 = vadd.f32 %v3963, %v3964
  %v3966 = vsel %vm3780, %v3919, 0.0
  %v3967 = vadd.f32 %v3965, %v3966
  %v3968 = vsel %vm3780, %v3920, 0.0
  %v3969 = vadd.f32 %v3967, %v3968
  %v3970 = vsel %vm3780, %v3921, 0.0
  %v3971 = vadd.f32 %v3969, %v3970
  %v3972 = vsel %vm3780, %v3922, 0.0
  %v3973 = vadd.f32 %v3971, %v3972
  %v3974 = vsel %vm3780, %v3923, 0.0
  %v3975 = vadd.f32 %v3973, %v3974
  %v3976 = vsel %vm3780, %v3924, 0.0
  %v3977 = vadd.f32 %v3975, %v3976
  %v3978 = vsel %vm3780, %v3925, 0.0
  %v3979 = vadd.f32 %v3977, %v3978
  %v3980 = vsel %vm3780, %v3926, 0.0
  %v3981 = vadd.f32 %v3979, %v3980
  %v3982 = vsel %vm3780, %v3927, 0.0
  %v3983 = vadd.f32 %v3981, %v3982
  %v3984 = vsel %vm3780, %v3928, 0.0
  %v3985 = vadd.f32 %v3983, %v3984
  %v3986 = vsel %vm3780, %v3929, 0.0
  %v3987 = vadd.f32 %v3985, %v3986
  %v3988 = vsel %vm3780, %v3930, 0.0
  %v3989 = vadd.f32 %v3987, %v3988
  %v3990 = vsel %vm3780, %v3931, 0.0
  %v3991 = vadd.f32 %v3989, %v3990
  %v3992 = vsel %vm3780, %v3932, 0.0
  %v3993 = vadd.f32 %v3991, %v3992
  %v3994 = vsel %vm3780, %v3933, 0.0
  %v3995 = vadd.f32 %v3993, %v3994
  %v3996 = vsel %vm3780, %v3934, 0.0
  %v3997 = vadd.f32 %v3995, %v3996
  %v3998 = vsel %vm3780, %v3935, 0.0
  %v3999 = vadd.f32 %v3997, %v3998
  %v4000 = vsel %vm3780, %v3936, 0.0
  %v4001 = vadd.f32 %v3999, %v4000
  %v4002 = vsel %vm3780, %v3937, 0.0
  %v4003 = vadd.f32 %v4001, %v4002
  %v4004 = vsel %vm3780, %v3938, 0.0
  %v4005 = vadd.f32 %v4003, %v4004
  %v4006 = vsel %vm3780, %v3939, 0.0
  %v4007 = vadd.f32 %v4005, %v4006
  %v4008 = vsel %vm3780, %v3940, 0.0
  %v4009 = vadd.f32 %v4007, %v4008
  %v4010 = vsel %vm3780, %v3941, 0.0
  %v4011 = vadd.f32 %v4009, %v4010
  %v4012 = vsel %vm3780, %v3942, 0.0
  %v4013 = vadd.f32 %v4011, %v4012
  %v4014 = vsel %vm3780, %v3943, 0.0
  %v4015 = vadd.f32 %v4013, %v4014
  %v4016 = vsel %vm3780, %v3944, 0.0
  %v4017 = vadd.f32 %v4015, %v4016
  %v4018 = vsel %vm3780, %v3945, 0.0
  %v4019 = vadd.f32 %v4017, %v4018
  %v4020 = vsel %vm3854, %v3946, 0.0
  %v4021 = vadd.f32 %v4019, %v4020
  %v4022 = vrot.slane %v4021, 4
  %v4023 = vadd.f32 %v4021, %v4022
  %v4024 = vrot.slane %v4023, 2
  %v4025 = vadd.f32 %v4023, %v4024
  %v4026 = vrot.slane %v4025, 1
  %v4027 = vadd.f32 %v4025, %v4026
  %v4028 = vmul.f32 %v4027, %v3869
  %v4029 = vld [vmem:[%s9] sm:$0x1]
  %v4030 = vadd.f32 %v4028, 1e-05
  %v4031 = vrsqrt.pop %v4030
  %v4032 = vmul.f32 %v4031, %v4030
  %v4033 = vmul.f32 %v4032, %v4031
  %v4034 = vmul.f32 0.5, %v4033
  %v4035 = vsub.f32 1.5, %v4034
  %v4036 = vmul.f32 %v4031, %v4035
  %vm4037 = vweird.f32 %v4030
  %vm4038 = vweird.f32 %v4031
  %vm4039 = vmor %vm4037, %vm4038
  %v4040 = vsel %vm4039, %v4031, %v4036
  %v4041 = vmul.f32 %v4029, %v4040
  %v4042 = vld [vmem:[%s10] sm:$0x1]
  %v4043 = vmul.f32 %v3870, %v4041
  %v4044 = vsub.f32 %v4042, %v4043
  %v4045 = vld [vmem:[%s11] sm:$0x1]
  %v4046 = vsub.f32 %v4044, %v4045
  %v4048 = vperm.slane %v4041, 0
  %v4050 = vmul.f32 %v3224, %v4048
  %v4051 = vmul.f32 %v3239, %v4048
  %v4052 = vmul.f32 %v3254, %v4048
  %v4053 = vmul.f32 %v3269, %v4048
  %v4054 = vmul.f32 %v3284, %v4048
  %v4055 = vmul.f32 %v3299, %v4048
  %v4056 = vmul.f32 %v3314, %v4048
  %v4057 = vmul.f32 %v3329, %v4048
  %v4058 = vmul.f32 %v3344, %v4048
  %v4059 = vmul.f32 %v3359, %v4048
  %v4060 = vmul.f32 %v3374, %v4048
  %v4061 = vmul.f32 %v3389, %v4048
  %v4062 = vmul.f32 %v3404, %v4048
  %v4063 = vmul.f32 %v3419, %v4048
  %v4064 = vmul.f32 %v3434, %v4048
  %v4065 = vmul.f32 %v3449, %v4048
  %v4066 = vmul.f32 %v3464, %v4048
  %v4067 = vmul.f32 %v3479, %v4048
  %v4068 = vmul.f32 %v3494, %v4048
  %v4069 = vmul.f32 %v3509, %v4048
  %v4070 = vmul.f32 %v3524, %v4048
  %v4071 = vmul.f32 %v3539, %v4048
  %v4072 = vmul.f32 %v3554, %v4048
  %v4073 = vmul.f32 %v3569, %v4048
  %v4074 = vmul.f32 %v3584, %v4048
  %v4075 = vmul.f32 %v3599, %v4048
  %v4076 = vmul.f32 %v3614, %v4048
  %v4077 = vmul.f32 %v3629, %v4048
  %v4078 = vmul.f32 %v3644, %v4048
  %v4079 = vmul.f32 %v3659, %v4048
  %v4080 = vmul.f32 %v3674, %v4048
  %v4081 = vmul.f32 %v3689, %v4048
  %v4082 = vmul.f32 %v3704, %v4048
  %v4083 = vmul.f32 %v3719, %v4048
  %v4084 = vmul.f32 %v3734, %v4048
  %v4085 = vmul.f32 %v3749, %v4048
  %v4086 = vmul.f32 %v3764, %v4048
  %v4087 = vmul.f32 %v3779, %v4048
  %v4089 = vperm.slane %v4046, 0
  %v4091 = vadd.f32 %v4050, %v4089
  %v4092 = vadd.f32 %v4051, %v4089
  %v4093 = vadd.f32 %v4052, %v4089
  %v4094 = vadd.f32 %v4053, %v4089
  %v4095 = vadd.f32 %v4054, %v4089
  %v4096 = vadd.f32 %v4055, %v4089
  %v4097 = vadd.f32 %v4056, %v4089
  %v4098 = vadd.f32 %v4057, %v4089
  %v4099 = vadd.f32 %v4058, %v4089
  %v4100 = vadd.f32 %v4059, %v4089
  %v4101 = vadd.f32 %v4060, %v4089
  %v4102 = vadd.f32 %v4061, %v4089
  %v4103 = vadd.f32 %v4062, %v4089
  %v4104 = vadd.f32 %v4063, %v4089
  %v4105 = vadd.f32 %v4064, %v4089
  %v4106 = vadd.f32 %v4065, %v4089
  %v4107 = vadd.f32 %v4066, %v4089
  %v4108 = vadd.f32 %v4067, %v4089
  %v4109 = vadd.f32 %v4068, %v4089
  %v4110 = vadd.f32 %v4069, %v4089
  %v4111 = vadd.f32 %v4070, %v4089
  %v4112 = vadd.f32 %v4071, %v4089
  %v4113 = vadd.f32 %v4072, %v4089
  %v4114 = vadd.f32 %v4073, %v4089
  %v4115 = vadd.f32 %v4074, %v4089
  %v4116 = vadd.f32 %v4075, %v4089
  %v4117 = vadd.f32 %v4076, %v4089
  %v4118 = vadd.f32 %v4077, %v4089
  %v4119 = vadd.f32 %v4078, %v4089
  %v4120 = vadd.f32 %v4079, %v4089
  %v4121 = vadd.f32 %v4080, %v4089
  %v4122 = vadd.f32 %v4081, %v4089
  %v4123 = vadd.f32 %v4082, %v4089
  %v4124 = vadd.f32 %v4083, %v4089
  %v4125 = vadd.f32 %v4084, %v4089
  %v4126 = vadd.f32 %v4085, %v4089
  %v4127 = vadd.f32 %v4086, %v4089
  %v4128 = vadd.f32 %v4087, %v4089
  %v4129 = vmax.f32 %v4091, 0.0
  %v4130 = vmax.f32 %v4092, 0.0
  %v4131 = vmax.f32 %v4093, 0.0
  %v4132 = vmax.f32 %v4094, 0.0
  %v4133 = vmax.f32 %v4095, 0.0
  %v4134 = vmax.f32 %v4096, 0.0
  %v4135 = vmax.f32 %v4097, 0.0
  %v4136 = vmax.f32 %v4098, 0.0
  %v4137 = vmax.f32 %v4099, 0.0
  %v4138 = vmax.f32 %v4100, 0.0
  %v4139 = vmax.f32 %v4101, 0.0
  %v4140 = vmax.f32 %v4102, 0.0
  %v4141 = vmax.f32 %v4103, 0.0
  %v4142 = vmax.f32 %v4104, 0.0
  %v4143 = vmax.f32 %v4105, 0.0
  %v4144 = vmax.f32 %v4106, 0.0
  %v4145 = vmax.f32 %v4107, 0.0
  %v4146 = vmax.f32 %v4108, 0.0
  %v4147 = vmax.f32 %v4109, 0.0
  %v4148 = vmax.f32 %v4110, 0.0
  %v4149 = vmax.f32 %v4111, 0.0
  %v4150 = vmax.f32 %v4112, 0.0
  %v4151 = vmax.f32 %v4113, 0.0
  %v4152 = vmax.f32 %v4114, 0.0
  %v4153 = vmax.f32 %v4115, 0.0
  %v4154 = vmax.f32 %v4116, 0.0
  %v4155 = vmax.f32 %v4117, 0.0
  %v4156 = vmax.f32 %v4118, 0.0
  %v4157 = vmax.f32 %v4119, 0.0
  %v4158 = vmax.f32 %v4120, 0.0
  %v4159 = vmax.f32 %v4121, 0.0
  %v4160 = vmax.f32 %v4122, 0.0
  %v4161 = vmax.f32 %v4123, 0.0
  %v4162 = vmax.f32 %v4124, 0.0
  %v4163 = vmax.f32 %v4125, 0.0
  %v4164 = vmax.f32 %v4126, 0.0
  %v4165 = vmax.f32 %v4127, 0.0
  %v4166 = vmax.f32 %v4128, 0.0
  %v4167 = vsel %vm3780, %v4129, 0.0
  %4168 = vadd.xlane.f32.xlu0 %v4167
  %v4169 = vpop.xlane.xlu0 %4168
  %v4170 = vsel %vm3780, %v4130, 0.0
  %4171 = vadd.xlane.f32.xlu0 %v4170
  %v4172 = vpop.xlane.xlu0 %4171
  %v4173 = vsel %vm3780, %v4131, 0.0
  %4174 = vadd.xlane.f32.xlu0 %v4173
  %v4175 = vpop.xlane.xlu0 %4174
  %v4176 = vsel %vm3780, %v4132, 0.0
  %4177 = vadd.xlane.f32.xlu0 %v4176
  %v4178 = vpop.xlane.xlu0 %4177
  %v4179 = vsel %vm3780, %v4133, 0.0
  %4180 = vadd.xlane.f32.xlu0 %v4179
  %v4181 = vpop.xlane.xlu0 %4180
  %v4182 = vsel %vm3780, %v4134, 0.0
  %4183 = vadd.xlane.f32.xlu0 %v4182
  %v4184 = vpop.xlane.xlu0 %4183
  %v4185 = vsel %vm3780, %v4135, 0.0
  %4186 = vadd.xlane.f32.xlu0 %v4185
  %v4187 = vpop.xlane.xlu0 %4186
  %v4188 = vsel %vm3780, %v4136, 0.0
  %4189 = vadd.xlane.f32.xlu0 %v4188
  %v4190 = vpop.xlane.xlu0 %4189
  %v4191 = vsel %vm3780, %v4137, 0.0
  %4192 = vadd.xlane.f32.xlu0 %v4191
  %v4193 = vpop.xlane.xlu0 %4192
  %v4194 = vsel %vm3780, %v4138, 0.0
  %4195 = vadd.xlane.f32.xlu0 %v4194
  %v4196 = vpop.xlane.xlu0 %4195
  %v4197 = vsel %vm3780, %v4139, 0.0
  %4198 = vadd.xlane.f32.xlu0 %v4197
  %v4199 = vpop.xlane.xlu0 %4198
  %v4200 = vsel %vm3780, %v4140, 0.0
  %4201 = vadd.xlane.f32.xlu0 %v4200
  %v4202 = vpop.xlane.xlu0 %4201
  %v4203 = vsel %vm3780, %v4141, 0.0
  %4204 = vadd.xlane.f32.xlu0 %v4203
  %v4205 = vpop.xlane.xlu0 %4204
  %v4206 = vsel %vm3780, %v4142, 0.0
  %4207 = vadd.xlane.f32.xlu0 %v4206
  %v4208 = vpop.xlane.xlu0 %4207
  %v4209 = vsel %vm3780, %v4143, 0.0
  %4210 = vadd.xlane.f32.xlu0 %v4209
  %v4211 = vpop.xlane.xlu0 %4210
  %v4212 = vsel %vm3780, %v4144, 0.0
  %4213 = vadd.xlane.f32.xlu0 %v4212
  %v4214 = vpop.xlane.xlu0 %4213
  %v4215 = vsel %vm3780, %v4145, 0.0
  %4216 = vadd.xlane.f32.xlu0 %v4215
  %v4217 = vpop.xlane.xlu0 %4216
  %v4218 = vsel %vm3780, %v4146, 0.0
  %4219 = vadd.xlane.f32.xlu0 %v4218
  %v4220 = vpop.xlane.xlu0 %4219
  %v4221 = vsel %vm3780, %v4147, 0.0
  %4222 = vadd.xlane.f32.xlu0 %v4221
  %v4223 = vpop.xlane.xlu0 %4222
  %v4224 = vsel %vm3780, %v4148, 0.0
  %4225 = vadd.xlane.f32.xlu0 %v4224
  %v4226 = vpop.xlane.xlu0 %4225
  %v4227 = vsel %vm3780, %v4149, 0.0
  %4228 = vadd.xlane.f32.xlu0 %v4227
  %v4229 = vpop.xlane.xlu0 %4228
  %v4230 = vsel %vm3780, %v4150, 0.0
  %4231 = vadd.xlane.f32.xlu0 %v4230
  %v4232 = vpop.xlane.xlu0 %4231
  %v4233 = vsel %vm3780, %v4151, 0.0
  %4234 = vadd.xlane.f32.xlu0 %v4233
  %v4235 = vpop.xlane.xlu0 %4234
  %v4236 = vsel %vm3780, %v4152, 0.0
  %4237 = vadd.xlane.f32.xlu0 %v4236
  %v4238 = vpop.xlane.xlu0 %4237
  %v4239 = vsel %vm3780, %v4153, 0.0
  %4240 = vadd.xlane.f32.xlu0 %v4239
  %v4241 = vpop.xlane.xlu0 %4240
  %v4242 = vsel %vm3780, %v4154, 0.0
  %4243 = vadd.xlane.f32.xlu0 %v4242
  %v4244 = vpop.xlane.xlu0 %4243
  %v4245 = vsel %vm3780, %v4155, 0.0
  %4246 = vadd.xlane.f32.xlu0 %v4245
  %v4247 = vpop.xlane.xlu0 %4246
  %v4248 = vsel %vm3780, %v4156, 0.0
  %4249 = vadd.xlane.f32.xlu0 %v4248
  %v4250 = vpop.xlane.xlu0 %4249
  %v4251 = vsel %vm3780, %v4157, 0.0
  %4252 = vadd.xlane.f32.xlu0 %v4251
  %v4253 = vpop.xlane.xlu0 %4252
  %v4254 = vsel %vm3780, %v4158, 0.0
  %4255 = vadd.xlane.f32.xlu0 %v4254
  %v4256 = vpop.xlane.xlu0 %4255
  %v4257 = vsel %vm3780, %v4159, 0.0
  %4258 = vadd.xlane.f32.xlu0 %v4257
  %v4259 = vpop.xlane.xlu0 %4258
  %v4260 = vsel %vm3780, %v4160, 0.0
  %4261 = vadd.xlane.f32.xlu0 %v4260
  %v4262 = vpop.xlane.xlu0 %4261
  %v4263 = vsel %vm3780, %v4161, 0.0
  %4264 = vadd.xlane.f32.xlu0 %v4263
  %v4265 = vpop.xlane.xlu0 %4264
  %v4266 = vsel %vm3780, %v4162, 0.0
  %4267 = vadd.xlane.f32.xlu0 %v4266
  %v4268 = vpop.xlane.xlu0 %4267
  %v4269 = vsel %vm3780, %v4163, 0.0
  %4270 = vadd.xlane.f32.xlu0 %v4269
  %v4271 = vpop.xlane.xlu0 %4270
  %v4272 = vsel %vm3780, %v4164, 0.0
  %4273 = vadd.xlane.f32.xlu0 %v4272
  %v4274 = vpop.xlane.xlu0 %4273
  %v4275 = vsel %vm3780, %v4165, 0.0
  %4276 = vadd.xlane.f32.xlu0 %v4275
  %v4277 = vpop.xlane.xlu0 %4276
  %v4278 = vsel %vm3854, %v4166, 0.0
  %4279 = vadd.xlane.f32.xlu0 %v4278
  %v4280 = vpop.xlane.xlu0 %4279
  %v4281 = vadd.f32 %v4169, 1e-08
  %v4282 = vadd.f32 %v4172, 1e-08
  %v4283 = vadd.f32 %v4175, 1e-08
  %v4284 = vadd.f32 %v4178, 1e-08
  %v4285 = vadd.f32 %v4181, 1e-08
  %v4286 = vadd.f32 %v4184, 1e-08
  %v4287 = vadd.f32 %v4187, 1e-08
  %v4288 = vadd.f32 %v4190, 1e-08
  %v4289 = vadd.f32 %v4193, 1e-08
  %v4290 = vadd.f32 %v4196, 1e-08
  %v4291 = vadd.f32 %v4199, 1e-08
  %v4292 = vadd.f32 %v4202, 1e-08
  %v4293 = vadd.f32 %v4205, 1e-08
  %v4294 = vadd.f32 %v4208, 1e-08
  %v4295 = vadd.f32 %v4211, 1e-08
  %v4296 = vadd.f32 %v4214, 1e-08
  %v4297 = vadd.f32 %v4217, 1e-08
  %v4298 = vadd.f32 %v4220, 1e-08
  %v4299 = vadd.f32 %v4223, 1e-08
  %v4300 = vadd.f32 %v4226, 1e-08
  %v4301 = vadd.f32 %v4229, 1e-08
  %v4302 = vadd.f32 %v4232, 1e-08
  %v4303 = vadd.f32 %v4235, 1e-08
  %v4304 = vadd.f32 %v4238, 1e-08
  %v4305 = vadd.f32 %v4241, 1e-08
  %v4306 = vadd.f32 %v4244, 1e-08
  %v4307 = vadd.f32 %v4247, 1e-08
  %v4308 = vadd.f32 %v4250, 1e-08
  %v4309 = vadd.f32 %v4253, 1e-08
  %v4310 = vadd.f32 %v4256, 1e-08
  %v4311 = vadd.f32 %v4259, 1e-08
  %v4312 = vadd.f32 %v4262, 1e-08
  %v4313 = vadd.f32 %v4265, 1e-08
  %v4314 = vadd.f32 %v4268, 1e-08
  %v4315 = vadd.f32 %v4271, 1e-08
  %v4316 = vadd.f32 %v4274, 1e-08
  %v4317 = vadd.f32 %v4277, 1e-08
  %v4318 = vadd.f32 %v4280, 1e-08
  %v4319 = vrcp.pop %v4281
  %v4320 = vmul.f32 %v4281, %v4319
  %v4321 = vsub.f32 1.0, %v4320
  %v4322 = vmul.f32 %v4319, %v4321
  %v4323 = vadd.f32 %v4319, %v4322
  %vm4324 = vweird.f32 %v4281
  %vm4325 = vweird.f32 %v4319
  %vm4326 = vmor %vm4324, %vm4325
  %v4327 = vsel %vm4326, %v4319, %v4323
  %v4328 = vand.u32 2147483647, %v4281
  %vm4329 = vcmp.eq.f32.partialorder %v4328, 8.507059e+37
  %v4330 = vand.u32 %v4281, 2147483648
  %v4331 = vor.u32 1.1754944e-38, %v4330
  %v4332 = vsel %vm4329, %v4331, %v4327
  %v4333 = vmul.f32 %v4129, %v4332
  %v4334 = vrcp.pop %v4282
  %v4335 = vmul.f32 %v4282, %v4334
  %v4336 = vsub.f32 1.0, %v4335
  %v4337 = vmul.f32 %v4334, %v4336
  %v4338 = vadd.f32 %v4334, %v4337
  %vm4339 = vweird.f32 %v4282
  %vm4340 = vweird.f32 %v4334
  %vm4341 = vmor %vm4339, %vm4340
  %v4342 = vsel %vm4341, %v4334, %v4338
  %v4343 = vand.u32 2147483647, %v4282
  %vm4344 = vcmp.eq.f32.partialorder %v4343, 8.507059e+37
  %v4345 = vand.u32 %v4282, 2147483648
  %v4346 = vor.u32 1.1754944e-38, %v4345
  %v4347 = vsel %vm4344, %v4346, %v4342
  %v4348 = vmul.f32 %v4130, %v4347
  %v4349 = vrcp.pop %v4283
  %v4350 = vmul.f32 %v4283, %v4349
  %v4351 = vsub.f32 1.0, %v4350
  %v4352 = vmul.f32 %v4349, %v4351
  %v4353 = vadd.f32 %v4349, %v4352
  %vm4354 = vweird.f32 %v4283
  %vm4355 = vweird.f32 %v4349
  %vm4356 = vmor %vm4354, %vm4355
  %v4357 = vsel %vm4356, %v4349, %v4353
  %v4358 = vand.u32 2147483647, %v4283
  %vm4359 = vcmp.eq.f32.partialorder %v4358, 8.507059e+37
  %v4360 = vand.u32 %v4283, 2147483648
  %v4361 = vor.u32 1.1754944e-38, %v4360
  %v4362 = vsel %vm4359, %v4361, %v4357
  %v4363 = vmul.f32 %v4131, %v4362
  %v4364 = vrcp.pop %v4284
  %v4365 = vmul.f32 %v4284, %v4364
  %v4366 = vsub.f32 1.0, %v4365
  %v4367 = vmul.f32 %v4364, %v4366
  %v4368 = vadd.f32 %v4364, %v4367
  %vm4369 = vweird.f32 %v4284
  %vm4370 = vweird.f32 %v4364
  %vm4371 = vmor %vm4369, %vm4370
  %v4372 = vsel %vm4371, %v4364, %v4368
  %v4373 = vand.u32 2147483647, %v4284
  %vm4374 = vcmp.eq.f32.partialorder %v4373, 8.507059e+37
  %v4375 = vand.u32 %v4284, 2147483648
  %v4376 = vor.u32 1.1754944e-38, %v4375
  %v4377 = vsel %vm4374, %v4376, %v4372
  %v4378 = vmul.f32 %v4132, %v4377
  %v4379 = vrcp.pop %v4285
  %v4380 = vmul.f32 %v4285, %v4379
  %v4381 = vsub.f32 1.0, %v4380
  %v4382 = vmul.f32 %v4379, %v4381
  %v4383 = vadd.f32 %v4379, %v4382
  %vm4384 = vweird.f32 %v4285
  %vm4385 = vweird.f32 %v4379
  %vm4386 = vmor %vm4384, %vm4385
  %v4387 = vsel %vm4386, %v4379, %v4383
  %v4388 = vand.u32 2147483647, %v4285
  %vm4389 = vcmp.eq.f32.partialorder %v4388, 8.507059e+37
  %v4390 = vand.u32 %v4285, 2147483648
  %v4391 = vor.u32 1.1754944e-38, %v4390
  %v4392 = vsel %vm4389, %v4391, %v4387
  %v4393 = vmul.f32 %v4133, %v4392
  %v4394 = vrcp.pop %v4286
  %v4395 = vmul.f32 %v4286, %v4394
  %v4396 = vsub.f32 1.0, %v4395
  %v4397 = vmul.f32 %v4394, %v4396
  %v4398 = vadd.f32 %v4394, %v4397
  %vm4399 = vweird.f32 %v4286
  %vm4400 = vweird.f32 %v4394
  %vm4401 = vmor %vm4399, %vm4400
  %v4402 = vsel %vm4401, %v4394, %v4398
  %v4403 = vand.u32 2147483647, %v4286
  %vm4404 = vcmp.eq.f32.partialorder %v4403, 8.507059e+37
  %v4405 = vand.u32 %v4286, 2147483648
  %v4406 = vor.u32 1.1754944e-38, %v4405
  %v4407 = vsel %vm4404, %v4406, %v4402
  %v4408 = vmul.f32 %v4134, %v4407
  %v4409 = vrcp.pop %v4287
  %v4410 = vmul.f32 %v4287, %v4409
  %v4411 = vsub.f32 1.0, %v4410
  %v4412 = vmul.f32 %v4409, %v4411
  %v4413 = vadd.f32 %v4409, %v4412
  %vm4414 = vweird.f32 %v4287
  %vm4415 = vweird.f32 %v4409
  %vm4416 = vmor %vm4414, %vm4415
  %v4417 = vsel %vm4416, %v4409, %v4413
  %v4418 = vand.u32 2147483647, %v4287
  %vm4419 = vcmp.eq.f32.partialorder %v4418, 8.507059e+37
  %v4420 = vand.u32 %v4287, 2147483648
  %v4421 = vor.u32 1.1754944e-38, %v4420
  %v4422 = vsel %vm4419, %v4421, %v4417
  %v4423 = vmul.f32 %v4135, %v4422
  %v4424 = vrcp.pop %v4288
  %v4425 = vmul.f32 %v4288, %v4424
  %v4426 = vsub.f32 1.0, %v4425
  %v4427 = vmul.f32 %v4424, %v4426
  %v4428 = vadd.f32 %v4424, %v4427
  %vm4429 = vweird.f32 %v4288
  %vm4430 = vweird.f32 %v4424
  %vm4431 = vmor %vm4429, %vm4430
  %v4432 = vsel %vm4431, %v4424, %v4428
  %v4433 = vand.u32 2147483647, %v4288
  %vm4434 = vcmp.eq.f32.partialorder %v4433, 8.507059e+37
  %v4435 = vand.u32 %v4288, 2147483648
  %v4436 = vor.u32 1.1754944e-38, %v4435
  %v4437 = vsel %vm4434, %v4436, %v4432
  %v4438 = vmul.f32 %v4136, %v4437
  %v4439 = vrcp.pop %v4289
  %v4440 = vmul.f32 %v4289, %v4439
  %v4441 = vsub.f32 1.0, %v4440
  %v4442 = vmul.f32 %v4439, %v4441
  %v4443 = vadd.f32 %v4439, %v4442
  %vm4444 = vweird.f32 %v4289
  %vm4445 = vweird.f32 %v4439
  %vm4446 = vmor %vm4444, %vm4445
  %v4447 = vsel %vm4446, %v4439, %v4443
  %v4448 = vand.u32 2147483647, %v4289
  %vm4449 = vcmp.eq.f32.partialorder %v4448, 8.507059e+37
  %v4450 = vand.u32 %v4289, 2147483648
  %v4451 = vor.u32 1.1754944e-38, %v4450
  %v4452 = vsel %vm4449, %v4451, %v4447
  %v4453 = vmul.f32 %v4137, %v4452
  %v4454 = vrcp.pop %v4290
  %v4455 = vmul.f32 %v4290, %v4454
  %v4456 = vsub.f32 1.0, %v4455
  %v4457 = vmul.f32 %v4454, %v4456
  %v4458 = vadd.f32 %v4454, %v4457
  %vm4459 = vweird.f32 %v4290
  %vm4460 = vweird.f32 %v4454
  %vm4461 = vmor %vm4459, %vm4460
  %v4462 = vsel %vm4461, %v4454, %v4458
  %v4463 = vand.u32 2147483647, %v4290
  %vm4464 = vcmp.eq.f32.partialorder %v4463, 8.507059e+37
  %v4465 = vand.u32 %v4290, 2147483648
  %v4466 = vor.u32 1.1754944e-38, %v4465
  %v4467 = vsel %vm4464, %v4466, %v4462
  %v4468 = vmul.f32 %v4138, %v4467
  %v4469 = vrcp.pop %v4291
  %v4470 = vmul.f32 %v4291, %v4469
  %v4471 = vsub.f32 1.0, %v4470
  %v4472 = vmul.f32 %v4469, %v4471
  %v4473 = vadd.f32 %v4469, %v4472
  %vm4474 = vweird.f32 %v4291
  %vm4475 = vweird.f32 %v4469
  %vm4476 = vmor %vm4474, %vm4475
  %v4477 = vsel %vm4476, %v4469, %v4473
  %v4478 = vand.u32 2147483647, %v4291
  %vm4479 = vcmp.eq.f32.partialorder %v4478, 8.507059e+37
  %v4480 = vand.u32 %v4291, 2147483648
  %v4481 = vor.u32 1.1754944e-38, %v4480
  %v4482 = vsel %vm4479, %v4481, %v4477
  %v4483 = vmul.f32 %v4139, %v4482
  %v4484 = vrcp.pop %v4292
  %v4485 = vmul.f32 %v4292, %v4484
  %v4486 = vsub.f32 1.0, %v4485
  %v4487 = vmul.f32 %v4484, %v4486
  %v4488 = vadd.f32 %v4484, %v4487
  %vm4489 = vweird.f32 %v4292
  %vm4490 = vweird.f32 %v4484
  %vm4491 = vmor %vm4489, %vm4490
  %v4492 = vsel %vm4491, %v4484, %v4488
  %v4493 = vand.u32 2147483647, %v4292
  %vm4494 = vcmp.eq.f32.partialorder %v4493, 8.507059e+37
  %v4495 = vand.u32 %v4292, 2147483648
  %v4496 = vor.u32 1.1754944e-38, %v4495
  %v4497 = vsel %vm4494, %v4496, %v4492
  %v4498 = vmul.f32 %v4140, %v4497
  %v4499 = vrcp.pop %v4293
  %v4500 = vmul.f32 %v4293, %v4499
  %v4501 = vsub.f32 1.0, %v4500
  %v4502 = vmul.f32 %v4499, %v4501
  %v4503 = vadd.f32 %v4499, %v4502
  %vm4504 = vweird.f32 %v4293
  %vm4505 = vweird.f32 %v4499
  %vm4506 = vmor %vm4504, %vm4505
  %v4507 = vsel %vm4506, %v4499, %v4503
  %v4508 = vand.u32 2147483647, %v4293
  %vm4509 = vcmp.eq.f32.partialorder %v4508, 8.507059e+37
  %v4510 = vand.u32 %v4293, 2147483648
  %v4511 = vor.u32 1.1754944e-38, %v4510
  %v4512 = vsel %vm4509, %v4511, %v4507
  %v4513 = vmul.f32 %v4141, %v4512
  %v4514 = vrcp.pop %v4294
  %v4515 = vmul.f32 %v4294, %v4514
  %v4516 = vsub.f32 1.0, %v4515
  %v4517 = vmul.f32 %v4514, %v4516
  %v4518 = vadd.f32 %v4514, %v4517
  %vm4519 = vweird.f32 %v4294
  %vm4520 = vweird.f32 %v4514
  %vm4521 = vmor %vm4519, %vm4520
  %v4522 = vsel %vm4521, %v4514, %v4518
  %v4523 = vand.u32 2147483647, %v4294
  %vm4524 = vcmp.eq.f32.partialorder %v4523, 8.507059e+37
  %v4525 = vand.u32 %v4294, 2147483648
  %v4526 = vor.u32 1.1754944e-38, %v4525
  %v4527 = vsel %vm4524, %v4526, %v4522
  %v4528 = vmul.f32 %v4142, %v4527
  %v4529 = vrcp.pop %v4295
  %v4530 = vmul.f32 %v4295, %v4529
  %v4531 = vsub.f32 1.0, %v4530
  %v4532 = vmul.f32 %v4529, %v4531
  %v4533 = vadd.f32 %v4529, %v4532
  %vm4534 = vweird.f32 %v4295
  %vm4535 = vweird.f32 %v4529
  %vm4536 = vmor %vm4534, %vm4535
  %v4537 = vsel %vm4536, %v4529, %v4533
  %v4538 = vand.u32 2147483647, %v4295
  %vm4539 = vcmp.eq.f32.partialorder %v4538, 8.507059e+37
  %v4540 = vand.u32 %v4295, 2147483648
  %v4541 = vor.u32 1.1754944e-38, %v4540
  %v4542 = vsel %vm4539, %v4541, %v4537
  %v4543 = vmul.f32 %v4143, %v4542
  %v4544 = vrcp.pop %v4296
  %v4545 = vmul.f32 %v4296, %v4544
  %v4546 = vsub.f32 1.0, %v4545
  %v4547 = vmul.f32 %v4544, %v4546
  %v4548 = vadd.f32 %v4544, %v4547
  %vm4549 = vweird.f32 %v4296
  %vm4550 = vweird.f32 %v4544
  %vm4551 = vmor %vm4549, %vm4550
  %v4552 = vsel %vm4551, %v4544, %v4548
  %v4553 = vand.u32 2147483647, %v4296
  %vm4554 = vcmp.eq.f32.partialorder %v4553, 8.507059e+37
  %v4555 = vand.u32 %v4296, 2147483648
  %v4556 = vor.u32 1.1754944e-38, %v4555
  %v4557 = vsel %vm4554, %v4556, %v4552
  %v4558 = vmul.f32 %v4144, %v4557
  %v4559 = vrcp.pop %v4297
  %v4560 = vmul.f32 %v4297, %v4559
  %v4561 = vsub.f32 1.0, %v4560
  %v4562 = vmul.f32 %v4559, %v4561
  %v4563 = vadd.f32 %v4559, %v4562
  %vm4564 = vweird.f32 %v4297
  %vm4565 = vweird.f32 %v4559
  %vm4566 = vmor %vm4564, %vm4565
  %v4567 = vsel %vm4566, %v4559, %v4563
  %v4568 = vand.u32 2147483647, %v4297
  %vm4569 = vcmp.eq.f32.partialorder %v4568, 8.507059e+37
  %v4570 = vand.u32 %v4297, 2147483648
  %v4571 = vor.u32 1.1754944e-38, %v4570
  %v4572 = vsel %vm4569, %v4571, %v4567
  %v4573 = vmul.f32 %v4145, %v4572
  %v4574 = vrcp.pop %v4298
  %v4575 = vmul.f32 %v4298, %v4574
  %v4576 = vsub.f32 1.0, %v4575
  %v4577 = vmul.f32 %v4574, %v4576
  %v4578 = vadd.f32 %v4574, %v4577
  %vm4579 = vweird.f32 %v4298
  %vm4580 = vweird.f32 %v4574
  %vm4581 = vmor %vm4579, %vm4580
  %v4582 = vsel %vm4581, %v4574, %v4578
  %v4583 = vand.u32 2147483647, %v4298
  %vm4584 = vcmp.eq.f32.partialorder %v4583, 8.507059e+37
  %v4585 = vand.u32 %v4298, 2147483648
  %v4586 = vor.u32 1.1754944e-38, %v4585
  %v4587 = vsel %vm4584, %v4586, %v4582
  %v4588 = vmul.f32 %v4146, %v4587
  %v4589 = vrcp.pop %v4299
  %v4590 = vmul.f32 %v4299, %v4589
  %v4591 = vsub.f32 1.0, %v4590
  %v4592 = vmul.f32 %v4589, %v4591
  %v4593 = vadd.f32 %v4589, %v4592
  %vm4594 = vweird.f32 %v4299
  %vm4595 = vweird.f32 %v4589
  %vm4596 = vmor %vm4594, %vm4595
  %v4597 = vsel %vm4596, %v4589, %v4593
  %v4598 = vand.u32 2147483647, %v4299
  %vm4599 = vcmp.eq.f32.partialorder %v4598, 8.507059e+37
  %v4600 = vand.u32 %v4299, 2147483648
  %v4601 = vor.u32 1.1754944e-38, %v4600
  %v4602 = vsel %vm4599, %v4601, %v4597
  %v4603 = vmul.f32 %v4147, %v4602
  %v4604 = vrcp.pop %v4300
  %v4605 = vmul.f32 %v4300, %v4604
  %v4606 = vsub.f32 1.0, %v4605
  %v4607 = vmul.f32 %v4604, %v4606
  %v4608 = vadd.f32 %v4604, %v4607
  %vm4609 = vweird.f32 %v4300
  %vm4610 = vweird.f32 %v4604
  %vm4611 = vmor %vm4609, %vm4610
  %v4612 = vsel %vm4611, %v4604, %v4608
  %v4613 = vand.u32 2147483647, %v4300
  %vm4614 = vcmp.eq.f32.partialorder %v4613, 8.507059e+37
  %v4615 = vand.u32 %v4300, 2147483648
  %v4616 = vor.u32 1.1754944e-38, %v4615
  %v4617 = vsel %vm4614, %v4616, %v4612
  %v4618 = vmul.f32 %v4148, %v4617
  %v4619 = vrcp.pop %v4301
  %v4620 = vmul.f32 %v4301, %v4619
  %v4621 = vsub.f32 1.0, %v4620
  %v4622 = vmul.f32 %v4619, %v4621
  %v4623 = vadd.f32 %v4619, %v4622
  %vm4624 = vweird.f32 %v4301
  %vm4625 = vweird.f32 %v4619
  %vm4626 = vmor %vm4624, %vm4625
  %v4627 = vsel %vm4626, %v4619, %v4623
  %v4628 = vand.u32 2147483647, %v4301
  %vm4629 = vcmp.eq.f32.partialorder %v4628, 8.507059e+37
  %v4630 = vand.u32 %v4301, 2147483648
  %v4631 = vor.u32 1.1754944e-38, %v4630
  %v4632 = vsel %vm4629, %v4631, %v4627
  %v4633 = vmul.f32 %v4149, %v4632
  %v4634 = vrcp.pop %v4302
  %v4635 = vmul.f32 %v4302, %v4634
  %v4636 = vsub.f32 1.0, %v4635
  %v4637 = vmul.f32 %v4634, %v4636
  %v4638 = vadd.f32 %v4634, %v4637
  %vm4639 = vweird.f32 %v4302
  %vm4640 = vweird.f32 %v4634
  %vm4641 = vmor %vm4639, %vm4640
  %v4642 = vsel %vm4641, %v4634, %v4638
  %v4643 = vand.u32 2147483647, %v4302
  %vm4644 = vcmp.eq.f32.partialorder %v4643, 8.507059e+37
  %v4645 = vand.u32 %v4302, 2147483648
  %v4646 = vor.u32 1.1754944e-38, %v4645
  %v4647 = vsel %vm4644, %v4646, %v4642
  %v4648 = vmul.f32 %v4150, %v4647
  %v4649 = vrcp.pop %v4303
  %v4650 = vmul.f32 %v4303, %v4649
  %v4651 = vsub.f32 1.0, %v4650
  %v4652 = vmul.f32 %v4649, %v4651
  %v4653 = vadd.f32 %v4649, %v4652
  %vm4654 = vweird.f32 %v4303
  %vm4655 = vweird.f32 %v4649
  %vm4656 = vmor %vm4654, %vm4655
  %v4657 = vsel %vm4656, %v4649, %v4653
  %v4658 = vand.u32 2147483647, %v4303
  %vm4659 = vcmp.eq.f32.partialorder %v4658, 8.507059e+37
  %v4660 = vand.u32 %v4303, 2147483648
  %v4661 = vor.u32 1.1754944e-38, %v4660
  %v4662 = vsel %vm4659, %v4661, %v4657
  %v4663 = vmul.f32 %v4151, %v4662
  %v4664 = vrcp.pop %v4304
  %v4665 = vmul.f32 %v4304, %v4664
  %v4666 = vsub.f32 1.0, %v4665
  %v4667 = vmul.f32 %v4664, %v4666
  %v4668 = vadd.f32 %v4664, %v4667
  %vm4669 = vweird.f32 %v4304
  %vm4670 = vweird.f32 %v4664
  %vm4671 = vmor %vm4669, %vm4670
  %v4672 = vsel %vm4671, %v4664, %v4668
  %v4673 = vand.u32 2147483647, %v4304
  %vm4674 = vcmp.eq.f32.partialorder %v4673, 8.507059e+37
  %v4675 = vand.u32 %v4304, 2147483648
  %v4676 = vor.u32 1.1754944e-38, %v4675
  %v4677 = vsel %vm4674, %v4676, %v4672
  %v4678 = vmul.f32 %v4152, %v4677
  %v4679 = vrcp.pop %v4305
  %v4680 = vmul.f32 %v4305, %v4679
  %v4681 = vsub.f32 1.0, %v4680
  %v4682 = vmul.f32 %v4679, %v4681
  %v4683 = vadd.f32 %v4679, %v4682
  %vm4684 = vweird.f32 %v4305
  %vm4685 = vweird.f32 %v4679
  %vm4686 = vmor %vm4684, %vm4685
  %v4687 = vsel %vm4686, %v4679, %v4683
  %v4688 = vand.u32 2147483647, %v4305
  %vm4689 = vcmp.eq.f32.partialorder %v4688, 8.507059e+37
  %v4690 = vand.u32 %v4305, 2147483648
  %v4691 = vor.u32 1.1754944e-38, %v4690
  %v4692 = vsel %vm4689, %v4691, %v4687
  %v4693 = vmul.f32 %v4153, %v4692
  %v4694 = vrcp.pop %v4306
  %v4695 = vmul.f32 %v4306, %v4694
  %v4696 = vsub.f32 1.0, %v4695
  %v4697 = vmul.f32 %v4694, %v4696
  %v4698 = vadd.f32 %v4694, %v4697
  %vm4699 = vweird.f32 %v4306
  %vm4700 = vweird.f32 %v4694
  %vm4701 = vmor %vm4699, %vm4700
  %v4702 = vsel %vm4701, %v4694, %v4698
  %v4703 = vand.u32 2147483647, %v4306
  %vm4704 = vcmp.eq.f32.partialorder %v4703, 8.507059e+37
  %v4705 = vand.u32 %v4306, 2147483648
  %v4706 = vor.u32 1.1754944e-38, %v4705
  %v4707 = vsel %vm4704, %v4706, %v4702
  %v4708 = vmul.f32 %v4154, %v4707
  %v4709 = vrcp.pop %v4307
  %v4710 = vmul.f32 %v4307, %v4709
  %v4711 = vsub.f32 1.0, %v4710
  %v4712 = vmul.f32 %v4709, %v4711
  %v4713 = vadd.f32 %v4709, %v4712
  %vm4714 = vweird.f32 %v4307
  %vm4715 = vweird.f32 %v4709
  %vm4716 = vmor %vm4714, %vm4715
  %v4717 = vsel %vm4716, %v4709, %v4713
  %v4718 = vand.u32 2147483647, %v4307
  %vm4719 = vcmp.eq.f32.partialorder %v4718, 8.507059e+37
  %v4720 = vand.u32 %v4307, 2147483648
  %v4721 = vor.u32 1.1754944e-38, %v4720
  %v4722 = vsel %vm4719, %v4721, %v4717
  %v4723 = vmul.f32 %v4155, %v4722
  %v4724 = vrcp.pop %v4308
  %v4725 = vmul.f32 %v4308, %v4724
  %v4726 = vsub.f32 1.0, %v4725
  %v4727 = vmul.f32 %v4724, %v4726
  %v4728 = vadd.f32 %v4724, %v4727
  %vm4729 = vweird.f32 %v4308
  %vm4730 = vweird.f32 %v4724
  %vm4731 = vmor %vm4729, %vm4730
  %v4732 = vsel %vm4731, %v4724, %v4728
  %v4733 = vand.u32 2147483647, %v4308
  %vm4734 = vcmp.eq.f32.partialorder %v4733, 8.507059e+37
  %v4735 = vand.u32 %v4308, 2147483648
  %v4736 = vor.u32 1.1754944e-38, %v4735
  %v4737 = vsel %vm4734, %v4736, %v4732
  %v4738 = vmul.f32 %v4156, %v4737
  %v4739 = vrcp.pop %v4309
  %v4740 = vmul.f32 %v4309, %v4739
  %v4741 = vsub.f32 1.0, %v4740
  %v4742 = vmul.f32 %v4739, %v4741
  %v4743 = vadd.f32 %v4739, %v4742
  %vm4744 = vweird.f32 %v4309
  %vm4745 = vweird.f32 %v4739
  %vm4746 = vmor %vm4744, %vm4745
  %v4747 = vsel %vm4746, %v4739, %v4743
  %v4748 = vand.u32 2147483647, %v4309
  %vm4749 = vcmp.eq.f32.partialorder %v4748, 8.507059e+37
  %v4750 = vand.u32 %v4309, 2147483648
  %v4751 = vor.u32 1.1754944e-38, %v4750
  %v4752 = vsel %vm4749, %v4751, %v4747
  %v4753 = vmul.f32 %v4157, %v4752
  %v4754 = vrcp.pop %v4310
  %v4755 = vmul.f32 %v4310, %v4754
  %v4756 = vsub.f32 1.0, %v4755
  %v4757 = vmul.f32 %v4754, %v4756
  %v4758 = vadd.f32 %v4754, %v4757
  %vm4759 = vweird.f32 %v4310
  %vm4760 = vweird.f32 %v4754
  %vm4761 = vmor %vm4759, %vm4760
  %v4762 = vsel %vm4761, %v4754, %v4758
  %v4763 = vand.u32 2147483647, %v4310
  %vm4764 = vcmp.eq.f32.partialorder %v4763, 8.507059e+37
  %v4765 = vand.u32 %v4310, 2147483648
  %v4766 = vor.u32 1.1754944e-38, %v4765
  %v4767 = vsel %vm4764, %v4766, %v4762
  %v4768 = vmul.f32 %v4158, %v4767
  %v4769 = vrcp.pop %v4311
  %v4770 = vmul.f32 %v4311, %v4769
  %v4771 = vsub.f32 1.0, %v4770
  %v4772 = vmul.f32 %v4769, %v4771
  %v4773 = vadd.f32 %v4769, %v4772
  %vm4774 = vweird.f32 %v4311
  %vm4775 = vweird.f32 %v4769
  %vm4776 = vmor %vm4774, %vm4775
  %v4777 = vsel %vm4776, %v4769, %v4773
  %v4778 = vand.u32 2147483647, %v4311
  %vm4779 = vcmp.eq.f32.partialorder %v4778, 8.507059e+37
  %v4780 = vand.u32 %v4311, 2147483648
  %v4781 = vor.u32 1.1754944e-38, %v4780
  %v4782 = vsel %vm4779, %v4781, %v4777
  %v4783 = vmul.f32 %v4159, %v4782
  %v4784 = vrcp.pop %v4312
  %v4785 = vmul.f32 %v4312, %v4784
  %v4786 = vsub.f32 1.0, %v4785
  %v4787 = vmul.f32 %v4784, %v4786
  %v4788 = vadd.f32 %v4784, %v4787
  %vm4789 = vweird.f32 %v4312
  %vm4790 = vweird.f32 %v4784
  %vm4791 = vmor %vm4789, %vm4790
  %v4792 = vsel %vm4791, %v4784, %v4788
  %v4793 = vand.u32 2147483647, %v4312
  %vm4794 = vcmp.eq.f32.partialorder %v4793, 8.507059e+37
  %v4795 = vand.u32 %v4312, 2147483648
  %v4796 = vor.u32 1.1754944e-38, %v4795
  %v4797 = vsel %vm4794, %v4796, %v4792
  %v4798 = vmul.f32 %v4160, %v4797
  %v4799 = vrcp.pop %v4313
  %v4800 = vmul.f32 %v4313, %v4799
  %v4801 = vsub.f32 1.0, %v4800
  %v4802 = vmul.f32 %v4799, %v4801
  %v4803 = vadd.f32 %v4799, %v4802
  %vm4804 = vweird.f32 %v4313
  %vm4805 = vweird.f32 %v4799
  %vm4806 = vmor %vm4804, %vm4805
  %v4807 = vsel %vm4806, %v4799, %v4803
  %v4808 = vand.u32 2147483647, %v4313
  %vm4809 = vcmp.eq.f32.partialorder %v4808, 8.507059e+37
  %v4810 = vand.u32 %v4313, 2147483648
  %v4811 = vor.u32 1.1754944e-38, %v4810
  %v4812 = vsel %vm4809, %v4811, %v4807
  %v4813 = vmul.f32 %v4161, %v4812
  %v4814 = vrcp.pop %v4314
  %v4815 = vmul.f32 %v4314, %v4814
  %v4816 = vsub.f32 1.0, %v4815
  %v4817 = vmul.f32 %v4814, %v4816
  %v4818 = vadd.f32 %v4814, %v4817
  %vm4819 = vweird.f32 %v4314
  %vm4820 = vweird.f32 %v4814
  %vm4821 = vmor %vm4819, %vm4820
  %v4822 = vsel %vm4821, %v4814, %v4818
  %v4823 = vand.u32 2147483647, %v4314
  %vm4824 = vcmp.eq.f32.partialorder %v4823, 8.507059e+37
  %v4825 = vand.u32 %v4314, 2147483648
  %v4826 = vor.u32 1.1754944e-38, %v4825
  %v4827 = vsel %vm4824, %v4826, %v4822
  %v4828 = vmul.f32 %v4162, %v4827
  %v4829 = vrcp.pop %v4315
  %v4830 = vmul.f32 %v4315, %v4829
  %v4831 = vsub.f32 1.0, %v4830
  %v4832 = vmul.f32 %v4829, %v4831
  %v4833 = vadd.f32 %v4829, %v4832
  %vm4834 = vweird.f32 %v4315
  %vm4835 = vweird.f32 %v4829
  %vm4836 = vmor %vm4834, %vm4835
  %v4837 = vsel %vm4836, %v4829, %v4833
  %v4838 = vand.u32 2147483647, %v4315
  %vm4839 = vcmp.eq.f32.partialorder %v4838, 8.507059e+37
  %v4840 = vand.u32 %v4315, 2147483648
  %v4841 = vor.u32 1.1754944e-38, %v4840
  %v4842 = vsel %vm4839, %v4841, %v4837
  %v4843 = vmul.f32 %v4163, %v4842
  %v4844 = vrcp.pop %v4316
  %v4845 = vmul.f32 %v4316, %v4844
  %v4846 = vsub.f32 1.0, %v4845
  %v4847 = vmul.f32 %v4844, %v4846
  %v4848 = vadd.f32 %v4844, %v4847
  %vm4849 = vweird.f32 %v4316
  %vm4850 = vweird.f32 %v4844
  %vm4851 = vmor %vm4849, %vm4850
  %v4852 = vsel %vm4851, %v4844, %v4848
  %v4853 = vand.u32 2147483647, %v4316
  %vm4854 = vcmp.eq.f32.partialorder %v4853, 8.507059e+37
  %v4855 = vand.u32 %v4316, 2147483648
  %v4856 = vor.u32 1.1754944e-38, %v4855
  %v4857 = vsel %vm4854, %v4856, %v4852
  %v4858 = vmul.f32 %v4164, %v4857
  %v4859 = vrcp.pop %v4317
  %v4860 = vmul.f32 %v4317, %v4859
  %v4861 = vsub.f32 1.0, %v4860
  %v4862 = vmul.f32 %v4859, %v4861
  %v4863 = vadd.f32 %v4859, %v4862
  %vm4864 = vweird.f32 %v4317
  %vm4865 = vweird.f32 %v4859
  %vm4866 = vmor %vm4864, %vm4865
  %v4867 = vsel %vm4866, %v4859, %v4863
  %v4868 = vand.u32 2147483647, %v4317
  %vm4869 = vcmp.eq.f32.partialorder %v4868, 8.507059e+37
  %v4870 = vand.u32 %v4317, 2147483648
  %v4871 = vor.u32 1.1754944e-38, %v4870
  %v4872 = vsel %vm4869, %v4871, %v4867
  %v4873 = vmul.f32 %v4165, %v4872
  %v4874 = vrcp.pop %v4318
  %v4875 = vmul.f32 %v4318, %v4874
  %v4876 = vsub.f32 1.0, %v4875
  %v4877 = vmul.f32 %v4874, %v4876
  %v4878 = vadd.f32 %v4874, %v4877
  %vm4879 = vweird.f32 %v4318
  %vm4880 = vweird.f32 %v4874
  %vm4881 = vmor %vm4879, %vm4880
  %v4882 = vsel %vm4881, %v4874, %v4878
  %v4883 = vand.u32 2147483647, %v4318
  %vm4884 = vcmp.eq.f32.partialorder %v4883, 8.507059e+37
  %v4885 = vand.u32 %v4318, 2147483648
  %v4886 = vor.u32 1.1754944e-38, %v4885
  %v4887 = vsel %vm4884, %v4886, %v4882
  %v4888 = vmul.f32 %v4166, %v4887
  %4889 = vst.msk [vmem:[%s13] sm:$0xff] %vm3780, %v4333
  %4890 = vst.msk [vmem:[%s13 + $0x8] sm:$0xff] %vm3780, %v4348
  %4891 = vst.msk [vmem:[%s13 + $0x10] sm:$0xff] %vm3780, %v4363
  %4892 = vst.msk [vmem:[%s13 + $0x18] sm:$0xff] %vm3780, %v4378
  %4893 = vst.msk [vmem:[%s13 + $0x20] sm:$0xff] %vm3780, %v4393
  %4894 = vst.msk [vmem:[%s13 + $0x28] sm:$0xff] %vm3780, %v4408
  %4895 = vst.msk [vmem:[%s13 + $0x30] sm:$0xff] %vm3780, %v4423
  %4896 = vst.msk [vmem:[%s13 + $0x38] sm:$0xff] %vm3780, %v4438
  %4897 = vst.msk [vmem:[%s13 + $0x40] sm:$0xff] %vm3780, %v4453
  %4898 = vst.msk [vmem:[%s13 + $0x48] sm:$0xff] %vm3780, %v4468
  %4899 = vst.msk [vmem:[%s13 + $0x50] sm:$0xff] %vm3780, %v4483
  %4900 = vst.msk [vmem:[%s13 + $0x58] sm:$0xff] %vm3780, %v4498
  %4901 = vst.msk [vmem:[%s13 + $0x60] sm:$0xff] %vm3780, %v4513
  %4902 = vst.msk [vmem:[%s13 + $0x68] sm:$0xff] %vm3780, %v4528
  %4903 = vst.msk [vmem:[%s13 + $0x70] sm:$0xff] %vm3780, %v4543
  %4904 = vst.msk [vmem:[%s13 + $0x78] sm:$0xff] %vm3780, %v4558
  %4905 = vst.msk [vmem:[%s13 + $0x80] sm:$0xff] %vm3780, %v4573
  %4906 = vst.msk [vmem:[%s13 + $0x88] sm:$0xff] %vm3780, %v4588
  %4907 = vst.msk [vmem:[%s13 + $0x90] sm:$0xff] %vm3780, %v4603
  %4908 = vst.msk [vmem:[%s13 + $0x98] sm:$0xff] %vm3780, %v4618
  %4909 = vst.msk [vmem:[%s13 + $0xa0] sm:$0xff] %vm3780, %v4633
  %4910 = vst.msk [vmem:[%s13 + $0xa8] sm:$0xff] %vm3780, %v4648
  %4911 = vst.msk [vmem:[%s13 + $0xb0] sm:$0xff] %vm3780, %v4663
  %4912 = vst.msk [vmem:[%s13 + $0xb8] sm:$0xff] %vm3780, %v4678
  %4913 = vst.msk [vmem:[%s13 + $0xc0] sm:$0xff] %vm3780, %v4693
  %4914 = vst.msk [vmem:[%s13 + $0xc8] sm:$0xff] %vm3780, %v4708
  %4915 = vst.msk [vmem:[%s13 + $0xd0] sm:$0xff] %vm3780, %v4723
  %4916 = vst.msk [vmem:[%s13 + $0xd8] sm:$0xff] %vm3780, %v4738
  %4917 = vst.msk [vmem:[%s13 + $0xe0] sm:$0xff] %vm3780, %v4753
  %4918 = vst.msk [vmem:[%s13 + $0xe8] sm:$0xff] %vm3780, %v4768
  %4919 = vst.msk [vmem:[%s13 + $0xf0] sm:$0xff] %vm3780, %v4783
  %4920 = vst.msk [vmem:[%s13 + $0xf8] sm:$0xff] %vm3780, %v4798
  %4921 = vst.msk [vmem:[%s13 + $0x100] sm:$0xff] %vm3780, %v4813
  %4922 = vst.msk [vmem:[%s13 + $0x108] sm:$0xff] %vm3780, %v4828
  %4923 = vst.msk [vmem:[%s13 + $0x110] sm:$0xff] %vm3780, %v4843
  %4924 = vst.msk [vmem:[%s13 + $0x118] sm:$0xff] %vm3780, %v4858
  %4925 = vst.msk [vmem:[%s13 + $0x120] sm:$0xff] %vm3780, %v4873
  %4926 = vst.msk [vmem:[%s13 + $0x128] sm:$0xf] %vm3854, %v4888
  %v4927 = vld [vmem:[%s12] sm:$0xf]
  %v4929 = vsel %vm3780, %v4333, 0
  %v4932 = vsel %vm3780, %v4348, 0
  %v4935 = vsel %vm3780, %v4363, 0
  %v4938 = vsel %vm3780, %v4378, 0
  %v4941 = vsel %vm3780, %v4393, 0
  %v4944 = vsel %vm3780, %v4408, 0
  %v4947 = vsel %vm3780, %v4423, 0
  %v4950 = vsel %vm3780, %v4438, 0
  %v4953 = vsel %vm3780, %v4453, 0
  %v4956 = vsel %vm3780, %v4468, 0
  %v4959 = vsel %vm3780, %v4483, 0
  %v4962 = vsel %vm3780, %v4498, 0
  %v4965 = vsel %vm3780, %v4513, 0
  %v4968 = vsel %vm3780, %v4528, 0
  %v4971 = vsel %vm3780, %v4543, 0
  %v4974 = vsel %vm3780, %v4558, 0
  %v4977 = vsel %vm3780, %v4573, 0
  %v4980 = vsel %vm3780, %v4588, 0
  %v4983 = vsel %vm3780, %v4603, 0
  %v4986 = vsel %vm3780, %v4618, 0
  %v4989 = vsel %vm3780, %v4633, 0
  %v4992 = vsel %vm3780, %v4648, 0
  %v4995 = vsel %vm3780, %v4663, 0
  %v4998 = vsel %vm3780, %v4678, 0
  %v5001 = vsel %vm3780, %v4693, 0
  %v5004 = vsel %vm3780, %v4708, 0
  %v5007 = vsel %vm3780, %v4723, 0
  %v5010 = vsel %vm3780, %v4738, 0
  %v5013 = vsel %vm3780, %v4753, 0
  %v5016 = vsel %vm3780, %v4768, 0
  %v5019 = vsel %vm3780, %v4783, 0
  %v5022 = vsel %vm3780, %v4798, 0
  %v5025 = vsel %vm3780, %v4813, 0
  %v5028 = vsel %vm3780, %v4828, 0
  %v5031 = vsel %vm3780, %v4843, 0
  %v5034 = vsel %vm3780, %v4858, 0
  %v5037 = vsel %vm3780, %v4873, 0
  %v5040 = vsel %vm3780, %v4888, 0
  %v5043 = vsel %vm2032, %v4927, 0
  %5045 = vmatpush.msra.mxu0 0.0
  %5046 = vmatpush.msra.mxu0 0.0
  %5047 = vmatpush.msra.mxu0 0.0
  %5048 = vmatpush.msra.mxu0 0.0
  %5049 = vmatpush.msra.mxu0 0.0
  %5050 = vmatpush.msra.mxu0 0.0
  %5051 = vmatpush.msra.mxu0 0.0
  %5052 = vmatpush.msra.mxu0 0.0
  %5053 = vmatpush.msra.mxu0 0.0
  %5054 = vmatpush.msra.mxu0 0.0
  %5055 = vmatpush.msra.mxu0 0.0
  %5056 = vmatpush.msra.mxu0 0.0
  %5057 = vmatpush.msra.mxu0 0.0
  %5058 = vmatpush.msra.mxu0 0.0
  %5059 = vmatpush.msra.mxu0 0.0
  %5060 = vmatpush.msra.mxu0 %v5043
  %5061 = vmatmul.f32.gmra.mxu0 %v4929
  %v5062 = vpop.f32.mrf.mxu0
  %v5063 = vadd.f32 0.0, %v5062
  %5064 = vmatmul.f32.gmra.mxu0 %v4932
  %v5065 = vpop.f32.mrf.mxu0
  %v5066 = vadd.f32 0.0, %v5065
  %5067 = vmatmul.f32.gmra.mxu0 %v4935
  %v5068 = vpop.f32.mrf.mxu0
  %v5069 = vadd.f32 0.0, %v5068
  %5070 = vmatmul.f32.gmra.mxu0 %v4938
  %v5071 = vpop.f32.mrf.mxu0
  %v5072 = vadd.f32 0.0, %v5071
  %5073 = vmatmul.f32.gmra.mxu0 %v4941
  %v5074 = vpop.f32.mrf.mxu0
  %v5075 = vadd.f32 0.0, %v5074
  %5076 = vmatmul.f32.gmra.mxu0 %v4944
  %v5077 = vpop.f32.mrf.mxu0
  %v5078 = vadd.f32 0.0, %v5077
  %5079 = vmatmul.f32.gmra.mxu0 %v4947
  %v5080 = vpop.f32.mrf.mxu0
  %v5081 = vadd.f32 0.0, %v5080
  %5082 = vmatmul.f32.gmra.mxu0 %v4950
  %v5083 = vpop.f32.mrf.mxu0
  %v5084 = vadd.f32 0.0, %v5083
  %5085 = vmatmul.f32.gmra.mxu0 %v4953
  %v5086 = vpop.f32.mrf.mxu0
  %v5087 = vadd.f32 0.0, %v5086
  %5088 = vmatmul.f32.gmra.mxu0 %v4956
  %v5089 = vpop.f32.mrf.mxu0
  %v5090 = vadd.f32 0.0, %v5089
  %5091 = vmatmul.f32.gmra.mxu0 %v4959
  %v5092 = vpop.f32.mrf.mxu0
  %v5093 = vadd.f32 0.0, %v5092
  %5094 = vmatmul.f32.gmra.mxu0 %v4962
  %v5095 = vpop.f32.mrf.mxu0
  %v5096 = vadd.f32 0.0, %v5095
  %5097 = vmatmul.f32.gmra.mxu0 %v4965
  %v5098 = vpop.f32.mrf.mxu0
  %v5099 = vadd.f32 0.0, %v5098
  %5100 = vmatmul.f32.gmra.mxu0 %v4968
  %v5101 = vpop.f32.mrf.mxu0
  %v5102 = vadd.f32 0.0, %v5101
  %5103 = vmatmul.f32.gmra.mxu0 %v4971
  %v5104 = vpop.f32.mrf.mxu0
  %v5105 = vadd.f32 0.0, %v5104
  %5106 = vmatmul.f32.gmra.mxu0 %v4974
  %v5107 = vpop.f32.mrf.mxu0
  %v5108 = vadd.f32 0.0, %v5107
  %5109 = vmatmul.f32.gmra.mxu0 %v4977
  %v5110 = vpop.f32.mrf.mxu0
  %v5111 = vadd.f32 0.0, %v5110
  %5112 = vmatmul.f32.gmra.mxu0 %v4980
  %v5113 = vpop.f32.mrf.mxu0
  %v5114 = vadd.f32 0.0, %v5113
  %5115 = vmatmul.f32.gmra.mxu0 %v4983
  %v5116 = vpop.f32.mrf.mxu0
  %v5117 = vadd.f32 0.0, %v5116
  %5118 = vmatmul.f32.gmra.mxu0 %v4986
  %v5119 = vpop.f32.mrf.mxu0
  %v5120 = vadd.f32 0.0, %v5119
  %5121 = vmatmul.f32.gmra.mxu0 %v4989
  %v5122 = vpop.f32.mrf.mxu0
  %v5123 = vadd.f32 0.0, %v5122
  %5124 = vmatmul.f32.gmra.mxu0 %v4992
  %v5125 = vpop.f32.mrf.mxu0
  %v5126 = vadd.f32 0.0, %v5125
  %5127 = vmatmul.f32.gmra.mxu0 %v4995
  %v5128 = vpop.f32.mrf.mxu0
  %v5129 = vadd.f32 0.0, %v5128
  %5130 = vmatmul.f32.gmra.mxu0 %v4998
  %v5131 = vpop.f32.mrf.mxu0
  %v5132 = vadd.f32 0.0, %v5131
  %5133 = vmatmul.f32.gmra.mxu0 %v5001
  %v5134 = vpop.f32.mrf.mxu0
  %v5135 = vadd.f32 0.0, %v5134
  %5136 = vmatmul.f32.gmra.mxu0 %v5004
  %v5137 = vpop.f32.mrf.mxu0
  %v5138 = vadd.f32 0.0, %v5137
  %5139 = vmatmul.f32.gmra.mxu0 %v5007
  %v5140 = vpop.f32.mrf.mxu0
  %v5141 = vadd.f32 0.0, %v5140
  %5142 = vmatmul.f32.gmra.mxu0 %v5010
  %v5143 = vpop.f32.mrf.mxu0
  %v5144 = vadd.f32 0.0, %v5143
  %5145 = vmatmul.f32.gmra.mxu0 %v5013
  %v5146 = vpop.f32.mrf.mxu0
  %v5147 = vadd.f32 0.0, %v5146
  %5148 = vmatmul.f32.gmra.mxu0 %v5016
  %v5149 = vpop.f32.mrf.mxu0
  %v5150 = vadd.f32 0.0, %v5149
  %5151 = vmatmul.f32.gmra.mxu0 %v5019
  %v5152 = vpop.f32.mrf.mxu0
  %v5153 = vadd.f32 0.0, %v5152
  %5154 = vmatmul.f32.gmra.mxu0 %v5022
  %v5155 = vpop.f32.mrf.mxu0
  %v5156 = vadd.f32 0.0, %v5155
  %5157 = vmatmul.f32.gmra.mxu0 %v5025
  %v5158 = vpop.f32.mrf.mxu0
  %v5159 = vadd.f32 0.0, %v5158
  %5160 = vmatmul.f32.gmra.mxu0 %v5028
  %v5161 = vpop.f32.mrf.mxu0
  %v5162 = vadd.f32 0.0, %v5161
  %5163 = vmatmul.f32.gmra.mxu0 %v5031
  %v5164 = vpop.f32.mrf.mxu0
  %v5165 = vadd.f32 0.0, %v5164
  %5166 = vmatmul.f32.gmra.mxu0 %v5034
  %v5167 = vpop.f32.mrf.mxu0
  %v5168 = vadd.f32 0.0, %v5167
  %5169 = vmatmul.f32.gmra.mxu0 %v5037
  %v5170 = vpop.f32.mrf.mxu0
  %v5171 = vadd.f32 0.0, %v5170
  %5172 = vmatmul.f32.gmra.mxu0 %v5040
  %v5173 = vpop.f32.mrf.mxu0
  %v5174 = vadd.f32 0.0, %v5173
  %5175 = vdwg.mxu0
  %5176 = vst.msk [vmem:[%s14] sm:$0xff] %vm124, %v5063
  %5177 = vst.msk [vmem:[%s14 + $0x8] sm:$0xff] %vm124, %v5066
  %5178 = vst.msk [vmem:[%s14 + $0x10] sm:$0xff] %vm124, %v5069
  %5179 = vst.msk [vmem:[%s14 + $0x18] sm:$0xff] %vm124, %v5072
  %5180 = vst.msk [vmem:[%s14 + $0x20] sm:$0xff] %vm124, %v5075
  %5181 = vst.msk [vmem:[%s14 + $0x28] sm:$0xff] %vm124, %v5078
  %5182 = vst.msk [vmem:[%s14 + $0x30] sm:$0xff] %vm124, %v5081
  %5183 = vst.msk [vmem:[%s14 + $0x38] sm:$0xff] %vm124, %v5084
  %5184 = vst.msk [vmem:[%s14 + $0x40] sm:$0xff] %vm124, %v5087
  %5185 = vst.msk [vmem:[%s14 + $0x48] sm:$0xff] %vm124, %v5090
  %5186 = vst.msk [vmem:[%s14 + $0x50] sm:$0xff] %vm124, %v5093
  %5187 = vst.msk [vmem:[%s14 + $0x58] sm:$0xff] %vm124, %v5096
  %5188 = vst.msk [vmem:[%s14 + $0x60] sm:$0xff] %vm124, %v5099
  %5189 = vst.msk [vmem:[%s14 + $0x68] sm:$0xff] %vm124, %v5102
  %5190 = vst.msk [vmem:[%s14 + $0x70] sm:$0xff] %vm124, %v5105
  %5191 = vst.msk [vmem:[%s14 + $0x78] sm:$0xff] %vm124, %v5108
  %5192 = vst.msk [vmem:[%s14 + $0x80] sm:$0xff] %vm124, %v5111
  %5193 = vst.msk [vmem:[%s14 + $0x88] sm:$0xff] %vm124, %v5114
  %5194 = vst.msk [vmem:[%s14 + $0x90] sm:$0xff] %vm124, %v5117
  %5195 = vst.msk [vmem:[%s14 + $0x98] sm:$0xff] %vm124, %v5120
  %5196 = vst.msk [vmem:[%s14 + $0xa0] sm:$0xff] %vm124, %v5123
  %5197 = vst.msk [vmem:[%s14 + $0xa8] sm:$0xff] %vm124, %v5126
  %5198 = vst.msk [vmem:[%s14 + $0xb0] sm:$0xff] %vm124, %v5129
  %5199 = vst.msk [vmem:[%s14 + $0xb8] sm:$0xff] %vm124, %v5132
  %5200 = vst.msk [vmem:[%s14 + $0xc0] sm:$0xff] %vm124, %v5135
  %5201 = vst.msk [vmem:[%s14 + $0xc8] sm:$0xff] %vm124, %v5138
  %5202 = vst.msk [vmem:[%s14 + $0xd0] sm:$0xff] %vm124, %v5141
  %5203 = vst.msk [vmem:[%s14 + $0xd8] sm:$0xff] %vm124, %v5144
  %5204 = vst.msk [vmem:[%s14 + $0xe0] sm:$0xff] %vm124, %v5147
  %5205 = vst.msk [vmem:[%s14 + $0xe8] sm:$0xff] %vm124, %v5150
  %5206 = vst.msk [vmem:[%s14 + $0xf0] sm:$0xff] %vm124, %v5153
  %5207 = vst.msk [vmem:[%s14 + $0xf8] sm:$0xff] %vm124, %v5156
  %5208 = vst.msk [vmem:[%s14 + $0x100] sm:$0xff] %vm124, %v5159
  %5209 = vst.msk [vmem:[%s14 + $0x108] sm:$0xff] %vm124, %v5162
  %5210 = vst.msk [vmem:[%s14 + $0x110] sm:$0xff] %vm124, %v5165
  %5211 = vst.msk [vmem:[%s14 + $0x118] sm:$0xff] %vm124, %v5168
  %5212 = vst.msk [vmem:[%s14 + $0x120] sm:$0xff] %vm124, %v5171
  %vm5213 = vcmask 257024
  %5214 = vst.msk [vmem:[%s14 + $0x128] sm:$0xf] %vm5213, %v5174
  // Predicated region
  $region54: #{autoencoder_forward.1} parent=0 // pred_check
    _
  $region55: #{autoencoder_forward.1} parent=0 // pred_check_branch
    %5216 = sbr.rel (0) target = $region57
  $region56: #{autoencoder_forward.1} parent=0 // pred_region
    _
  $region57: #{autoencoder_forward.1} parent=0 // pred_fallthru
    _
  // Predicated region
  $region58: #{autoencoder_forward.1} parent=0 // pred_check
    _
  $region59: #{autoencoder_forward.1} parent=0 // pred_check_branch
    %5218 = sbr.rel (0) target = $region61
  $region60: #{autoencoder_forward.1} parent=0 // pred_region
    _
  $region61: #{autoencoder_forward.1} parent=0 // pred_fallthru
    _
  // Predicated region
  $region62: #{autoencoder_forward.1} parent=0 // pred_check
    _
  $region63: #{autoencoder_forward.1} parent=0 // pred_check_branch
    %5220 = sbr.rel (0) target = $region65
  $region64: #{autoencoder_forward.1} parent=0 // pred_region
    _
  $region65: #{autoencoder_forward.1} parent=0 // pred_fallthru
    _
  // Predicated region
  $region66: #{autoencoder_forward.1} parent=0 // pred_check
    _
  $region67: #{autoencoder_forward.1} parent=0 // pred_check_branch
    %5222 = sbr.rel (0) target = $region69
  $region68: #{autoencoder_forward.1} parent=0 // pred_region
    _
  $region69: #{autoencoder_forward.1} parent=0 // pred_fallthru
    _

</llo_original>
